<compile_context>
chip_gen: v5e
topology: v5e:2x2
jax: 0.10.0
libtpu: 0.0.40
codegen_flags: <defaults>
</compile_context>

<pallas_src>
import functools

import jax
import jax.numpy as jnp
from jax.experimental import pallas as pl
from jax.experimental.pallas import tpu as pltpu


# Padded hidden sizes (lane-aligned).
H1 = 2048   # 2000 -> 2048
H2 = 512    # 500  -> 512
H3 = 512    # 500  -> 512
LANE = 128
TILE = 256       # batch tile for large batches (v7x-safe, gives >=2 grid steps)
MIN_TILE = 16    # bf16 sublane packing


def _round_up(n, m):
    return ((n + m - 1) // m) * m


def _pad_to(a, shape):
    pads = [(0, t - s) for s, t in zip(a.shape, shape)]
    return jnp.pad(a, pads)


def _mish(z):
    """x * tanh(softplus(x)) with PyTorch's softplus threshold (20).

    One exp (EUP) + one approx reciprocal (EUP) per element; keeps the VALU
    chain short since the elementwise work binds before the MXU on v6e/v7x.
    tanh(softplus(z)) = ((1+e^z)^2 - 1) / ((1+e^z)^2 + 1).
    """
    e = jnp.exp(jnp.minimum(z, 20.0))
    n = (1.0 + e) * (1.0 + e)
    t = (n - 1.0) * pl.reciprocal(n + 1.0, approx=True)
    return jnp.where(z > 20.0, z, z * t)


def _decoder_kernel(x_ref,
                    w1_ref, b1_ref,
                    w2_ref, b2_ref,
                    w3_ref, b3_ref,
                    w4_ref, b4_ref,
                    o_ref):
    x = x_ref[...]                                                     # bf16

    h = jnp.dot(x, w1_ref[...], preferred_element_type=jnp.float32) + b1_ref[...]
    h = _mish(h).astype(jnp.bfloat16)

    h = jnp.dot(h, w2_ref[...], preferred_element_type=jnp.float32) + b2_ref[...]
    h = _mish(h).astype(jnp.bfloat16)

    h = jnp.dot(h, w3_ref[...], preferred_element_type=jnp.float32) + b3_ref[...]
    h = _mish(h).astype(jnp.bfloat16)

    y = jnp.dot(h, w4_ref[...], preferred_element_type=jnp.float32) + b4_ref[...]
    o_ref[...] = y.astype(o_ref.dtype)


def prepare_params(params):
    """One-time prep: zero-pad to lane-aligned shapes, cast weights to bf16.

    Padding is exact: padded weight columns / rows and biases are zero, so
    mish(0) = 0 on the extra hidden units and their (zeroed) downstream
    weights contribute nothing.  Call once; reuse the result across calls.
    """
    feat = params["w1"].shape[0]
    input_dim = params["w4"].shape[1]
    fp = _round_up(feat, LANE)
    op = _round_up(input_dim, LANE)
    return {
        "w1": _pad_to(params["w1"], (fp, H1)).astype(jnp.bfloat16),
        "b1": _pad_to(params["b1"], (H1,)).reshape(1, H1).astype(jnp.float32),
        "w2": _pad_to(params["w2"], (H1, H2)).astype(jnp.bfloat16),
        "b2": _pad_to(params["b2"], (H2,)).reshape(1, H2).astype(jnp.float32),
        "w3": _pad_to(params["w3"], (H2, H3)).astype(jnp.bfloat16),
        "b3": _pad_to(params["b3"], (H3,)).reshape(1, H3).astype(jnp.float32),
        "w4": _pad_to(params["w4"], (H3, op)).astype(jnp.bfloat16),
        "b4": _pad_to(params["b4"], (op,)).reshape(1, op).astype(jnp.float32),
    }


@functools.partial(jax.jit, static_argnames=("input_dim", "feature_dim"))
def decoder_forward(x, prepped, *, input_dim, feature_dim):
    """x: (batch, feature_dim) float32.  prepped: output of prepare_params."""
    batch, feat = x.shape
    assert feat == feature_dim
    fp = prepped["w1"].shape[0]     # padded feature_dim
    op = prepped["w4"].shape[1]     # padded input_dim

    # Batch tiling: pad to a multiple of a fixed tile (never a full-batch
    # fallback) so tiles stay aligned, pipelined and VMEM-bounded, and large
    # batches get >=2 parallel grid steps for v7x's two TensorCores.
    if batch <= TILE:
        padded_batch = _round_up(batch, MIN_TILE)
        tm = padded_batch
    else:
        padded_batch = _round_up(batch, TILE)
        tm = TILE
    grid = (padded_batch // tm,)

    x_p = _pad_to(x.astype(jnp.bfloat16), (padded_batch, fp))

    # Weight/bias specs return a constant block index -> stay VMEM-resident;
    # activation / output tiles are pipelined over the batch grid.
    in_specs = [
        pl.BlockSpec((tm, fp), lambda i: (i, 0)),        # x
        pl.BlockSpec((fp, H1), lambda i: (0, 0)),        # w1
        pl.BlockSpec((1, H1), lambda i: (0, 0)),         # b1
        pl.BlockSpec((H1, H2), lambda i: (0, 0)),        # w2
        pl.BlockSpec((1, H2), lambda i: (0, 0)),         # b2
        pl.BlockSpec((H2, H3), lambda i: (0, 0)),        # w3
        pl.BlockSpec((1, H3), lambda i: (0, 0)),         # b3
        pl.BlockSpec((H3, op), lambda i: (0, 0)),        # w4
        pl.BlockSpec((1, op), lambda i: (0, 0)),         # b4
    ]
    out_specs = pl.BlockSpec((tm, op), lambda i: (i, 0))

    # Advisory cost estimate (true, unpadded arithmetic).
    flops = 2 * batch * (feature_dim * 2000 + 2000 * 500 + 500 * 500
                         + 500 * input_dim)
    transcendentals = batch * (2000 + 500 + 500)
    bytes_accessed = (
        x_p.size * 2
        + (prepped["w1"].size + prepped["w2"].size
           + prepped["w3"].size + prepped["w4"].size) * 2
        + (prepped["b1"].size + prepped["b2"].size
           + prepped["b3"].size + prepped["b4"].size) * 4
        + padded_batch * op * 4
    )
    cost = pl.CostEstimate(flops=flops,
                           transcendentals=transcendentals,
                           bytes_accessed=bytes_accessed)

    out_padded = pl.pallas_call(
        _decoder_kernel,
        out_shape=jax.ShapeDtypeStruct((padded_batch, op), jnp.float32),
        grid=grid,
        in_specs=in_specs,
        out_specs=out_specs,
        compiler_params=pltpu.CompilerParams(
            dimension_semantics=("parallel",),
            vmem_limit_bytes=32 << 20,
        ),
        cost_estimate=cost,
    )(x_p,
      prepped["w1"], prepped["b1"],
      prepped["w2"], prepped["b2"],
      prepped["w3"], prepped["b3"],
      prepped["w4"], prepped["b4"])

    return out_padded[:batch, :input_dim]


def init_params(key, input_dim, feature_dim):
    """PyTorch-style default Linear init; weights stored as (in, out)."""
    dims = [(feature_dim, 2000), (2000, 500), (500, 500), (500, input_dim)]
    params = {}
    keys = jax.random.split(key, 2 * len(dims))
    for i, (fan_in, fan_out) in enumerate(dims):
        bound = 1.0 / jnp.sqrt(jnp.float32(fan_in))
        params[f"w{i + 1}"] = jax.random.uniform(
            keys[2 * i], (fan_in, fan_out), jnp.float32, -bound, bound)
        params[f"b{i + 1}"] = jax.random.uniform(
            keys[2 * i + 1], (fan_out,), jnp.float32, -bound, bound)
    return params


def _reference_forward(x, params):
    """Pure-JAX f32 reference (PyTorch-equivalent Mish)."""
    def mish(z):
        sp = jnp.where(z > 20.0, z, jnp.log1p(jnp.exp(jnp.minimum(z, 20.0))))
        return z * jnp.tanh(sp)
    h = mish(x @ params["w1"] + params["b1"])
    h = mish(h @ params["w2"] + params["b2"])
    h = mish(h @ params["w3"] + params["b3"])
    return h @ params["w4"] + params["b4"]


if __name__ == "__main__":
    input_dim = 64
    feature_dim = 32
    batch = 8

    key = jax.random.PRNGKey(0)
    k_params, k_x = jax.random.split(key)
    params = init_params(k_params, input_dim, feature_dim)
    x = jax.random.normal(k_x, (batch, feature_dim), dtype=jnp.float32)

    # One-time weight prep (padding + bf16 cast hoisted out of the hot path).
    prepped = jax.block_until_ready(prepare_params(params))

    out = decoder_forward(x, prepped, input_dim=input_dim,
                          feature_dim=feature_dim)
    out = jax.block_until_ready(out)

    ref = _reference_forward(x, params)
    assert out.shape == (batch, input_dim), out.shape
    # bf16 weights/activations + approx reciprocal -> loose tolerance vs f32.
    assert jnp.allclose(out, ref, atol=5e-2, rtol=5e-2), \
        f"max abs err = {jnp.max(jnp.abs(out - ref))}"

    print("KERNEL_OK")
</pallas_src>

<mosaic_0001>
module attributes {stable_mosaic.version = 11 : i64} {
  func.func @_decoder_kernel(%arg0: i32, %arg1: memref<16x128xbf16, #tpu.memory_space<vmem>>, %arg2: memref<128x2048xbf16, #tpu.memory_space<vmem>>, %arg3: memref<1x2048xf32, #tpu.memory_space<vmem>>, %arg4: memref<2048x512xbf16, #tpu.memory_space<vmem>>, %arg5: memref<1x512xf32, #tpu.memory_space<vmem>>, %arg6: memref<512x512xbf16, #tpu.memory_space<vmem>>, %arg7: memref<1x512xf32, #tpu.memory_space<vmem>>, %arg8: memref<512x128xbf16, #tpu.memory_space<vmem>>, %arg9: memref<1x128xf32, #tpu.memory_space<vmem>>, %arg10: memref<16x128xf32, #tpu.memory_space<vmem>>) attributes {dimension_semantics = [#tpu.dimension_semantics<parallel>], iteration_bounds = array<i64: 1>, scalar_prefetch = 0 : i64, scratch_operands = 0 : i64, tpu.core_type = #tpu.core_type<tc>, window_params = [{transform_indices = @transform_0, window_bounds = array<i64: 16, 128>}, {pipeline_mode = #tpu.pipeline_mode<synchronous>, transform_indices = @transform_1, window_bounds = array<i64: 128, 2048>}, {pipeline_mode = #tpu.pipeline_mode<synchronous>, transform_indices = @transform_2, window_bounds = array<i64: 1, 2048>}, {pipeline_mode = #tpu.pipeline_mode<synchronous>, transform_indices = @transform_3, window_bounds = array<i64: 2048, 512>}, {pipeline_mode = #tpu.pipeline_mode<synchronous>, transform_indices = @transform_4, window_bounds = array<i64: 1, 512>}, {pipeline_mode = #tpu.pipeline_mode<synchronous>, transform_indices = @transform_5, window_bounds = array<i64: 512, 512>}, {pipeline_mode = #tpu.pipeline_mode<synchronous>, transform_indices = @transform_6, window_bounds = array<i64: 1, 512>}, {pipeline_mode = #tpu.pipeline_mode<synchronous>, transform_indices = @transform_7, window_bounds = array<i64: 512, 128>}, {pipeline_mode = #tpu.pipeline_mode<synchronous>, transform_indices = @transform_8, window_bounds = array<i64: 1, 128>}, {transform_indices = @transform_9, window_bounds = array<i64: 16, 128>}]} {
    %c0 = arith.constant 0 : index
    %c0_0 = arith.constant 0 : index
    %0 = vector.load %arg1[%c0, %c0_0] : memref<16x128xbf16, #tpu.memory_space<vmem>>, vector<16x128xbf16>
    %c0_1 = arith.constant 0 : index
    %c0_2 = arith.constant 0 : index
    %1 = vector.load %arg2[%c0_1, %c0_2] : memref<128x2048xbf16, #tpu.memory_space<vmem>>, vector<128x2048xbf16>
    %cst = arith.constant dense<0.000000e+00> : vector<16x2048xf32>
    %2 = tpu.matmul %0, %1, %cst {dimension_numbers = #tpu.dot_dimension_numbers<[1], [0], [0], [1], [0, 0, 1, 1], [], []>} : vector<16x128xbf16>, vector<128x2048xbf16>, vector<16x2048xf32> -> vector<16x2048xf32>
    %c0_3 = arith.constant 0 : index
    %c0_4 = arith.constant 0 : index
    %3 = vector.load %arg3[%c0_3, %c0_4] : memref<1x2048xf32, #tpu.memory_space<vmem>>, vector<1x2048xf32>
    %4 = vector.broadcast %3 : vector<1x2048xf32> to vector<16x2048xf32>
    %5 = arith.addf %2, %4 : vector<16x2048xf32>
    %cst_5 = arith.constant 2.000000e+01 : f32
    %6 = vector.broadcast %cst_5 : f32 to vector<16x2048xf32>
    %7 = arith.minimumf %5, %6 : vector<16x2048xf32>
    %8 = math.exp %7 : vector<16x2048xf32>
    %cst_6 = arith.constant 1.000000e+00 : f32
    %9 = vector.broadcast %cst_6 : f32 to vector<16x2048xf32>
    %10 = arith.addf %9, %8 : vector<16x2048xf32>
    %cst_7 = arith.constant 1.000000e+00 : f32
    %11 = vector.broadcast %cst_7 : f32 to vector<16x2048xf32>
    %12 = arith.addf %11, %8 : vector<16x2048xf32>
    %13 = arith.mulf %10, %12 : vector<16x2048xf32>
    %cst_8 = arith.constant 1.000000e+00 : f32
    %14 = vector.broadcast %cst_8 : f32 to vector<16x2048xf32>
    %15 = arith.subf %13, %14 : vector<16x2048xf32>
    %cst_9 = arith.constant 1.000000e+00 : f32
    %16 = vector.broadcast %cst_9 : f32 to vector<16x2048xf32>
    %17 = arith.addf %13, %16 : vector<16x2048xf32>
    %18 = tpu.reciprocal %17 {approx = true} : vector<16x2048xf32> -> vector<16x2048xf32>
    %19 = arith.mulf %15, %18 : vector<16x2048xf32>
    %cst_10 = arith.constant 2.000000e+01 : f32
    %20 = vector.broadcast %cst_10 : f32 to vector<16x2048xf32>
    %21 = arith.cmpf ogt, %5, %20 : vector<16x2048xf32>
    %22 = arith.mulf %5, %19 : vector<16x2048xf32>
    %23 = arith.select %21, %5, %22 : vector<16x2048xi1>, vector<16x2048xf32>
    %24 = arith.truncf %23 : vector<16x2048xf32> to vector<16x2048xbf16>
    %c0_11 = arith.constant 0 : index
    %c0_12 = arith.constant 0 : index
    %25 = vector.load %arg4[%c0_11, %c0_12] : memref<2048x512xbf16, #tpu.memory_space<vmem>>, vector<2048x512xbf16>
    %cst_13 = arith.constant dense<0.000000e+00> : vector<16x512xf32>
    %26 = tpu.matmul %24, %25, %cst_13 {dimension_numbers = #tpu.dot_dimension_numbers<[1], [0], [0], [1], [0, 0, 1, 1], [], []>} : vector<16x2048xbf16>, vector<2048x512xbf16>, vector<16x512xf32> -> vector<16x512xf32>
    %c0_14 = arith.constant 0 : index
    %c0_15 = arith.constant 0 : index
    %27 = vector.load %arg5[%c0_14, %c0_15] : memref<1x512xf32, #tpu.memory_space<vmem>>, vector<1x512xf32>
    %28 = vector.broadcast %27 : vector<1x512xf32> to vector<16x512xf32>
    %29 = arith.addf %26, %28 : vector<16x512xf32>
    %cst_16 = arith.constant 2.000000e+01 : f32
    %30 = vector.broadcast %cst_16 : f32 to vector<16x512xf32>
    %31 = arith.minimumf %29, %30 : vector<16x512xf32>
    %32 = math.exp %31 : vector<16x512xf32>
    %cst_17 = arith.constant 1.000000e+00 : f32
    %33 = vector.broadcast %cst_17 : f32 to vector<16x512xf32>
    %34 = arith.addf %33, %32 : vector<16x512xf32>
    %cst_18 = arith.constant 1.000000e+00 : f32
    %35 = vector.broadcast %cst_18 : f32 to vector<16x512xf32>
    %36 = arith.addf %35, %32 : vector<16x512xf32>
    %37 = arith.mulf %34, %36 : vector<16x512xf32>
    %cst_19 = arith.constant 1.000000e+00 : f32
    %38 = vector.broadcast %cst_19 : f32 to vector<16x512xf32>
    %39 = arith.subf %37, %38 : vector<16x512xf32>
    %cst_20 = arith.constant 1.000000e+00 : f32
    %40 = vector.broadcast %cst_20 : f32 to vector<16x512xf32>
    %41 = arith.addf %37, %40 : vector<16x512xf32>
    %42 = tpu.reciprocal %41 {approx = true} : vector<16x512xf32> -> vector<16x512xf32>
    %43 = arith.mulf %39, %42 : vector<16x512xf32>
    %cst_21 = arith.constant 2.000000e+01 : f32
    %44 = vector.broadcast %cst_21 : f32 to vector<16x512xf32>
    %45 = arith.cmpf ogt, %29, %44 : vector<16x512xf32>
    %46 = arith.mulf %29, %43 : vector<16x512xf32>
    %47 = arith.select %45, %29, %46 : vector<16x512xi1>, vector<16x512xf32>
    %48 = arith.truncf %47 : vector<16x512xf32> to vector<16x512xbf16>
    %c0_22 = arith.constant 0 : index
    %c0_23 = arith.constant 0 : index
    %49 = vector.load %arg6[%c0_22, %c0_23] : memref<512x512xbf16, #tpu.memory_space<vmem>>, vector<512x512xbf16>
    %cst_24 = arith.constant dense<0.000000e+00> : vector<16x512xf32>
    %50 = tpu.matmul %48, %49, %cst_24 {dimension_numbers = #tpu.dot_dimension_numbers<[1], [0], [0], [1], [0, 0, 1, 1], [], []>} : vector<16x512xbf16>, vector<512x512xbf16>, vector<16x512xf32> -> vector<16x512xf32>
    %c0_25 = arith.constant 0 : index
    %c0_26 = arith.constant 0 : index
    %51 = vector.load %arg7[%c0_25, %c0_26] : memref<1x512xf32, #tpu.memory_space<vmem>>, vector<1x512xf32>
    %52 = vector.broadcast %51 : vector<1x512xf32> to vector<16x512xf32>
    %53 = arith.addf %50, %52 : vector<16x512xf32>
    %cst_27 = arith.constant 2.000000e+01 : f32
    %54 = vector.broadcast %cst_27 : f32 to vector<16x512xf32>
    %55 = arith.minimumf %53, %54 : vector<16x512xf32>
    %56 = math.exp %55 : vector<16x512xf32>
    %cst_28 = arith.constant 1.000000e+00 : f32
    %57 = vector.broadcast %cst_28 : f32 to vector<16x512xf32>
    %58 = arith.addf %57, %56 : vector<16x512xf32>
    %cst_29 = arith.constant 1.000000e+00 : f32
    %59 = vector.broadcast %cst_29 : f32 to vector<16x512xf32>
    %60 = arith.addf %59, %56 : vector<16x512xf32>
    %61 = arith.mulf %58, %60 : vector<16x512xf32>
    %cst_30 = arith.constant 1.000000e+00 : f32
    %62 = vector.broadcast %cst_30 : f32 to vector<16x512xf32>
    %63 = arith.subf %61, %62 : vector<16x512xf32>
    %cst_31 = arith.constant 1.000000e+00 : f32
    %64 = vector.broadcast %cst_31 : f32 to vector<16x512xf32>
    %65 = arith.addf %61, %64 : vector<16x512xf32>
    %66 = tpu.reciprocal %65 {approx = true} : vector<16x512xf32> -> vector<16x512xf32>
    %67 = arith.mulf %63, %66 : vector<16x512xf32>
    %cst_32 = arith.constant 2.000000e+01 : f32
    %68 = vector.broadcast %cst_32 : f32 to vector<16x512xf32>
    %69 = arith.cmpf ogt, %53, %68 : vector<16x512xf32>
    %70 = arith.mulf %53, %67 : vector<16x512xf32>
    %71 = arith.select %69, %53, %70 : vector<16x512xi1>, vector<16x512xf32>
    %72 = arith.truncf %71 : vector<16x512xf32> to vector<16x512xbf16>
    %c0_33 = arith.constant 0 : index
    %c0_34 = arith.constant 0 : index
    %73 = vector.load %arg8[%c0_33, %c0_34] : memref<512x128xbf16, #tpu.memory_space<vmem>>, vector<512x128xbf16>
    %cst_35 = arith.constant dense<0.000000e+00> : vector<16x128xf32>
    %74 = tpu.matmul %72, %73, %cst_35 {dimension_numbers = #tpu.dot_dimension_numbers<[1], [0], [0], [1], [0, 0, 1, 1], [], []>} : vector<16x512xbf16>, vector<512x128xbf16>, vector<16x128xf32> -> vector<16x128xf32>
    %c0_36 = arith.constant 0 : index
    %c0_37 = arith.constant 0 : index
    %75 = vector.load %arg9[%c0_36, %c0_37] : memref<1x128xf32, #tpu.memory_space<vmem>>, vector<1x128xf32>
    %76 = vector.broadcast %75 : vector<1x128xf32> to vector<16x128xf32>
    %77 = arith.addf %74, %76 : vector<16x128xf32>
    %c0_38 = arith.constant 0 : index
    %c0_39 = arith.constant 0 : index
    %78 = vector.load %arg10[%c0_38, %c0_39] : memref<16x128xf32, #tpu.memory_space<vmem>>, vector<16x128xf32>
    tpu.vector_store %arg10[%c0_38, %c0_39], %77 {strides = array<i32>} : memref<16x128xf32, #tpu.memory_space<vmem>>, vector<16x128xf32>,
    return
  }
  func.func @transform_0(%arg0: i32) -> (i32, i32) {
    %c0_i32 = arith.constant 0 : i32
    %c0_i32_0 = arith.constant 0 : i32
    return %arg0, %c0_i32 : i32, i32
  }
  func.func @transform_1(%arg0: i32) -> (i32, i32) {
    %c0_i32 = arith.constant 0 : i32
    %c0_i32_0 = arith.constant 0 : i32
    %c0_i32_1 = arith.constant 0 : i32
    return %c0_i32, %c0_i32_0 : i32, i32
  }
  func.func @transform_2(%arg0: i32) -> (i32, i32) {
    %c0_i32 = arith.constant 0 : i32
    %c0_i32_0 = arith.constant 0 : i32
    %c0_i32_1 = arith.constant 0 : i32
    return %c0_i32, %c0_i32_0 : i32, i32
  }
  func.func @transform_3(%arg0: i32) -> (i32, i32) {
    %c0_i32 = arith.constant 0 : i32
    %c0_i32_0 = arith.constant 0 : i32
    %c0_i32_1 = arith.constant 0 : i32
    return %c0_i32, %c0_i32_0 : i32, i32
  }
  func.func @transform_4(%arg0: i32) -> (i32, i32) {
    %c0_i32 = arith.constant 0 : i32
    %c0_i32_0 = arith.constant 0 : i32
    %c0_i32_1 = arith.constant 0 : i32
    return %c0_i32, %c0_i32_0 : i32, i32
  }
  func.func @transform_5(%arg0: i32) -> (i32, i32) {
    %c0_i32 = arith.constant 0 : i32
    %c0_i32_0 = arith.constant 0 : i32
    %c0_i32_1 = arith.constant 0 : i32
    return %c0_i32, %c0_i32_0 : i32, i32
  }
  func.func @transform_6(%arg0: i32) -> (i32, i32) {
    %c0_i32 = arith.constant 0 : i32
    %c0_i32_0 = arith.constant 0 : i32
    %c0_i32_1 = arith.constant 0 : i32
    return %c0_i32, %c0_i32_0 : i32, i32
  }
  func.func @transform_7(%arg0: i32) -> (i32, i32) {
    %c0_i32 = arith.constant 0 : i32
    %c0_i32_0 = arith.constant 0 : i32
    %c0_i32_1 = arith.constant 0 : i32
    return %c0_i32, %c0_i32_0 : i32, i32
  }
  func.func @transform_8(%arg0: i32) -> (i32, i32) {
    %c0_i32 = arith.constant 0 : i32
    %c0_i32_0 = arith.constant 0 : i32
    %c0_i32_1 = arith.constant 0 : i32
    return %c0_i32, %c0_i32_0 : i32, i32
  }
  func.func @transform_9(%arg0: i32) -> (i32, i32) {
    %c0_i32 = arith.constant 0 : i32
    %c0_i32_0 = arith.constant 0 : i32
    return %arg0, %c0_i32 : i32, i32
  }
}

</mosaic_0001>

<llo_original>
// kernel: decoder_forward.1
$region0: #{decoder_forward.1}
  #allocation0 [shape = 'u32[]', space=smem, size = 0x4, offset = 0x4, fixed_abs, tag = 'smem constant byte address 0x4 - core index']
  #allocation1 [shape = 'u32[72,128]{1,0:T(1,128)}', space=vmem, size = 0x9000, scoped, tag = 'internal scratch']
  %s0 = inlined_call_operand.vmem [shape: bf16[16,128], index: 0, kind: input, shape index: {}]
  %s1 = inlined_call_operand.hbm [shape: bf16[128,2048], index: 1, kind: input, shape index: {}]
  %s2 = inlined_call_operand.hbm [shape: f32[1,2048], index: 2, kind: input, shape index: {}]
  %s3 = inlined_call_operand.hbm [shape: bf16[2048,512], index: 3, kind: input, shape index: {}]
  %s4 = inlined_call_operand.hbm [shape: f32[1,512], index: 4, kind: input, shape index: {}]
  %s5 = inlined_call_operand.hbm [shape: bf16[512,512], index: 5, kind: input, shape index: {}]
  %s6 = inlined_call_operand.hbm [shape: f32[1,512], index: 6, kind: input, shape index: {}]
  %s7 = inlined_call_operand.hbm [shape: bf16[512,128], index: 7, kind: input, shape index: {}]
  %s8 = inlined_call_operand.hbm [shape: f32[1,128], index: 8, kind: input, shape index: {}]
  %s9 = inlined_call_operand.vmem [shape: f32[16,128], index: 9, kind: output, shape index: {}]
  %s10 = sld [smem:[#allocation0]]
  $region78: #{decoder_forward.1} parent=0
    _
  %s12 = ssub.s32 1, %s10
  %s13 = scalar_select 0, %s12, %s10
  $region1: #{decoder_forward.1} parent=0
    #allocation2 [shape = 'u8[524288]{0}', space=vmem, size = 0x80000, scoped, tag = 'input window, operand 1, single buffered']
    #allocation3 [shape = 's32[1]{0}', space=sflag, size = 0x4, scoped, tag = 'scoped memory for decoder_forward.1']
    #allocation4 [shape = 'u8[8192]{0}', space=vmem, size = 0x2000, scoped, tag = 'input window, operand 2, single buffered']
    #allocation5 [shape = 's32[1]{0}', space=sflag, size = 0x4, scoped, tag = 'scoped memory for decoder_forward.1']
    #allocation6 [shape = 'u8[2097152]{0}', space=vmem, size = 0x200000, scoped, tag = 'input window, operand 3, single buffered']
    #allocation7 [shape = 'u8[2048]{0}', space=vmem, size = 0x800, scoped, tag = 'input window, operand 4, single buffered']
    #allocation8 [shape = 's32[1]{0}', space=sflag, size = 0x4, scoped, tag = 'scoped memory for decoder_forward.1']
    #allocation9 [shape = 'u8[524288]{0}', space=vmem, size = 0x80000, scoped, tag = 'input window, operand 5, single buffered']
    #allocation10 [shape = 'u8[2048]{0}', space=vmem, size = 0x800, scoped, tag = 'input window, operand 6, single buffered']
    #allocation11 [shape = 's32[1]{0}', space=sflag, size = 0x4, scoped, tag = 'scoped memory for decoder_forward.1']
    #allocation12 [shape = 'u8[131072]{0}', space=vmem, size = 0x20000, scoped, tag = 'input window, operand 7, single buffered']
    #allocation13 [shape = 'u8[512]{0}', space=vmem, size = 0x400, scoped, tag = 'input window, operand 8, single buffered']
    #allocation14 [shape = 's32[1]{0}', space=sflag, size = 0x4, scoped, tag = 'scoped memory for decoder_forward.1']
    %14 = vsyncpa [#allocation3], 0
    %15 = vsyncpa [#allocation5], 0
    %16 = vsyncpa [#allocation8], 0
    %17 = vsyncpa [#allocation11], 0
    %18 = vsyncpa [#allocation14], 0
    // Predicated region
    $region2: #{decoder_forward.1} parent=1 // pred_check
      _
    $region3: #{decoder_forward.1} parent=1 // pred_check_branch
      %20 = sbr.rel (0) target = $region5
    $region4: #{decoder_forward.1} parent=1 // pred_region
      _
    $region5: #{decoder_forward.1} parent=1 // pred_fallthru
      _
    // Predicated region
    $region6: #{decoder_forward.1} parent=1 // pred_check
      _
    $region7: #{decoder_forward.1} parent=1 // pred_check_branch
      %22 = sbr.rel (0) target = $region9
    $region8: #{decoder_forward.1} parent=1 // pred_region
      %24 = vsyncadd [#allocation3], 0
      %s25 = sshll.u32 %s1, 4
      %s26 = int_to_ptr.hbm [resolvable:$true] %s25
      %s27 = sshll.u32 [#allocation2], 4
      %s28 = int_to_ptr.vmem [resolvable:$true] %s27
      %33 = dma.hbm_to_vmem [thread:$0]  %s26, 16384, %s28, [#allocation3], 1024, 1024, 64
    $region9: #{decoder_forward.1} parent=1 // pred_fallthru
      _
    // Predicated region
    $region10: #{decoder_forward.1} parent=1 // pred_check
      _
    $region11: #{decoder_forward.1} parent=1 // pred_check_branch
      %35 = sbr.rel (0) target = $region13
    $region12: #{decoder_forward.1} parent=1 // pred_region
      %37 = vsyncadd [#allocation5], 0
      %s39 = sshll.u32 %s2, 4
      %s40 = int_to_ptr.hbm [resolvable:$true] %s39
      %s41 = sshll.u32 [#allocation4], 4
      %s42 = int_to_ptr.vmem [resolvable:$true] %s41
      %44 = dma.hbm_to_vmem [thread:$0]  %s40, 256, %s42, [#allocation5]
    $region13: #{decoder_forward.1} parent=1 // pred_fallthru
      _
    // Predicated region
    $region14: #{decoder_forward.1} parent=1 // pred_check
      _
    $region15: #{decoder_forward.1} parent=1 // pred_check_branch
      %46 = sbr.rel (0) target = $region17
    $region16: #{decoder_forward.1} parent=1 // pred_region
      %48 = vsyncadd [#allocation5], 0
      %s49 = sshll.u32 %s3, 4
      %s50 = int_to_ptr.hbm [resolvable:$true] %s49
      %s51 = sshll.u32 [#allocation6], 4
      %s52 = int_to_ptr.vmem [resolvable:$true] %s51
      %57 = dma.hbm_to_vmem [thread:$0]  %s50, 65536, %s52, [#allocation5], 256, 256, 16
    $region17: #{decoder_forward.1} parent=1 // pred_fallthru
      _
    // Predicated region
    $region18: #{decoder_forward.1} parent=1 // pred_check
      _
    $region19: #{decoder_forward.1} parent=1 // pred_check_branch
      %59 = sbr.rel (0) target = $region21
    $region20: #{decoder_forward.1} parent=1 // pred_region
      %61 = vsyncadd [#allocation8], 0
      %s63 = sshll.u32 %s4, 4
      %s64 = int_to_ptr.hbm [resolvable:$true] %s63
      %s65 = sshll.u32 [#allocation7], 4
      %s66 = int_to_ptr.vmem [resolvable:$true] %s65
      %68 = dma.hbm_to_vmem [thread:$0]  %s64, 64, %s66, [#allocation8]
    $region21: #{decoder_forward.1} parent=1 // pred_fallthru
      _
    // Predicated region
    $region22: #{decoder_forward.1} parent=1 // pred_check
      _
    $region23: #{decoder_forward.1} parent=1 // pred_check_branch
      %70 = sbr.rel (0) target = $region25
    $region24: #{decoder_forward.1} parent=1 // pred_region
      %72 = vsyncadd [#allocation8], 0
      %s73 = sshll.u32 %s5, 4
      %s74 = int_to_ptr.hbm [resolvable:$true] %s73
      %s75 = sshll.u32 [#allocation9], 4
      %s76 = int_to_ptr.vmem [resolvable:$true] %s75
      %81 = dma.hbm_to_vmem [thread:$0]  %s74, 16384, %s76, [#allocation8], 256, 256, 16
    $region25: #{decoder_forward.1} parent=1 // pred_fallthru
      _
    // Predicated region
    $region26: #{decoder_forward.1} parent=1 // pred_check
      _
    $region27: #{decoder_forward.1} parent=1 // pred_check_branch
      %83 = sbr.rel (0) target = $region29
    $region28: #{decoder_forward.1} parent=1 // pred_region
      %85 = vsyncadd [#allocation11], 0
      %s87 = sshll.u32 %s6, 4
      %s88 = int_to_ptr.hbm [resolvable:$true] %s87
      %s89 = sshll.u32 [#allocation10], 4
      %s90 = int_to_ptr.vmem [resolvable:$true] %s89
      %92 = dma.hbm_to_vmem [thread:$0]  %s88, 64, %s90, [#allocation11]
    $region29: #{decoder_forward.1} parent=1 // pred_fallthru
      _
    // Predicated region
    $region30: #{decoder_forward.1} parent=1 // pred_check
      _
    $region31: #{decoder_forward.1} parent=1 // pred_check_branch
      %94 = sbr.rel (0) target = $region33
    $region32: #{decoder_forward.1} parent=1 // pred_region
      %96 = vsyncadd [#allocation11], 0
      %s97 = sshll.u32 %s7, 4
      %s98 = int_to_ptr.hbm [resolvable:$true] %s97
      %s99 = sshll.u32 [#allocation12], 4
      %s100 = int_to_ptr.vmem [resolvable:$true] %s99
      %105 = dma.hbm_to_vmem [thread:$0]  %s98, 4096, %s100, [#allocation11], 64, 64, 4
    $region33: #{decoder_forward.1} parent=1 // pred_fallthru
      _
    // Predicated region
    $region34: #{decoder_forward.1} parent=1 // pred_check
      _
    $region35: #{decoder_forward.1} parent=1 // pred_check_branch
      %107 = sbr.rel (0) target = $region37
    $region36: #{decoder_forward.1} parent=1 // pred_region
      %109 = vsyncadd [#allocation14], 0
      %s111 = sshll.u32 %s8, 4
      %s112 = int_to_ptr.hbm [resolvable:$true] %s111
      %s113 = sshll.u32 [#allocation13], 4
      %s114 = int_to_ptr.vmem [resolvable:$true] %s113
      %116 = dma.hbm_to_vmem [thread:$0]  %s112, 16, %s114, [#allocation14]
    $region37: #{decoder_forward.1} parent=1 // pred_fallthru
      _
    // Predicated region
    $region38: #{decoder_forward.1} parent=1 // pred_check
      _
    $region39: #{decoder_forward.1} parent=1 // pred_check_branch
      %118 = sbr.rel (0) target = $region41
    $region40: #{decoder_forward.1} parent=1 // pred_region
      %120 = dma.done [#allocation3], 16384
    $region41: #{decoder_forward.1} parent=1 // pred_fallthru
      _
    // Predicated region
    $region42: #{decoder_forward.1} parent=1 // pred_check
      _
    $region43: #{decoder_forward.1} parent=1 // pred_check_branch
      %122 = sbr.rel (0) target = $region45
    $region44: #{decoder_forward.1} parent=1 // pred_region
      %124 = dma.done [#allocation5], 256
    $region45: #{decoder_forward.1} parent=1 // pred_fallthru
      _
    // Predicated region
    $region46: #{decoder_forward.1} parent=1 // pred_check
      _
    $region47: #{decoder_forward.1} parent=1 // pred_check_branch
      %126 = sbr.rel (0) target = $region49
    $region48: #{decoder_forward.1} parent=1 // pred_region
      %128 = dma.done [#allocation5], 65536
    $region49: #{decoder_forward.1} parent=1 // pred_fallthru
      _
    // Predicated region
    $region50: #{decoder_forward.1} parent=1 // pred_check
      _
    $region51: #{decoder_forward.1} parent=1 // pred_check_branch
      %130 = sbr.rel (0) target = $region53
    $region52: #{decoder_forward.1} parent=1 // pred_region
      %132 = dma.done [#allocation8], 64
    $region53: #{decoder_forward.1} parent=1 // pred_fallthru
      _
    // Predicated region
    $region54: #{decoder_forward.1} parent=1 // pred_check
      _
    $region55: #{decoder_forward.1} parent=1 // pred_check_branch
      %134 = sbr.rel (0) target = $region57
    $region56: #{decoder_forward.1} parent=1 // pred_region
      %136 = dma.done [#allocation8], 16384
    $region57: #{decoder_forward.1} parent=1 // pred_fallthru
      _
    // Predicated region
    $region58: #{decoder_forward.1} parent=1 // pred_check
      _
    $region59: #{decoder_forward.1} parent=1 // pred_check_branch
      %138 = sbr.rel (0) target = $region61
    $region60: #{decoder_forward.1} parent=1 // pred_region
      %140 = dma.done [#allocation11], 64
    $region61: #{decoder_forward.1} parent=1 // pred_fallthru
      _
    // Predicated region
    $region62: #{decoder_forward.1} parent=1 // pred_check
      _
    $region63: #{decoder_forward.1} parent=1 // pred_check_branch
      %142 = sbr.rel (0) target = $region65
    $region64: #{decoder_forward.1} parent=1 // pred_region
      %144 = dma.done [#allocation11], 4096
    $region65: #{decoder_forward.1} parent=1 // pred_fallthru
      _
    // Predicated region
    $region66: #{decoder_forward.1} parent=1 // pred_check
      _
    $region67: #{decoder_forward.1} parent=1 // pred_check_branch
      %146 = sbr.rel (0) target = $region69
    $region68: #{decoder_forward.1} parent=1 // pred_region
      %148 = dma.done [#allocation14], 16
    $region69: #{decoder_forward.1} parent=1 // pred_fallthru
      _
    %v149 = vld [vmem:[%s0] sm:$0xf]
    %v150 = vld [vmem:[%s0 + $0x4] sm:$0xf]
    %v151 = vld [vmem:[#allocation2] sm:$0xff]
    %v152 = vld [vmem:[#allocation2 + $0x8] sm:$0xff]
    %v153 = vld [vmem:[#allocation2 + $0x10] sm:$0xff]
    %v154 = vld [vmem:[#allocation2 + $0x18] sm:$0xff]
    %v155 = vld [vmem:[#allocation2 + $0x20] sm:$0xff]
    %v156 = vld [vmem:[#allocation2 + $0x28] sm:$0xff]
    %v157 = vld [vmem:[#allocation2 + $0x30] sm:$0xff]
    %v158 = vld [vmem:[#allocation2 + $0x38] sm:$0xff]
    %v159 = vld [vmem:[#allocation2 + $0x40] sm:$0xff]
    %v160 = vld [vmem:[#allocation2 + $0x48] sm:$0xff]
    %v161 = vld [vmem:[#allocation2 + $0x50] sm:$0xff]
    %v162 = vld [vmem:[#allocation2 + $0x58] sm:$0xff]
    %v163 = vld [vmem:[#allocation2 + $0x60] sm:$0xff]
    %v164 = vld [vmem:[#allocation2 + $0x68] sm:$0xff]
    %v165 = vld [vmem:[#allocation2 + $0x70] sm:$0xff]
    %v166 = vld [vmem:[#allocation2 + $0x78] sm:$0xff]
    %v167 = vld [vmem:[#allocation2 + $0x80] sm:$0xff]
    %v168 = vld [vmem:[#allocation2 + $0x88] sm:$0xff]
    %v169 = vld [vmem:[#allocation2 + $0x90] sm:$0xff]
    %v170 = vld [vmem:[#allocation2 + $0x98] sm:$0xff]
    %v171 = vld [vmem:[#allocation2 + $0xa0] sm:$0xff]
    %v172 = vld [vmem:[#allocation2 + $0xa8] sm:$0xff]
    %v173 = vld [vmem:[#allocation2 + $0xb0] sm:$0xff]
    %v174 = vld [vmem:[#allocation2 + $0xb8] sm:$0xff]
    %v175 = vld [vmem:[#allocation2 + $0xc0] sm:$0xff]
    %v176 = vld [vmem:[#allocation2 + $0xc8] sm:$0xff]
    %v177 = vld [vmem:[#allocation2 + $0xd0] sm:$0xff]
    %v178 = vld [vmem:[#allocation2 + $0xd8] sm:$0xff]
    %v179 = vld [vmem:[#allocation2 + $0xe0] sm:$0xff]
    %v180 = vld [vmem:[#allocation2 + $0xe8] sm:$0xff]
    %v181 = vld [vmem:[#allocation2 + $0xf0] sm:$0xff]
    %v182 = vld [vmem:[#allocation2 + $0xf8] sm:$0xff]
    %v183 = vld [vmem:[#allocation2 + $0x100] sm:$0xff]
    %v184 = vld [vmem:[#allocation2 + $0x108] sm:$0xff]
    %v185 = vld [vmem:[#allocation2 + $0x110] sm:$0xff]
    %v186 = vld [vmem:[#allocation2 + $0x118] sm:$0xff]
    %v187 = vld [vmem:[#allocation2 + $0x120] sm:$0xff]
    %v188 = vld [vmem:[#allocation2 + $0x128] sm:$0xff]
    %v189 = vld [vmem:[#allocation2 + $0x130] sm:$0xff]
    %v190 = vld [vmem:[#allocation2 + $0x138] sm:$0xff]
    %v191 = vld [vmem:[#allocation2 + $0x140] sm:$0xff]
    %v192 = vld [vmem:[#allocation2 + $0x148] sm:$0xff]
    %v193 = vld [vmem:[#allocation2 + $0x150] sm:$0xff]
    %v194 = vld [vmem:[#allocation2 + $0x158] sm:$0xff]
    %v195 = vld [vmem:[#allocation2 + $0x160] sm:$0xff]
    %v196 = vld [vmem:[#allocation2 + $0x168] sm:$0xff]
    %v197 = vld [vmem:[#allocation2 + $0x170] sm:$0xff]
    %v198 = vld [vmem:[#allocation2 + $0x178] sm:$0xff]
    %v199 = vld [vmem:[#allocation2 + $0x180] sm:$0xff]
    %v200 = vld [vmem:[#allocation2 + $0x188] sm:$0xff]
    %v201 = vld [vmem:[#allocation2 + $0x190] sm:$0xff]
    %v202 = vld [vmem:[#allocation2 + $0x198] sm:$0xff]
    %v203 = vld [vmem:[#allocation2 + $0x1a0] sm:$0xff]
    %v204 = vld [vmem:[#allocation2 + $0x1a8] sm:$0xff]
    %v205 = vld [vmem:[#allocation2 + $0x1b0] sm:$0xff]
    %v206 = vld [vmem:[#allocation2 + $0x1b8] sm:$0xff]
    %v207 = vld [vmem:[#allocation2 + $0x1c0] sm:$0xff]
    %v208 = vld [vmem:[#allocation2 + $0x1c8] sm:$0xff]
    %v209 = vld [vmem:[#allocation2 + $0x1d0] sm:$0xff]
    %v210 = vld [vmem:[#allocation2 + $0x1d8] sm:$0xff]
    %v211 = vld [vmem:[#allocation2 + $0x1e0] sm:$0xff]
    %v212 = vld [vmem:[#allocation2 + $0x1e8] sm:$0xff]
    %v213 = vld [vmem:[#allocation2 + $0x1f0] sm:$0xff]
    %v214 = vld [vmem:[#allocation2 + $0x1f8] sm:$0xff]
    %v215 = vld [vmem:[#allocation2 + $0x200] sm:$0xff]
    %v216 = vld [vmem:[#allocation2 + $0x208] sm:$0xff]
    %v217 = vld [vmem:[#allocation2 + $0x210] sm:$0xff]
    %v218 = vld [vmem:[#allocation2 + $0x218] sm:$0xff]
    %v219 = vld [vmem:[#allocation2 + $0x220] sm:$0xff]
    %v220 = vld [vmem:[#allocation2 + $0x228] sm:$0xff]
    %v221 = vld [vmem:[#allocation2 + $0x230] sm:$0xff]
    %v222 = vld [vmem:[#allocation2 + $0x238] sm:$0xff]
    %v223 = vld [vmem:[#allocation2 + $0x240] sm:$0xff]
    %v224 = vld [vmem:[#allocation2 + $0x248] sm:$0xff]
    %v225 = vld [vmem:[#allocation2 + $0x250] sm:$0xff]
    %v226 = vld [vmem:[#allocation2 + $0x258] sm:$0xff]
    %v227 = vld [vmem:[#allocation2 + $0x260] sm:$0xff]
    %v228 = vld [vmem:[#allocation2 + $0x268] sm:$0xff]
    %v229 = vld [vmem:[#allocation2 + $0x270] sm:$0xff]
    %v230 = vld [vmem:[#allocation2 + $0x278] sm:$0xff]
    %v231 = vld [vmem:[#allocation2 + $0x280] sm:$0xff]
    %v232 = vld [vmem:[#allocation2 + $0x288] sm:$0xff]
    %v233 = vld [vmem:[#allocation2 + $0x290] sm:$0xff]
    %v234 = vld [vmem:[#allocation2 + $0x298] sm:$0xff]
    %v235 = vld [vmem:[#allocation2 + $0x2a0] sm:$0xff]
    %v236 = vld [vmem:[#allocation2 + $0x2a8] sm:$0xff]
    %v237 = vld [vmem:[#allocation2 + $0x2b0] sm:$0xff]
    %v238 = vld [vmem:[#allocation2 + $0x2b8] sm:$0xff]
    %v239 = vld [vmem:[#allocation2 + $0x2c0] sm:$0xff]
    %v240 = vld [vmem:[#allocation2 + $0x2c8] sm:$0xff]
    %v241 = vld [vmem:[#allocation2 + $0x2d0] sm:$0xff]
    %v242 = vld [vmem:[#allocation2 + $0x2d8] sm:$0xff]
    %v243 = vld [vmem:[#allocation2 + $0x2e0] sm:$0xff]
    %v244 = vld [vmem:[#allocation2 + $0x2e8] sm:$0xff]
    %v245 = vld [vmem:[#allocation2 + $0x2f0] sm:$0xff]
    %v246 = vld [vmem:[#allocation2 + $0x2f8] sm:$0xff]
    %v247 = vld [vmem:[#allocation2 + $0x300] sm:$0xff]
    %v248 = vld [vmem:[#allocation2 + $0x308] sm:$0xff]
    %v249 = vld [vmem:[#allocation2 + $0x310] sm:$0xff]
    %v250 = vld [vmem:[#allocation2 + $0x318] sm:$0xff]
    %v251 = vld [vmem:[#allocation2 + $0x320] sm:$0xff]
    %v252 = vld [vmem:[#allocation2 + $0x328] sm:$0xff]
    %v253 = vld [vmem:[#allocation2 + $0x330] sm:$0xff]
    %v254 = vld [vmem:[#allocation2 + $0x338] sm:$0xff]
    %v255 = vld [vmem:[#allocation2 + $0x340] sm:$0xff]
    %v256 = vld [vmem:[#allocation2 + $0x348] sm:$0xff]
    %v257 = vld [vmem:[#allocation2 + $0x350] sm:$0xff]
    %v258 = vld [vmem:[#allocation2 + $0x358] sm:$0xff]
    %v259 = vld [vmem:[#allocation2 + $0x360] sm:$0xff]
    %v260 = vld [vmem:[#allocation2 + $0x368] sm:$0xff]
    %v261 = vld [vmem:[#allocation2 + $0x370] sm:$0xff]
    %v262 = vld [vmem:[#allocation2 + $0x378] sm:$0xff]
    %v263 = vld [vmem:[#allocation2 + $0x380] sm:$0xff]
    %v264 = vld [vmem:[#allocation2 + $0x388] sm:$0xff]
    %v265 = vld [vmem:[#allocation2 + $0x390] sm:$0xff]
    %v266 = vld [vmem:[#allocation2 + $0x398] sm:$0xff]
    %v267 = vld [vmem:[#allocation2 + $0x3a0] sm:$0xff]
    %v268 = vld [vmem:[#allocation2 + $0x3a8] sm:$0xff]
    %v269 = vld [vmem:[#allocation2 + $0x3b0] sm:$0xff]
    %v270 = vld [vmem:[#allocation2 + $0x3b8] sm:$0xff]
    %v271 = vld [vmem:[#allocation2 + $0x3c0] sm:$0xff]
    %v272 = vld [vmem:[#allocation2 + $0x3c8] sm:$0xff]
    %v273 = vld [vmem:[#allocation2 + $0x3d0] sm:$0xff]
    %v274 = vld [vmem:[#allocation2 + $0x3d8] sm:$0xff]
    %v275 = vld [vmem:[#allocation2 + $0x3e0] sm:$0xff]
    %v276 = vld [vmem:[#allocation2 + $0x3e8] sm:$0xff]
    %v277 = vld [vmem:[#allocation2 + $0x3f0] sm:$0xff]
    %v278 = vld [vmem:[#allocation2 + $0x3f8] sm:$0xff]
    %v279 = vld [vmem:[#allocation4] sm:$0xff]
    %v280 = vld [vmem:[#allocation4 + $0x8] sm:$0xff]
    %v283 = vperm.slane %v279, 0
    %v284 = vperm.slane %v279, 1
    %v285 = vperm.slane %v279, 2
    %v286 = vperm.slane %v279, 3
    %v287 = vperm.slane %v279, 4
    %v288 = vperm.slane %v279, 5
    %v289 = vperm.slane %v279, 6
    %v290 = vperm.slane %v279, 7
    %v291 = vperm.slane %v280, 0
    %v292 = vperm.slane %v280, 1
    %v293 = vperm.slane %v280, 2
    %v294 = vperm.slane %v280, 3
    %v295 = vperm.slane %v280, 4
    %v296 = vperm.slane %v280, 5
    %v297 = vperm.slane %v280, 6
    %v298 = vperm.slane %v280, 7
    %v317 = vunpack.c.l.b16 %v149
    %v318 = vunpack.c.l.b16 %v150
    %v319 = vpack.c.b16 %v318, %v317
    %v449 = vunpack.c.l.b16 %v151
    %v450 = vunpack.c.h.b16 %v151
    %v451 = vunpack.c.l.b16 %v152
    %v452 = vunpack.c.h.b16 %v152
    %v453 = vunpack.c.l.b16 %v153
    %v454 = vunpack.c.h.b16 %v153
    %v455 = vunpack.c.l.b16 %v154
    %v456 = vunpack.c.h.b16 %v154
    %v457 = vunpack.c.l.b16 %v155
    %v458 = vunpack.c.h.b16 %v155
    %v459 = vunpack.c.l.b16 %v156
    %v460 = vunpack.c.h.b16 %v156
    %v461 = vunpack.c.l.b16 %v157
    %v462 = vunpack.c.h.b16 %v157
    %v463 = vunpack.c.l.b16 %v158
    %v464 = vunpack.c.h.b16 %v158
    %v465 = vunpack.c.l.b16 %v159
    %v466 = vunpack.c.h.b16 %v159
    %v467 = vunpack.c.l.b16 %v160
    %v468 = vunpack.c.h.b16 %v160
    %v469 = vunpack.c.l.b16 %v161
    %v470 = vunpack.c.h.b16 %v161
    %v471 = vunpack.c.l.b16 %v162
    %v472 = vunpack.c.h.b16 %v162
    %v473 = vunpack.c.l.b16 %v163
    %v474 = vunpack.c.h.b16 %v163
    %v475 = vunpack.c.l.b16 %v164
    %v476 = vunpack.c.h.b16 %v164
    %v477 = vunpack.c.l.b16 %v165
    %v478 = vunpack.c.h.b16 %v165
    %v479 = vunpack.c.l.b16 %v166
    %v480 = vunpack.c.h.b16 %v166
    %v481 = vunpack.c.l.b16 %v167
    %v482 = vunpack.c.h.b16 %v167
    %v483 = vunpack.c.l.b16 %v168
    %v484 = vunpack.c.h.b16 %v168
    %v485 = vunpack.c.l.b16 %v169
    %v486 = vunpack.c.h.b16 %v169
    %v487 = vunpack.c.l.b16 %v170
    %v488 = vunpack.c.h.b16 %v170
    %v489 = vunpack.c.l.b16 %v171
    %v490 = vunpack.c.h.b16 %v171
    %v491 = vunpack.c.l.b16 %v172
    %v492 = vunpack.c.h.b16 %v172
    %v493 = vunpack.c.l.b16 %v173
    %v494 = vunpack.c.h.b16 %v173
    %v495 = vunpack.c.l.b16 %v174
    %v496 = vunpack.c.h.b16 %v174
    %v497 = vunpack.c.l.b16 %v175
    %v498 = vunpack.c.h.b16 %v175
    %v499 = vunpack.c.l.b16 %v176
    %v500 = vunpack.c.h.b16 %v176
    %v501 = vunpack.c.l.b16 %v177
    %v502 = vunpack.c.h.b16 %v177
    %v503 = vunpack.c.l.b16 %v178
    %v504 = vunpack.c.h.b16 %v178
    %v505 = vunpack.c.l.b16 %v179
    %v506 = vunpack.c.h.b16 %v179
    %v507 = vunpack.c.l.b16 %v180
    %v508 = vunpack.c.h.b16 %v180
    %v509 = vunpack.c.l.b16 %v181
    %v510 = vunpack.c.h.b16 %v181
    %v511 = vunpack.c.l.b16 %v182
    %v512 = vunpack.c.h.b16 %v182
    %v513 = vunpack.c.l.b16 %v183
    %v514 = vunpack.c.h.b16 %v183
    %v515 = vunpack.c.l.b16 %v184
    %v516 = vunpack.c.h.b16 %v184
    %v517 = vunpack.c.l.b16 %v185
    %v518 = vunpack.c.h.b16 %v185
    %v519 = vunpack.c.l.b16 %v186
    %v520 = vunpack.c.h.b16 %v186
    %v521 = vunpack.c.l.b16 %v187
    %v522 = vunpack.c.h.b16 %v187
    %v523 = vunpack.c.l.b16 %v188
    %v524 = vunpack.c.h.b16 %v188
    %v525 = vunpack.c.l.b16 %v189
    %v526 = vunpack.c.h.b16 %v189
    %v527 = vunpack.c.l.b16 %v190
    %v528 = vunpack.c.h.b16 %v190
    %v529 = vunpack.c.l.b16 %v191
    %v530 = vunpack.c.h.b16 %v191
    %v531 = vunpack.c.l.b16 %v192
    %v532 = vunpack.c.h.b16 %v192
    %v533 = vunpack.c.l.b16 %v193
    %v534 = vunpack.c.h.b16 %v193
    %v535 = vunpack.c.l.b16 %v194
    %v536 = vunpack.c.h.b16 %v194
    %v537 = vunpack.c.l.b16 %v195
    %v538 = vunpack.c.h.b16 %v195
    %v539 = vunpack.c.l.b16 %v196
    %v540 = vunpack.c.h.b16 %v196
    %v541 = vunpack.c.l.b16 %v197
    %v542 = vunpack.c.h.b16 %v197
    %v543 = vunpack.c.l.b16 %v198
    %v544 = vunpack.c.h.b16 %v198
    %v545 = vunpack.c.l.b16 %v199
    %v546 = vunpack.c.h.b16 %v199
    %v547 = vunpack.c.l.b16 %v200
    %v548 = vunpack.c.h.b16 %v200
    %v549 = vunpack.c.l.b16 %v201
    %v550 = vunpack.c.h.b16 %v201
    %v551 = vunpack.c.l.b16 %v202
    %v552 = vunpack.c.h.b16 %v202
    %v553 = vunpack.c.l.b16 %v203
    %v554 = vunpack.c.h.b16 %v203
    %v555 = vunpack.c.l.b16 %v204
    %v556 = vunpack.c.h.b16 %v204
    %v557 = vunpack.c.l.b16 %v205
    %v558 = vunpack.c.h.b16 %v205
    %v559 = vunpack.c.l.b16 %v206
    %v560 = vunpack.c.h.b16 %v206
    %v561 = vunpack.c.l.b16 %v207
    %v562 = vunpack.c.h.b16 %v207
    %v563 = vunpack.c.l.b16 %v208
    %v564 = vunpack.c.h.b16 %v208
    %v565 = vunpack.c.l.b16 %v209
    %v566 = vunpack.c.h.b16 %v209
    %v567 = vunpack.c.l.b16 %v210
    %v568 = vunpack.c.h.b16 %v210
    %v569 = vunpack.c.l.b16 %v211
    %v570 = vunpack.c.h.b16 %v211
    %v571 = vunpack.c.l.b16 %v212
    %v572 = vunpack.c.h.b16 %v212
    %v573 = vunpack.c.l.b16 %v213
    %v574 = vunpack.c.h.b16 %v213
    %v575 = vunpack.c.l.b16 %v214
    %v576 = vunpack.c.h.b16 %v214
    %v577 = vunpack.c.l.b16 %v215
    %v578 = vunpack.c.h.b16 %v215
    %v579 = vunpack.c.l.b16 %v216
    %v580 = vunpack.c.h.b16 %v216
    %v581 = vunpack.c.l.b16 %v217
    %v582 = vunpack.c.h.b16 %v217
    %v583 = vunpack.c.l.b16 %v218
    %v584 = vunpack.c.h.b16 %v218
    %v585 = vunpack.c.l.b16 %v219
    %v586 = vunpack.c.h.b16 %v219
    %v587 = vunpack.c.l.b16 %v220
    %v588 = vunpack.c.h.b16 %v220
    %v589 = vunpack.c.l.b16 %v221
    %v590 = vunpack.c.h.b16 %v221
    %v591 = vunpack.c.l.b16 %v222
    %v592 = vunpack.c.h.b16 %v222
    %v593 = vunpack.c.l.b16 %v223
    %v594 = vunpack.c.h.b16 %v223
    %v595 = vunpack.c.l.b16 %v224
    %v596 = vunpack.c.h.b16 %v224
    %v597 = vunpack.c.l.b16 %v225
    %v598 = vunpack.c.h.b16 %v225
    %v599 = vunpack.c.l.b16 %v226
    %v600 = vunpack.c.h.b16 %v226
    %v601 = vunpack.c.l.b16 %v227
    %v602 = vunpack.c.h.b16 %v227
    %v603 = vunpack.c.l.b16 %v228
    %v604 = vunpack.c.h.b16 %v228
    %v605 = vunpack.c.l.b16 %v229
    %v606 = vunpack.c.h.b16 %v229
    %v607 = vunpack.c.l.b16 %v230
    %v608 = vunpack.c.h.b16 %v230
    %v609 = vunpack.c.l.b16 %v231
    %v610 = vunpack.c.h.b16 %v231
    %v611 = vunpack.c.l.b16 %v232
    %v612 = vunpack.c.h.b16 %v232
    %v613 = vunpack.c.l.b16 %v233
    %v614 = vunpack.c.h.b16 %v233
    %v615 = vunpack.c.l.b16 %v234
    %v616 = vunpack.c.h.b16 %v234
    %v617 = vunpack.c.l.b16 %v235
    %v618 = vunpack.c.h.b16 %v235
    %v619 = vunpack.c.l.b16 %v236
    %v620 = vunpack.c.h.b16 %v236
    %v621 = vunpack.c.l.b16 %v237
    %v622 = vunpack.c.h.b16 %v237
    %v623 = vunpack.c.l.b16 %v238
    %v624 = vunpack.c.h.b16 %v238
    %v625 = vunpack.c.l.b16 %v239
    %v626 = vunpack.c.h.b16 %v239
    %v627 = vunpack.c.l.b16 %v240
    %v628 = vunpack.c.h.b16 %v240
    %v629 = vunpack.c.l.b16 %v241
    %v630 = vunpack.c.h.b16 %v241
    %v631 = vunpack.c.l.b16 %v242
    %v632 = vunpack.c.h.b16 %v242
    %v633 = vunpack.c.l.b16 %v243
    %v634 = vunpack.c.h.b16 %v243
    %v635 = vunpack.c.l.b16 %v244
    %v636 = vunpack.c.h.b16 %v244
    %v637 = vunpack.c.l.b16 %v245
    %v638 = vunpack.c.h.b16 %v245
    %v639 = vunpack.c.l.b16 %v246
    %v640 = vunpack.c.h.b16 %v246
    %v641 = vunpack.c.l.b16 %v247
    %v642 = vunpack.c.h.b16 %v247
    %v643 = vunpack.c.l.b16 %v248
    %v644 = vunpack.c.h.b16 %v248
    %v645 = vunpack.c.l.b16 %v249
    %v646 = vunpack.c.h.b16 %v249
    %v647 = vunpack.c.l.b16 %v250
    %v648 = vunpack.c.h.b16 %v250
    %v649 = vunpack.c.l.b16 %v251
    %v650 = vunpack.c.h.b16 %v251
    %v651 = vunpack.c.l.b16 %v252
    %v652 = vunpack.c.h.b16 %v252
    %v653 = vunpack.c.l.b16 %v253
    %v654 = vunpack.c.h.b16 %v253
    %v655 = vunpack.c.l.b16 %v254
    %v656 = vunpack.c.h.b16 %v254
    %v657 = vunpack.c.l.b16 %v255
    %v658 = vunpack.c.h.b16 %v255
    %v659 = vunpack.c.l.b16 %v256
    %v660 = vunpack.c.h.b16 %v256
    %v661 = vunpack.c.l.b16 %v257
    %v662 = vunpack.c.h.b16 %v257
    %v663 = vunpack.c.l.b16 %v258
    %v664 = vunpack.c.h.b16 %v258
    %v665 = vunpack.c.l.b16 %v259
    %v666 = vunpack.c.h.b16 %v259
    %v667 = vunpack.c.l.b16 %v260
    %v668 = vunpack.c.h.b16 %v260
    %v669 = vunpack.c.l.b16 %v261
    %v670 = vunpack.c.h.b16 %v261
    %v671 = vunpack.c.l.b16 %v262
    %v672 = vunpack.c.h.b16 %v262
    %v673 = vunpack.c.l.b16 %v263
    %v674 = vunpack.c.h.b16 %v263
    %v675 = vunpack.c.l.b16 %v264
    %v676 = vunpack.c.h.b16 %v264
    %v677 = vunpack.c.l.b16 %v265
    %v678 = vunpack.c.h.b16 %v265
    %v679 = vunpack.c.l.b16 %v266
    %v680 = vunpack.c.h.b16 %v266
    %v681 = vunpack.c.l.b16 %v267
    %v682 = vunpack.c.h.b16 %v267
    %v683 = vunpack.c.l.b16 %v268
    %v684 = vunpack.c.h.b16 %v268
    %v685 = vunpack.c.l.b16 %v269
    %v686 = vunpack.c.h.b16 %v269
    %v687 = vunpack.c.l.b16 %v270
    %v688 = vunpack.c.h.b16 %v270
    %v689 = vunpack.c.l.b16 %v271
    %v690 = vunpack.c.h.b16 %v271
    %v691 = vunpack.c.l.b16 %v272
    %v692 = vunpack.c.h.b16 %v272
    %v693 = vunpack.c.l.b16 %v273
    %v694 = vunpack.c.h.b16 %v273
    %v695 = vunpack.c.l.b16 %v274
    %v696 = vunpack.c.h.b16 %v274
    %v697 = vunpack.c.l.b16 %v275
    %v698 = vunpack.c.h.b16 %v275
    %v699 = vunpack.c.l.b16 %v276
    %v700 = vunpack.c.h.b16 %v276
    %v701 = vunpack.c.l.b16 %v277
    %v702 = vunpack.c.h.b16 %v277
    %v703 = vunpack.c.l.b16 %v278
    %v704 = vunpack.c.h.b16 %v278
    %v705 = vpack.c.b16 %v465, %v449
    %v706 = vpack.c.b16 %v466, %v450
    %v707 = vpack.c.b16 %v467, %v451
    %v708 = vpack.c.b16 %v468, %v452
    %v709 = vpack.c.b16 %v469, %v453
    %v710 = vpack.c.b16 %v470, %v454
    %v711 = vpack.c.b16 %v471, %v455
    %v712 = vpack.c.b16 %v472, %v456
    %v713 = vpack.c.b16 %v473, %v457
    %v714 = vpack.c.b16 %v474, %v458
    %v715 = vpack.c.b16 %v475, %v459
    %v716 = vpack.c.b16 %v476, %v460
    %v717 = vpack.c.b16 %v477, %v461
    %v718 = vpack.c.b16 %v478, %v462
    %v719 = vpack.c.b16 %v479, %v463
    %v720 = vpack.c.b16 %v480, %v464
    %v721 = vpack.c.b16 %v497, %v481
    %v722 = vpack.c.b16 %v498, %v482
    %v723 = vpack.c.b16 %v499, %v483
    %v724 = vpack.c.b16 %v500, %v484
    %v725 = vpack.c.b16 %v501, %v485
    %v726 = vpack.c.b16 %v502, %v486
    %v727 = vpack.c.b16 %v503, %v487
    %v728 = vpack.c.b16 %v504, %v488
    %v729 = vpack.c.b16 %v505, %v489
    %v730 = vpack.c.b16 %v506, %v490
    %v731 = vpack.c.b16 %v507, %v491
    %v732 = vpack.c.b16 %v508, %v492
    %v733 = vpack.c.b16 %v509, %v493
    %v734 = vpack.c.b16 %v510, %v494
    %v735 = vpack.c.b16 %v511, %v495
    %v736 = vpack.c.b16 %v512, %v496
    %v737 = vpack.c.b16 %v529, %v513
    %v738 = vpack.c.b16 %v530, %v514
    %v739 = vpack.c.b16 %v531, %v515
    %v740 = vpack.c.b16 %v532, %v516
    %v741 = vpack.c.b16 %v533, %v517
    %v742 = vpack.c.b16 %v534, %v518
    %v743 = vpack.c.b16 %v535, %v519
    %v744 = vpack.c.b16 %v536, %v520
    %v745 = vpack.c.b16 %v537, %v521
    %v746 = vpack.c.b16 %v538, %v522
    %v747 = vpack.c.b16 %v539, %v523
    %v748 = vpack.c.b16 %v540, %v524
    %v749 = vpack.c.b16 %v541, %v525
    %v750 = vpack.c.b16 %v542, %v526
    %v751 = vpack.c.b16 %v543, %v527
    %v752 = vpack.c.b16 %v544, %v528
    %v753 = vpack.c.b16 %v561, %v545
    %v754 = vpack.c.b16 %v562, %v546
    %v755 = vpack.c.b16 %v563, %v547
    %v756 = vpack.c.b16 %v564, %v548
    %v757 = vpack.c.b16 %v565, %v549
    %v758 = vpack.c.b16 %v566, %v550
    %v759 = vpack.c.b16 %v567, %v551
    %v760 = vpack.c.b16 %v568, %v552
    %v761 = vpack.c.b16 %v569, %v553
    %v762 = vpack.c.b16 %v570, %v554
    %v763 = vpack.c.b16 %v571, %v555
    %v764 = vpack.c.b16 %v572, %v556
    %v765 = vpack.c.b16 %v573, %v557
    %v766 = vpack.c.b16 %v574, %v558
    %v767 = vpack.c.b16 %v575, %v559
    %v768 = vpack.c.b16 %v576, %v560
    %v769 = vpack.c.b16 %v593, %v577
    %v770 = vpack.c.b16 %v594, %v578
    %v771 = vpack.c.b16 %v595, %v579
    %v772 = vpack.c.b16 %v596, %v580
    %v773 = vpack.c.b16 %v597, %v581
    %v774 = vpack.c.b16 %v598, %v582
    %v775 = vpack.c.b16 %v599, %v583
    %v776 = vpack.c.b16 %v600, %v584
    %v777 = vpack.c.b16 %v601, %v585
    %v778 = vpack.c.b16 %v602, %v586
    %v779 = vpack.c.b16 %v603, %v587
    %v780 = vpack.c.b16 %v604, %v588
    %v781 = vpack.c.b16 %v605, %v589
    %v782 = vpack.c.b16 %v606, %v590
    %v783 = vpack.c.b16 %v607, %v591
    %v784 = vpack.c.b16 %v608, %v592
    %v785 = vpack.c.b16 %v625, %v609
    %v786 = vpack.c.b16 %v626, %v610
    %v787 = vpack.c.b16 %v627, %v611
    %v788 = vpack.c.b16 %v628, %v612
    %v789 = vpack.c.b16 %v629, %v613
    %v790 = vpack.c.b16 %v630, %v614
    %v791 = vpack.c.b16 %v631, %v615
    %v792 = vpack.c.b16 %v632, %v616
    %v793 = vpack.c.b16 %v633, %v617
    %v794 = vpack.c.b16 %v634, %v618
    %v795 = vpack.c.b16 %v635, %v619
    %v796 = vpack.c.b16 %v636, %v620
    %v797 = vpack.c.b16 %v637, %v621
    %v798 = vpack.c.b16 %v638, %v622
    %v799 = vpack.c.b16 %v639, %v623
    %v800 = vpack.c.b16 %v640, %v624
    %v801 = vpack.c.b16 %v657, %v641
    %v802 = vpack.c.b16 %v658, %v642
    %v803 = vpack.c.b16 %v659, %v643
    %v804 = vpack.c.b16 %v660, %v644
    %v805 = vpack.c.b16 %v661, %v645
    %v806 = vpack.c.b16 %v662, %v646
    %v807 = vpack.c.b16 %v663, %v647
    %v808 = vpack.c.b16 %v664, %v648
    %v809 = vpack.c.b16 %v665, %v649
    %v810 = vpack.c.b16 %v666, %v650
    %v811 = vpack.c.b16 %v667, %v651
    %v812 = vpack.c.b16 %v668, %v652
    %v813 = vpack.c.b16 %v669, %v653
    %v814 = vpack.c.b16 %v670, %v654
    %v815 = vpack.c.b16 %v671, %v655
    %v816 = vpack.c.b16 %v672, %v656
    %v817 = vpack.c.b16 %v689, %v673
    %v818 = vpack.c.b16 %v690, %v674
    %v819 = vpack.c.b16 %v691, %v675
    %v820 = vpack.c.b16 %v692, %v676
    %v821 = vpack.c.b16 %v693, %v677
    %v822 = vpack.c.b16 %v694, %v678
    %v823 = vpack.c.b16 %v695, %v679
    %v824 = vpack.c.b16 %v696, %v680
    %v825 = vpack.c.b16 %v697, %v681
    %v826 = vpack.c.b16 %v698, %v682
    %v827 = vpack.c.b16 %v699, %v683
    %v828 = vpack.c.b16 %v700, %v684
    %v829 = vpack.c.b16 %v701, %v685
    %v830 = vpack.c.b16 %v702, %v686
    %v831 = vpack.c.b16 %v703, %v687
    %v832 = vpack.c.b16 %v704, %v688
    %961 = vmatpush.bf16.msra.mxu0 %v817
    %962 = vmatpush.bf16.msra.mxu0 %v801
    %963 = vmatpush.bf16.msra.mxu0 %v785
    %964 = vmatpush.bf16.msra.mxu0 %v769
    %965 = vmatpush.bf16.msra.mxu0 %v753
    %966 = vmatpush.bf16.msra.mxu0 %v737
    %967 = vmatpush.bf16.msra.mxu0 %v721
    %968 = vmatpush.bf16.msra.mxu0 %v705
    %969 = vmatmul.bf16.gmra.mxu0 %v319
    %v970 = vpop.f32.mrf.mxu0
    %v971 = vadd.f32 %v283, %v970
    %v972 = vpop.f32.mrf.mxu0
    %v973 = vadd.f32 %v283, %v972
    %974 = vdwg.mxu0
    %975 = vmatpush.bf16.msra.mxu0 %v818
    %976 = vmatpush.bf16.msra.mxu0 %v802
    %977 = vmatpush.bf16.msra.mxu0 %v786
    %978 = vmatpush.bf16.msra.mxu0 %v770
    %979 = vmatpush.bf16.msra.mxu0 %v754
    %980 = vmatpush.bf16.msra.mxu0 %v738
    %981 = vmatpush.bf16.msra.mxu0 %v722
    %982 = vmatpush.bf16.msra.mxu0 %v706
    %983 = vmatmul.bf16.gmra.mxu0 %v319
    %v984 = vpop.f32.mrf.mxu0
    %v985 = vadd.f32 %v284, %v984
    %v986 = vpop.f32.mrf.mxu0
    %v987 = vadd.f32 %v284, %v986
    %988 = vdwg.mxu0
    %989 = vmatpush.bf16.msra.mxu0 %v819
    %990 = vmatpush.bf16.msra.mxu0 %v803
    %991 = vmatpush.bf16.msra.mxu0 %v787
    %992 = vmatpush.bf16.msra.mxu0 %v771
    %993 = vmatpush.bf16.msra.mxu0 %v755
    %994 = vmatpush.bf16.msra.mxu0 %v739
    %995 = vmatpush.bf16.msra.mxu0 %v723
    %996 = vmatpush.bf16.msra.mxu0 %v707
    %997 = vmatmul.bf16.gmra.mxu0 %v319
    %v998 = vpop.f32.mrf.mxu0
    %v999 = vadd.f32 %v285, %v998
    %v1000 = vpop.f32.mrf.mxu0
    %v1001 = vadd.f32 %v285, %v1000
    %1002 = vdwg.mxu0
    %1003 = vmatpush.bf16.msra.mxu0 %v820
    %1004 = vmatpush.bf16.msra.mxu0 %v804
    %1005 = vmatpush.bf16.msra.mxu0 %v788
    %1006 = vmatpush.bf16.msra.mxu0 %v772
    %1007 = vmatpush.bf16.msra.mxu0 %v756
    %1008 = vmatpush.bf16.msra.mxu0 %v740
    %1009 = vmatpush.bf16.msra.mxu0 %v724
    %1010 = vmatpush.bf16.msra.mxu0 %v708
    %1011 = vmatmul.bf16.gmra.mxu0 %v319
    %v1012 = vpop.f32.mrf.mxu0
    %v1013 = vadd.f32 %v286, %v1012
    %v1014 = vpop.f32.mrf.mxu0
    %v1015 = vadd.f32 %v286, %v1014
    %1016 = vdwg.mxu0
    %1017 = vmatpush.bf16.msra.mxu0 %v821
    %1018 = vmatpush.bf16.msra.mxu0 %v805
    %1019 = vmatpush.bf16.msra.mxu0 %v789
    %1020 = vmatpush.bf16.msra.mxu0 %v773
    %1021 = vmatpush.bf16.msra.mxu0 %v757
    %1022 = vmatpush.bf16.msra.mxu0 %v741
    %1023 = vmatpush.bf16.msra.mxu0 %v725
    %1024 = vmatpush.bf16.msra.mxu0 %v709
    %1025 = vmatmul.bf16.gmra.mxu0 %v319
    %v1026 = vpop.f32.mrf.mxu0
    %v1027 = vadd.f32 %v287, %v1026
    %v1028 = vpop.f32.mrf.mxu0
    %v1029 = vadd.f32 %v287, %v1028
    %1030 = vdwg.mxu0
    %1031 = vmatpush.bf16.msra.mxu0 %v822
    %1032 = vmatpush.bf16.msra.mxu0 %v806
    %1033 = vmatpush.bf16.msra.mxu0 %v790
    %1034 = vmatpush.bf16.msra.mxu0 %v774
    %1035 = vmatpush.bf16.msra.mxu0 %v758
    %1036 = vmatpush.bf16.msra.mxu0 %v742
    %1037 = vmatpush.bf16.msra.mxu0 %v726
    %1038 = vmatpush.bf16.msra.mxu0 %v710
    %1039 = vmatmul.bf16.gmra.mxu0 %v319
    %v1040 = vpop.f32.mrf.mxu0
    %v1041 = vadd.f32 %v288, %v1040
    %v1042 = vpop.f32.mrf.mxu0
    %v1043 = vadd.f32 %v288, %v1042
    %1044 = vdwg.mxu0
    %1045 = vmatpush.bf16.msra.mxu0 %v823
    %1046 = vmatpush.bf16.msra.mxu0 %v807
    %1047 = vmatpush.bf16.msra.mxu0 %v791
    %1048 = vmatpush.bf16.msra.mxu0 %v775
    %1049 = vmatpush.bf16.msra.mxu0 %v759
    %1050 = vmatpush.bf16.msra.mxu0 %v743
    %1051 = vmatpush.bf16.msra.mxu0 %v727
    %1052 = vmatpush.bf16.msra.mxu0 %v711
    %1053 = vmatmul.bf16.gmra.mxu0 %v319
    %v1054 = vpop.f32.mrf.mxu0
    %v1055 = vadd.f32 %v289, %v1054
    %v1056 = vpop.f32.mrf.mxu0
    %v1057 = vadd.f32 %v289, %v1056
    %1058 = vdwg.mxu0
    %1059 = vmatpush.bf16.msra.mxu0 %v824
    %1060 = vmatpush.bf16.msra.mxu0 %v808
    %1061 = vmatpush.bf16.msra.mxu0 %v792
    %1062 = vmatpush.bf16.msra.mxu0 %v776
    %1063 = vmatpush.bf16.msra.mxu0 %v760
    %1064 = vmatpush.bf16.msra.mxu0 %v744
    %1065 = vmatpush.bf16.msra.mxu0 %v728
    %1066 = vmatpush.bf16.msra.mxu0 %v712
    %1067 = vmatmul.bf16.gmra.mxu0 %v319
    %v1068 = vpop.f32.mrf.mxu0
    %v1069 = vadd.f32 %v290, %v1068
    %v1070 = vpop.f32.mrf.mxu0
    %v1071 = vadd.f32 %v290, %v1070
    %1072 = vdwg.mxu0
    %1073 = vmatpush.bf16.msra.mxu0 %v825
    %1074 = vmatpush.bf16.msra.mxu0 %v809
    %1075 = vmatpush.bf16.msra.mxu0 %v793
    %1076 = vmatpush.bf16.msra.mxu0 %v777
    %1077 = vmatpush.bf16.msra.mxu0 %v761
    %1078 = vmatpush.bf16.msra.mxu0 %v745
    %1079 = vmatpush.bf16.msra.mxu0 %v729
    %1080 = vmatpush.bf16.msra.mxu0 %v713
    %1081 = vmatmul.bf16.gmra.mxu0 %v319
    %v1082 = vpop.f32.mrf.mxu0
    %v1083 = vadd.f32 %v291, %v1082
    %v1084 = vpop.f32.mrf.mxu0
    %v1085 = vadd.f32 %v291, %v1084
    %1086 = vdwg.mxu0
    %1087 = vmatpush.bf16.msra.mxu0 %v826
    %1088 = vmatpush.bf16.msra.mxu0 %v810
    %1089 = vmatpush.bf16.msra.mxu0 %v794
    %1090 = vmatpush.bf16.msra.mxu0 %v778
    %1091 = vmatpush.bf16.msra.mxu0 %v762
    %1092 = vmatpush.bf16.msra.mxu0 %v746
    %1093 = vmatpush.bf16.msra.mxu0 %v730
    %1094 = vmatpush.bf16.msra.mxu0 %v714
    %1095 = vmatmul.bf16.gmra.mxu0 %v319
    %v1096 = vpop.f32.mrf.mxu0
    %v1097 = vadd.f32 %v292, %v1096
    %v1098 = vpop.f32.mrf.mxu0
    %v1099 = vadd.f32 %v292, %v1098
    %1100 = vdwg.mxu0
    %1101 = vmatpush.bf16.msra.mxu0 %v827
    %1102 = vmatpush.bf16.msra.mxu0 %v811
    %1103 = vmatpush.bf16.msra.mxu0 %v795
    %1104 = vmatpush.bf16.msra.mxu0 %v779
    %1105 = vmatpush.bf16.msra.mxu0 %v763
    %1106 = vmatpush.bf16.msra.mxu0 %v747
    %1107 = vmatpush.bf16.msra.mxu0 %v731
    %1108 = vmatpush.bf16.msra.mxu0 %v715
    %1109 = vmatmul.bf16.gmra.mxu0 %v319
    %v1110 = vpop.f32.mrf.mxu0
    %v1111 = vadd.f32 %v293, %v1110
    %v1112 = vpop.f32.mrf.mxu0
    %v1113 = vadd.f32 %v293, %v1112
    %1114 = vdwg.mxu0
    %1115 = vmatpush.bf16.msra.mxu0 %v828
    %1116 = vmatpush.bf16.msra.mxu0 %v812
    %1117 = vmatpush.bf16.msra.mxu0 %v796
    %1118 = vmatpush.bf16.msra.mxu0 %v780
    %1119 = vmatpush.bf16.msra.mxu0 %v764
    %1120 = vmatpush.bf16.msra.mxu0 %v748
    %1121 = vmatpush.bf16.msra.mxu0 %v732
    %1122 = vmatpush.bf16.msra.mxu0 %v716
    %1123 = vmatmul.bf16.gmra.mxu0 %v319
    %v1124 = vpop.f32.mrf.mxu0
    %v1125 = vadd.f32 %v294, %v1124
    %v1126 = vpop.f32.mrf.mxu0
    %v1127 = vadd.f32 %v294, %v1126
    %1128 = vdwg.mxu0
    %1129 = vmatpush.bf16.msra.mxu0 %v829
    %1130 = vmatpush.bf16.msra.mxu0 %v813
    %1131 = vmatpush.bf16.msra.mxu0 %v797
    %1132 = vmatpush.bf16.msra.mxu0 %v781
    %1133 = vmatpush.bf16.msra.mxu0 %v765
    %1134 = vmatpush.bf16.msra.mxu0 %v749
    %1135 = vmatpush.bf16.msra.mxu0 %v733
    %1136 = vmatpush.bf16.msra.mxu0 %v717
    %1137 = vmatmul.bf16.gmra.mxu0 %v319
    %v1138 = vpop.f32.mrf.mxu0
    %v1139 = vadd.f32 %v295, %v1138
    %v1140 = vpop.f32.mrf.mxu0
    %v1141 = vadd.f32 %v295, %v1140
    %1142 = vdwg.mxu0
    %1143 = vmatpush.bf16.msra.mxu0 %v830
    %1144 = vmatpush.bf16.msra.mxu0 %v814
    %1145 = vmatpush.bf16.msra.mxu0 %v798
    %1146 = vmatpush.bf16.msra.mxu0 %v782
    %1147 = vmatpush.bf16.msra.mxu0 %v766
    %1148 = vmatpush.bf16.msra.mxu0 %v750
    %1149 = vmatpush.bf16.msra.mxu0 %v734
    %1150 = vmatpush.bf16.msra.mxu0 %v718
    %1151 = vmatmul.bf16.gmra.mxu0 %v319
    %v1152 = vpop.f32.mrf.mxu0
    %v1153 = vadd.f32 %v296, %v1152
    %v1154 = vpop.f32.mrf.mxu0
    %v1155 = vadd.f32 %v296, %v1154
    %1156 = vdwg.mxu0
    %1157 = vmatpush.bf16.msra.mxu0 %v831
    %1158 = vmatpush.bf16.msra.mxu0 %v815
    %1159 = vmatpush.bf16.msra.mxu0 %v799
    %1160 = vmatpush.bf16.msra.mxu0 %v783
    %1161 = vmatpush.bf16.msra.mxu0 %v767
    %1162 = vmatpush.bf16.msra.mxu0 %v751
    %1163 = vmatpush.bf16.msra.mxu0 %v735
    %1164 = vmatpush.bf16.msra.mxu0 %v719
    %1165 = vmatmul.bf16.gmra.mxu0 %v319
    %v1166 = vpop.f32.mrf.mxu0
    %v1167 = vadd.f32 %v297, %v1166
    %v1168 = vpop.f32.mrf.mxu0
    %v1169 = vadd.f32 %v297, %v1168
    %1170 = vdwg.mxu0
    %1171 = vmatpush.bf16.msra.mxu0 %v832
    %1172 = vmatpush.bf16.msra.mxu0 %v816
    %1173 = vmatpush.bf16.msra.mxu0 %v800
    %1174 = vmatpush.bf16.msra.mxu0 %v784
    %1175 = vmatpush.bf16.msra.mxu0 %v768
    %1176 = vmatpush.bf16.msra.mxu0 %v752
    %1177 = vmatpush.bf16.msra.mxu0 %v736
    %1178 = vmatpush.bf16.msra.mxu0 %v720
    %1179 = vmatmul.bf16.gmra.mxu0 %v319
    %v1180 = vpop.f32.mrf.mxu0
    %v1181 = vadd.f32 %v298, %v1180
    %v1182 = vpop.f32.mrf.mxu0
    %v1183 = vadd.f32 %v298, %v1182
    %1184 = vdwg.mxu0
    %v1185 = vmin.f32 %v971, 20.0
    %v1186 = vmin.f32 %v985, 20.0
    %v1187 = vmin.f32 %v999, 20.0
    %v1188 = vmin.f32 %v1013, 20.0
    %v1189 = vmin.f32 %v1027, 20.0
    %v1190 = vmin.f32 %v1041, 20.0
    %v1191 = vmin.f32 %v1055, 20.0
    %v1192 = vmin.f32 %v1069, 20.0
    %v1193 = vmin.f32 %v1083, 20.0
    %v1194 = vmin.f32 %v1097, 20.0
    %v1195 = vmin.f32 %v1111, 20.0
    %v1196 = vmin.f32 %v1125, 20.0
    %v1197 = vmin.f32 %v1139, 20.0
    %v1198 = vmin.f32 %v1153, 20.0
    %v1199 = vmin.f32 %v1167, 20.0
    %v1200 = vmin.f32 %v1181, 20.0
    %v1201 = vmin.f32 %v973, 20.0
    %v1202 = vmin.f32 %v987, 20.0
    %v1203 = vmin.f32 %v1001, 20.0
    %v1204 = vmin.f32 %v1015, 20.0
    %v1205 = vmin.f32 %v1029, 20.0
    %v1206 = vmin.f32 %v1043, 20.0
    %v1207 = vmin.f32 %v1057, 20.0
    %v1208 = vmin.f32 %v1071, 20.0
    %v1209 = vmin.f32 %v1085, 20.0
    %v1210 = vmin.f32 %v1099, 20.0
    %v1211 = vmin.f32 %v1113, 20.0
    %v1212 = vmin.f32 %v1127, 20.0
    %v1213 = vmin.f32 %v1141, 20.0
    %v1214 = vmin.f32 %v1155, 20.0
    %v1215 = vmin.f32 %v1169, 20.0
    %v1216 = vmin.f32 %v1183, 20.0
    %v1217 = vmul.f32 %v1185, 1.442695
    %v1218 = vpow.pop %v1217
    %v1219 = vmul.f32 %v1186, 1.442695
    %v1220 = vpow.pop %v1219
    %v1221 = vmul.f32 %v1187, 1.442695
    %v1222 = vpow.pop %v1221
    %v1223 = vmul.f32 %v1188, 1.442695
    %v1224 = vpow.pop %v1223
    %v1225 = vmul.f32 %v1189, 1.442695
    %v1226 = vpow.pop %v1225
    %v1227 = vmul.f32 %v1190, 1.442695
    %v1228 = vpow.pop %v1227
    %v1229 = vmul.f32 %v1191, 1.442695
    %v1230 = vpow.pop %v1229
    %v1231 = vmul.f32 %v1192, 1.442695
    %v1232 = vpow.pop %v1231
    %v1233 = vmul.f32 %v1193, 1.442695
    %v1234 = vpow.pop %v1233
    %v1235 = vmul.f32 %v1194, 1.442695
    %v1236 = vpow.pop %v1235
    %v1237 = vmul.f32 %v1195, 1.442695
    %v1238 = vpow.pop %v1237
    %v1239 = vmul.f32 %v1196, 1.442695
    %v1240 = vpow.pop %v1239
    %v1241 = vmul.f32 %v1197, 1.442695
    %v1242 = vpow.pop %v1241
    %v1243 = vmul.f32 %v1198, 1.442695
    %v1244 = vpow.pop %v1243
    %v1245 = vmul.f32 %v1199, 1.442695
    %v1246 = vpow.pop %v1245
    %v1247 = vmul.f32 %v1200, 1.442695
    %v1248 = vpow.pop %v1247
    %v1249 = vmul.f32 %v1201, 1.442695
    %v1250 = vpow.pop %v1249
    %v1251 = vmul.f32 %v1202, 1.442695
    %v1252 = vpow.pop %v1251
    %v1253 = vmul.f32 %v1203, 1.442695
    %v1254 = vpow.pop %v1253
    %v1255 = vmul.f32 %v1204, 1.442695
    %v1256 = vpow.pop %v1255
    %v1257 = vmul.f32 %v1205, 1.442695
    %v1258 = vpow.pop %v1257
    %v1259 = vmul.f32 %v1206, 1.442695
    %v1260 = vpow.pop %v1259
    %v1261 = vmul.f32 %v1207, 1.442695
    %v1262 = vpow.pop %v1261
    %v1263 = vmul.f32 %v1208, 1.442695
    %v1264 = vpow.pop %v1263
    %v1265 = vmul.f32 %v1209, 1.442695
    %v1266 = vpow.pop %v1265
    %v1267 = vmul.f32 %v1210, 1.442695
    %v1268 = vpow.pop %v1267
    %v1269 = vmul.f32 %v1211, 1.442695
    %v1270 = vpow.pop %v1269
    %v1271 = vmul.f32 %v1212, 1.442695
    %v1272 = vpow.pop %v1271
    %v1273 = vmul.f32 %v1213, 1.442695
    %v1274 = vpow.pop %v1273
    %v1275 = vmul.f32 %v1214, 1.442695
    %v1276 = vpow.pop %v1275
    %v1277 = vmul.f32 %v1215, 1.442695
    %v1278 = vpow.pop %v1277
    %v1279 = vmul.f32 %v1216, 1.442695
    %v1280 = vpow.pop %v1279
    %v1281 = vadd.f32 %v1218, 1.0
    %v1282 = vadd.f32 %v1220, 1.0
    %v1283 = vadd.f32 %v1222, 1.0
    %v1284 = vadd.f32 %v1224, 1.0
    %v1285 = vadd.f32 %v1226, 1.0
    %v1286 = vadd.f32 %v1228, 1.0
    %v1287 = vadd.f32 %v1230, 1.0
    %v1288 = vadd.f32 %v1232, 1.0
    %v1289 = vadd.f32 %v1234, 1.0
    %v1290 = vadd.f32 %v1236, 1.0
    %v1291 = vadd.f32 %v1238, 1.0
    %v1292 = vadd.f32 %v1240, 1.0
    %v1293 = vadd.f32 %v1242, 1.0
    %v1294 = vadd.f32 %v1244, 1.0
    %v1295 = vadd.f32 %v1246, 1.0
    %v1296 = vadd.f32 %v1248, 1.0
    %v1297 = vadd.f32 %v1250, 1.0
    %v1298 = vadd.f32 %v1252, 1.0
    %v1299 = vadd.f32 %v1254, 1.0
    %v1300 = vadd.f32 %v1256, 1.0
    %v1301 = vadd.f32 %v1258, 1.0
    %v1302 = vadd.f32 %v1260, 1.0
    %v1303 = vadd.f32 %v1262, 1.0
    %v1304 = vadd.f32 %v1264, 1.0
    %v1305 = vadd.f32 %v1266, 1.0
    %v1306 = vadd.f32 %v1268, 1.0
    %v1307 = vadd.f32 %v1270, 1.0
    %v1308 = vadd.f32 %v1272, 1.0
    %v1309 = vadd.f32 %v1274, 1.0
    %v1310 = vadd.f32 %v1276, 1.0
    %v1311 = vadd.f32 %v1278, 1.0
    %v1312 = vadd.f32 %v1280, 1.0
    %v1313 = vmul.f32 %v1281, %v1281
    %v1314 = vmul.f32 %v1282, %v1282
    %v1315 = vmul.f32 %v1283, %v1283
    %v1316 = vmul.f32 %v1284, %v1284
    %v1317 = vmul.f32 %v1285, %v1285
    %v1318 = vmul.f32 %v1286, %v1286
    %v1319 = vmul.f32 %v1287, %v1287
    %v1320 = vmul.f32 %v1288, %v1288
    %v1321 = vmul.f32 %v1289, %v1289
    %v1322 = vmul.f32 %v1290, %v1290
    %v1323 = vmul.f32 %v1291, %v1291
    %v1324 = vmul.f32 %v1292, %v1292
    %v1325 = vmul.f32 %v1293, %v1293
    %v1326 = vmul.f32 %v1294, %v1294
    %v1327 = vmul.f32 %v1295, %v1295
    %v1328 = vmul.f32 %v1296, %v1296
    %v1329 = vmul.f32 %v1297, %v1297
    %v1330 = vmul.f32 %v1298, %v1298
    %v1331 = vmul.f32 %v1299, %v1299
    %v1332 = vmul.f32 %v1300, %v1300
    %v1333 = vmul.f32 %v1301, %v1301
    %v1334 = vmul.f32 %v1302, %v1302
    %v1335 = vmul.f32 %v1303, %v1303
    %v1336 = vmul.f32 %v1304, %v1304
    %v1337 = vmul.f32 %v1305, %v1305
    %v1338 = vmul.f32 %v1306, %v1306
    %v1339 = vmul.f32 %v1307, %v1307
    %v1340 = vmul.f32 %v1308, %v1308
    %v1341 = vmul.f32 %v1309, %v1309
    %v1342 = vmul.f32 %v1310, %v1310
    %v1343 = vmul.f32 %v1311, %v1311
    %v1344 = vmul.f32 %v1312, %v1312
    %v1345 = vsub.f32 %v1313, 1.0
    %v1346 = vsub.f32 %v1314, 1.0
    %v1347 = vsub.f32 %v1315, 1.0
    %v1348 = vsub.f32 %v1316, 1.0
    %v1349 = vsub.f32 %v1317, 1.0
    %v1350 = vsub.f32 %v1318, 1.0
    %v1351 = vsub.f32 %v1319, 1.0
    %v1352 = vsub.f32 %v1320, 1.0
    %v1353 = vsub.f32 %v1321, 1.0
    %v1354 = vsub.f32 %v1322, 1.0
    %v1355 = vsub.f32 %v1323, 1.0
    %v1356 = vsub.f32 %v1324, 1.0
    %v1357 = vsub.f32 %v1325, 1.0
    %v1358 = vsub.f32 %v1326, 1.0
    %v1359 = vsub.f32 %v1327, 1.0
    %v1360 = vsub.f32 %v1328, 1.0
    %v1361 = vsub.f32 %v1329, 1.0
    %v1362 = vsub.f32 %v1330, 1.0
    %v1363 = vsub.f32 %v1331, 1.0
    %v1364 = vsub.f32 %v1332, 1.0
    %v1365 = vsub.f32 %v1333, 1.0
    %v1366 = vsub.f32 %v1334, 1.0
    %v1367 = vsub.f32 %v1335, 1.0
    %v1368 = vsub.f32 %v1336, 1.0
    %v1369 = vsub.f32 %v1337, 1.0
    %v1370 = vsub.f32 %v1338, 1.0
    %v1371 = vsub.f32 %v1339, 1.0
    %v1372 = vsub.f32 %v1340, 1.0
    %v1373 = vsub.f32 %v1341, 1.0
    %v1374 = vsub.f32 %v1342, 1.0
    %v1375 = vsub.f32 %v1343, 1.0
    %v1376 = vsub.f32 %v1344, 1.0
    %v1377 = vadd.f32 %v1313, 1.0
    %v1378 = vadd.f32 %v1314, 1.0
    %v1379 = vadd.f32 %v1315, 1.0
    %v1380 = vadd.f32 %v1316, 1.0
    %v1381 = vadd.f32 %v1317, 1.0
    %v1382 = vadd.f32 %v1318, 1.0
    %v1383 = vadd.f32 %v1319, 1.0
    %v1384 = vadd.f32 %v1320, 1.0
    %v1385 = vadd.f32 %v1321, 1.0
    %v1386 = vadd.f32 %v1322, 1.0
    %v1387 = vadd.f32 %v1323, 1.0
    %v1388 = vadd.f32 %v1324, 1.0
    %v1389 = vadd.f32 %v1325, 1.0
    %v1390 = vadd.f32 %v1326, 1.0
    %v1391 = vadd.f32 %v1327, 1.0
    %v1392 = vadd.f32 %v1328, 1.0
    %v1393 = vadd.f32 %v1329, 1.0
    %v1394 = vadd.f32 %v1330, 1.0
    %v1395 = vadd.f32 %v1331, 1.0
    %v1396 = vadd.f32 %v1332, 1.0
    %v1397 = vadd.f32 %v1333, 1.0
    %v1398 = vadd.f32 %v1334, 1.0
    %v1399 = vadd.f32 %v1335, 1.0
    %v1400 = vadd.f32 %v1336, 1.0
    %v1401 = vadd.f32 %v1337, 1.0
    %v1402 = vadd.f32 %v1338, 1.0
    %v1403 = vadd.f32 %v1339, 1.0
    %v1404 = vadd.f32 %v1340, 1.0
    %v1405 = vadd.f32 %v1341, 1.0
    %v1406 = vadd.f32 %v1342, 1.0
    %v1407 = vadd.f32 %v1343, 1.0
    %v1408 = vadd.f32 %v1344, 1.0
    %v1409 = vrcp.pop %v1377
    %v1410 = vrcp.pop %v1378
    %v1411 = vrcp.pop %v1379
    %v1412 = vrcp.pop %v1380
    %v1413 = vrcp.pop %v1381
    %v1414 = vrcp.pop %v1382
    %v1415 = vrcp.pop %v1383
    %v1416 = vrcp.pop %v1384
    %v1417 = vrcp.pop %v1385
    %v1418 = vrcp.pop %v1386
    %v1419 = vrcp.pop %v1387
    %v1420 = vrcp.pop %v1388
    %v1421 = vrcp.pop %v1389
    %v1422 = vrcp.pop %v1390
    %v1423 = vrcp.pop %v1391
    %v1424 = vrcp.pop %v1392
    %v1425 = vrcp.pop %v1393
    %v1426 = vrcp.pop %v1394
    %v1427 = vrcp.pop %v1395
    %v1428 = vrcp.pop %v1396
    %v1429 = vrcp.pop %v1397
    %v1430 = vrcp.pop %v1398
    %v1431 = vrcp.pop %v1399
    %v1432 = vrcp.pop %v1400
    %v1433 = vrcp.pop %v1401
    %v1434 = vrcp.pop %v1402
    %v1435 = vrcp.pop %v1403
    %v1436 = vrcp.pop %v1404
    %v1437 = vrcp.pop %v1405
    %v1438 = vrcp.pop %v1406
    %v1439 = vrcp.pop %v1407
    %v1440 = vrcp.pop %v1408
    %v1441 = vmul.f32 %v1345, %v1409
    %v1442 = vmul.f32 %v1346, %v1410
    %v1443 = vmul.f32 %v1347, %v1411
    %v1444 = vmul.f32 %v1348, %v1412
    %v1445 = vmul.f32 %v1349, %v1413
    %v1446 = vmul.f32 %v1350, %v1414
    %v1447 = vmul.f32 %v1351, %v1415
    %v1448 = vmul.f32 %v1352, %v1416
    %v1449 = vmul.f32 %v1353, %v1417
    %v1450 = vmul.f32 %v1354, %v1418
    %v1451 = vmul.f32 %v1355, %v1419
    %v1452 = vmul.f32 %v1356, %v1420
    %v1453 = vmul.f32 %v1357, %v1421
    %v1454 = vmul.f32 %v1358, %v1422
    %v1455 = vmul.f32 %v1359, %v1423
    %v1456 = vmul.f32 %v1360, %v1424
    %v1457 = vmul.f32 %v1361, %v1425
    %v1458 = vmul.f32 %v1362, %v1426
    %v1459 = vmul.f32 %v1363, %v1427
    %v1460 = vmul.f32 %v1364, %v1428
    %v1461 = vmul.f32 %v1365, %v1429
    %v1462 = vmul.f32 %v1366, %v1430
    %v1463 = vmul.f32 %v1367, %v1431
    %v1464 = vmul.f32 %v1368, %v1432
    %v1465 = vmul.f32 %v1369, %v1433
    %v1466 = vmul.f32 %v1370, %v1434
    %v1467 = vmul.f32 %v1371, %v1435
    %v1468 = vmul.f32 %v1372, %v1436
    %v1469 = vmul.f32 %v1373, %v1437
    %v1470 = vmul.f32 %v1374, %v1438
    %v1471 = vmul.f32 %v1375, %v1439
    %v1472 = vmul.f32 %v1376, %v1440
    %vm1473 = vcmp.gt.f32.partialorder %v971, 20.0
    %vm1474 = vcmp.gt.f32.partialorder %v985, 20.0
    %vm1475 = vcmp.gt.f32.partialorder %v999, 20.0
    %vm1476 = vcmp.gt.f32.partialorder %v1013, 20.0
    %vm1477 = vcmp.gt.f32.partialorder %v1027, 20.0
    %vm1478 = vcmp.gt.f32.partialorder %v1041, 20.0
    %vm1479 = vcmp.gt.f32.partialorder %v1055, 20.0
    %vm1480 = vcmp.gt.f32.partialorder %v1069, 20.0
    %vm1481 = vcmp.gt.f32.partialorder %v1083, 20.0
    %vm1482 = vcmp.gt.f32.partialorder %v1097, 20.0
    %vm1483 = vcmp.gt.f32.partialorder %v1111, 20.0
    %vm1484 = vcmp.gt.f32.partialorder %v1125, 20.0
    %vm1485 = vcmp.gt.f32.partialorder %v1139, 20.0
    %vm1486 = vcmp.gt.f32.partialorder %v1153, 20.0
    %vm1487 = vcmp.gt.f32.partialorder %v1167, 20.0
    %vm1488 = vcmp.gt.f32.partialorder %v1181, 20.0
    %vm1489 = vcmp.gt.f32.partialorder %v973, 20.0
    %vm1490 = vcmp.gt.f32.partialorder %v987, 20.0
    %vm1491 = vcmp.gt.f32.partialorder %v1001, 20.0
    %vm1492 = vcmp.gt.f32.partialorder %v1015, 20.0
    %vm1493 = vcmp.gt.f32.partialorder %v1029, 20.0
    %vm1494 = vcmp.gt.f32.partialorder %v1043, 20.0
    %vm1495 = vcmp.gt.f32.partialorder %v1057, 20.0
    %vm1496 = vcmp.gt.f32.partialorder %v1071, 20.0
    %vm1497 = vcmp.gt.f32.partialorder %v1085, 20.0
    %vm1498 = vcmp.gt.f32.partialorder %v1099, 20.0
    %vm1499 = vcmp.gt.f32.partialorder %v1113, 20.0
    %vm1500 = vcmp.gt.f32.partialorder %v1127, 20.0
    %vm1501 = vcmp.gt.f32.partialorder %v1141, 20.0
    %vm1502 = vcmp.gt.f32.partialorder %v1155, 20.0
    %vm1503 = vcmp.gt.f32.partialorder %v1169, 20.0
    %vm1504 = vcmp.gt.f32.partialorder %v1183, 20.0
    %v1505 = vmul.f32 %v971, %v1441
    %v1506 = vmul.f32 %v985, %v1442
    %v1507 = vmul.f32 %v999, %v1443
    %v1508 = vmul.f32 %v1013, %v1444
    %v1509 = vmul.f32 %v1027, %v1445
    %v1510 = vmul.f32 %v1041, %v1446
    %v1511 = vmul.f32 %v1055, %v1447
    %v1512 = vmul.f32 %v1069, %v1448
    %v1513 = vmul.f32 %v1083, %v1449
    %v1514 = vmul.f32 %v1097, %v1450
    %v1515 = vmul.f32 %v1111, %v1451
    %v1516 = vmul.f32 %v1125, %v1452
    %v1517 = vmul.f32 %v1139, %v1453
    %v1518 = vmul.f32 %v1153, %v1454
    %v1519 = vmul.f32 %v1167, %v1455
    %v1520 = vmul.f32 %v1181, %v1456
    %v1521 = vmul.f32 %v973, %v1457
    %v1522 = vmul.f32 %v987, %v1458
    %v1523 = vmul.f32 %v1001, %v1459
    %v1524 = vmul.f32 %v1015, %v1460
    %v1525 = vmul.f32 %v1029, %v1461
    %v1526 = vmul.f32 %v1043, %v1462
    %v1527 = vmul.f32 %v1057, %v1463
    %v1528 = vmul.f32 %v1071, %v1464
    %v1529 = vmul.f32 %v1085, %v1465
    %v1530 = vmul.f32 %v1099, %v1466
    %v1531 = vmul.f32 %v1113, %v1467
    %v1532 = vmul.f32 %v1127, %v1468
    %v1533 = vmul.f32 %v1141, %v1469
    %v1534 = vmul.f32 %v1155, %v1470
    %v1535 = vmul.f32 %v1169, %v1471
    %v1536 = vmul.f32 %v1183, %v1472
    %v1537 = vsel %vm1473, %v971, %v1505
    %v1538 = vsel %vm1474, %v985, %v1506
    %v1539 = vsel %vm1475, %v999, %v1507
    %v1540 = vsel %vm1476, %v1013, %v1508
    %v1541 = vsel %vm1477, %v1027, %v1509
    %v1542 = vsel %vm1478, %v1041, %v1510
    %v1543 = vsel %vm1479, %v1055, %v1511
    %v1544 = vsel %vm1480, %v1069, %v1512
    %v1545 = vsel %vm1481, %v1083, %v1513
    %v1546 = vsel %vm1482, %v1097, %v1514
    %v1547 = vsel %vm1483, %v1111, %v1515
    %v1548 = vsel %vm1484, %v1125, %v1516
    %v1549 = vsel %vm1485, %v1139, %v1517
    %v1550 = vsel %vm1486, %v1153, %v1518
    %v1551 = vsel %vm1487, %v1167, %v1519
    %v1552 = vsel %vm1488, %v1181, %v1520
    %v1553 = vsel %vm1489, %v973, %v1521
    %v1554 = vsel %vm1490, %v987, %v1522
    %v1555 = vsel %vm1491, %v1001, %v1523
    %v1556 = vsel %vm1492, %v1015, %v1524
    %v1557 = vsel %vm1493, %v1029, %v1525
    %v1558 = vsel %vm1494, %v1043, %v1526
    %v1559 = vsel %vm1495, %v1057, %v1527
    %v1560 = vsel %vm1496, %v1071, %v1528
    %v1561 = vsel %vm1497, %v1085, %v1529
    %v1562 = vsel %vm1498, %v1099, %v1530
    %v1563 = vsel %vm1499, %v1113, %v1531
    %v1564 = vsel %vm1500, %v1127, %v1532
    %v1565 = vsel %vm1501, %v1141, %v1533
    %v1566 = vsel %vm1502, %v1155, %v1534
    %v1567 = vsel %vm1503, %v1169, %v1535
    %v1568 = vsel %vm1504, %v1183, %v1536
    %v1569 = vpack.c.bf16 %v1553, %v1537
    %v1570 = vpack.c.bf16 %v1554, %v1538
    %v1571 = vpack.c.bf16 %v1555, %v1539
    %v1572 = vpack.c.bf16 %v1556, %v1540
    %v1573 = vpack.c.bf16 %v1557, %v1541
    %v1574 = vpack.c.bf16 %v1558, %v1542
    %v1575 = vpack.c.bf16 %v1559, %v1543
    %v1576 = vpack.c.bf16 %v1560, %v1544
    %v1577 = vpack.c.bf16 %v1561, %v1545
    %v1578 = vpack.c.bf16 %v1562, %v1546
    %v1579 = vpack.c.bf16 %v1563, %v1547
    %v1580 = vpack.c.bf16 %v1564, %v1548
    %v1581 = vpack.c.bf16 %v1565, %v1549
    %v1582 = vpack.c.bf16 %v1566, %v1550
    %v1583 = vpack.c.bf16 %v1567, %v1551
    %v1584 = vpack.c.bf16 %v1568, %v1552
    %v1585 = vld [vmem:[#allocation6] sm:$0xff]
    %v1586 = vld [vmem:[#allocation6 + $0x8] sm:$0xff]
    %v1587 = vld [vmem:[#allocation6 + $0x10] sm:$0xff]
    %v1588 = vld [vmem:[#allocation6 + $0x18] sm:$0xff]
    %v1589 = vld [vmem:[#allocation6 + $0x20] sm:$0xff]
    %v1590 = vld [vmem:[#allocation6 + $0x28] sm:$0xff]
    %v1591 = vld [vmem:[#allocation6 + $0x30] sm:$0xff]
    %v1592 = vld [vmem:[#allocation6 + $0x38] sm:$0xff]
    %v1593 = vld [vmem:[#allocation6 + $0x40] sm:$0xff]
    %v1594 = vld [vmem:[#allocation6 + $0x48] sm:$0xff]
    %v1595 = vld [vmem:[#allocation6 + $0x50] sm:$0xff]
    %v1596 = vld [vmem:[#allocation6 + $0x58] sm:$0xff]
    %v1597 = vld [vmem:[#allocation6 + $0x60] sm:$0xff]
    %v1598 = vld [vmem:[#allocation6 + $0x68] sm:$0xff]
    %v1599 = vld [vmem:[#allocation6 + $0x70] sm:$0xff]
    %v1600 = vld [vmem:[#allocation6 + $0x78] sm:$0xff]
    %v1601 = vld [vmem:[#allocation6 + $0x80] sm:$0xff]
    %v1602 = vld [vmem:[#allocation6 + $0x88] sm:$0xff]
    %v1603 = vld [vmem:[#allocation6 + $0x90] sm:$0xff]
    %v1604 = vld [vmem:[#allocation6 + $0x98] sm:$0xff]
    %v1605 = vld [vmem:[#allocation6 + $0xa0] sm:$0xff]
    %v1606 = vld [vmem:[#allocation6 + $0xa8] sm:$0xff]
    %v1607 = vld [vmem:[#allocation6 + $0xb0] sm:$0xff]
    %v1608 = vld [vmem:[#allocation6 + $0xb8] sm:$0xff]
    %v1609 = vld [vmem:[#allocation6 + $0xc0] sm:$0xff]
    %v1610 = vld [vmem:[#allocation6 + $0xc8] sm:$0xff]
    %v1611 = vld [vmem:[#allocation6 + $0xd0] sm:$0xff]
    %v1612 = vld [vmem:[#allocation6 + $0xd8] sm:$0xff]
    %v1613 = vld [vmem:[#allocation6 + $0xe0] sm:$0xff]
    %v1614 = vld [vmem:[#allocation6 + $0xe8] sm:$0xff]
    %v1615 = vld [vmem:[#allocation6 + $0xf0] sm:$0xff]
    %v1616 = vld [vmem:[#allocation6 + $0xf8] sm:$0xff]
    %v1617 = vld [vmem:[#allocation6 + $0x100] sm:$0xff]
    %v1618 = vld [vmem:[#allocation6 + $0x108] sm:$0xff]
    %v1619 = vld [vmem:[#allocation6 + $0x110] sm:$0xff]
    %v1620 = vld [vmem:[#allocation6 + $0x118] sm:$0xff]
    %v1621 = vld [vmem:[#allocation6 + $0x120] sm:$0xff]
    %v1622 = vld [vmem:[#allocation6 + $0x128] sm:$0xff]
    %v1623 = vld [vmem:[#allocation6 + $0x130] sm:$0xff]
    %v1624 = vld [vmem:[#allocation6 + $0x138] sm:$0xff]
    %v1625 = vld [vmem:[#allocation6 + $0x140] sm:$0xff]
    %v1626 = vld [vmem:[#allocation6 + $0x148] sm:$0xff]
    %v1627 = vld [vmem:[#allocation6 + $0x150] sm:$0xff]
    %v1628 = vld [vmem:[#allocation6 + $0x158] sm:$0xff]
    %v1629 = vld [vmem:[#allocation6 + $0x160] sm:$0xff]
    %v1630 = vld [vmem:[#allocation6 + $0x168] sm:$0xff]
    %v1631 = vld [vmem:[#allocation6 + $0x170] sm:$0xff]
    %v1632 = vld [vmem:[#allocation6 + $0x178] sm:$0xff]
    %v1633 = vld [vmem:[#allocation6 + $0x180] sm:$0xff]
    %v1634 = vld [vmem:[#allocation6 + $0x188] sm:$0xff]
    %v1635 = vld [vmem:[#allocation6 + $0x190] sm:$0xff]
    %v1636 = vld [vmem:[#allocation6 + $0x198] sm:$0xff]
    %v1637 = vld [vmem:[#allocation6 + $0x1a0] sm:$0xff]
    %v1638 = vld [vmem:[#allocation6 + $0x1a8] sm:$0xff]
    %v1639 = vld [vmem:[#allocation6 + $0x1b0] sm:$0xff]
    %v1640 = vld [vmem:[#allocation6 + $0x1b8] sm:$0xff]
    %v1641 = vld [vmem:[#allocation6 + $0x1c0] sm:$0xff]
    %v1642 = vld [vmem:[#allocation6 + $0x1c8] sm:$0xff]
    %v1643 = vld [vmem:[#allocation6 + $0x1d0] sm:$0xff]
    %v1644 = vld [vmem:[#allocation6 + $0x1d8] sm:$0xff]
    %v1645 = vld [vmem:[#allocation6 + $0x1e0] sm:$0xff]
    %v1646 = vld [vmem:[#allocation6 + $0x1e8] sm:$0xff]
    %v1647 = vld [vmem:[#allocation6 + $0x1f0] sm:$0xff]
    %v1648 = vld [vmem:[#allocation6 + $0x1f8] sm:$0xff]
    %v1649 = vld [vmem:[#allocation6 + $0x200] sm:$0xff]
    %v1650 = vld [vmem:[#allocation6 + $0x208] sm:$0xff]
    %v1651 = vld [vmem:[#allocation6 + $0x210] sm:$0xff]
    %v1652 = vld [vmem:[#allocation6 + $0x218] sm:$0xff]
    %v1653 = vld [vmem:[#allocation6 + $0x220] sm:$0xff]
    %v1654 = vld [vmem:[#allocation6 + $0x228] sm:$0xff]
    %v1655 = vld [vmem:[#allocation6 + $0x230] sm:$0xff]
    %v1656 = vld [vmem:[#allocation6 + $0x238] sm:$0xff]
    %v1657 = vld [vmem:[#allocation6 + $0x240] sm:$0xff]
    %v1658 = vld [vmem:[#allocation6 + $0x248] sm:$0xff]
    %v1659 = vld [vmem:[#allocation6 + $0x250] sm:$0xff]
    %v1660 = vld [vmem:[#allocation6 + $0x258] sm:$0xff]
    %v1661 = vld [vmem:[#allocation6 + $0x260] sm:$0xff]
    %v1662 = vld [vmem:[#allocation6 + $0x268] sm:$0xff]
    %v1663 = vld [vmem:[#allocation6 + $0x270] sm:$0xff]
    %v1664 = vld [vmem:[#allocation6 + $0x278] sm:$0xff]
    %v1665 = vld [vmem:[#allocation6 + $0x280] sm:$0xff]
    %v1666 = vld [vmem:[#allocation6 + $0x288] sm:$0xff]
    %v1667 = vld [vmem:[#allocation6 + $0x290] sm:$0xff]
    %v1668 = vld [vmem:[#allocation6 + $0x298] sm:$0xff]
    %v1669 = vld [vmem:[#allocation6 + $0x2a0] sm:$0xff]
    %v1670 = vld [vmem:[#allocation6 + $0x2a8] sm:$0xff]
    %v1671 = vld [vmem:[#allocation6 + $0x2b0] sm:$0xff]
    %v1672 = vld [vmem:[#allocation6 + $0x2b8] sm:$0xff]
    %v1673 = vld [vmem:[#allocation6 + $0x2c0] sm:$0xff]
    %v1674 = vld [vmem:[#allocation6 + $0x2c8] sm:$0xff]
    %v1675 = vld [vmem:[#allocation6 + $0x2d0] sm:$0xff]
    %v1676 = vld [vmem:[#allocation6 + $0x2d8] sm:$0xff]
    %v1677 = vld [vmem:[#allocation6 + $0x2e0] sm:$0xff]
    %v1678 = vld [vmem:[#allocation6 + $0x2e8] sm:$0xff]
    %v1679 = vld [vmem:[#allocation6 + $0x2f0] sm:$0xff]
    %v1680 = vld [vmem:[#allocation6 + $0x2f8] sm:$0xff]
    %v1681 = vld [vmem:[#allocation6 + $0x300] sm:$0xff]
    %v1682 = vld [vmem:[#allocation6 + $0x308] sm:$0xff]
    %v1683 = vld [vmem:[#allocation6 + $0x310] sm:$0xff]
    %v1684 = vld [vmem:[#allocation6 + $0x318] sm:$0xff]
    %v1685 = vld [vmem:[#allocation6 + $0x320] sm:$0xff]
    %v1686 = vld [vmem:[#allocation6 + $0x328] sm:$0xff]
    %v1687 = vld [vmem:[#allocation6 + $0x330] sm:$0xff]
    %v1688 = vld [vmem:[#allocation6 + $0x338] sm:$0xff]
    %v1689 = vld [vmem:[#allocation6 + $0x340] sm:$0xff]
    %v1690 = vld [vmem:[#allocation6 + $0x348] sm:$0xff]
    %v1691 = vld [vmem:[#allocation6 + $0x350] sm:$0xff]
    %v1692 = vld [vmem:[#allocation6 + $0x358] sm:$0xff]
    %v1693 = vld [vmem:[#allocation6 + $0x360] sm:$0xff]
    %v1694 = vld [vmem:[#allocation6 + $0x368] sm:$0xff]
    %v1695 = vld [vmem:[#allocation6 + $0x370] sm:$0xff]
    %v1696 = vld [vmem:[#allocation6 + $0x378] sm:$0xff]
    %v1697 = vld [vmem:[#allocation6 + $0x380] sm:$0xff]
    %v1698 = vld [vmem:[#allocation6 + $0x388] sm:$0xff]
    %v1699 = vld [vmem:[#allocation6 + $0x390] sm:$0xff]
    %v1700 = vld [vmem:[#allocation6 + $0x398] sm:$0xff]
    %v1701 = vld [vmem:[#allocation6 + $0x3a0] sm:$0xff]
    %v1702 = vld [vmem:[#allocation6 + $0x3a8] sm:$0xff]
    %v1703 = vld [vmem:[#allocation6 + $0x3b0] sm:$0xff]
    %v1704 = vld [vmem:[#allocation6 + $0x3b8] sm:$0xff]
    %v1705 = vld [vmem:[#allocation6 + $0x3c0] sm:$0xff]
    %v1706 = vld [vmem:[#allocation6 + $0x3c8] sm:$0xff]
    %v1707 = vld [vmem:[#allocation6 + $0x3d0] sm:$0xff]
    %v1708 = vld [vmem:[#allocation6 + $0x3d8] sm:$0xff]
    %v1709 = vld [vmem:[#allocation6 + $0x3e0] sm:$0xff]
    %v1710 = vld [vmem:[#allocation6 + $0x3e8] sm:$0xff]
    %v1711 = vld [vmem:[#allocation6 + $0x3f0] sm:$0xff]
    %v1712 = vld [vmem:[#allocation6 + $0x3f8] sm:$0xff]
    %v1713 = vld [vmem:[#allocation6 + $0x400] sm:$0xff]
    %v1714 = vld [vmem:[#allocation6 + $0x408] sm:$0xff]
    %v1715 = vld [vmem:[#allocation6 + $0x410] sm:$0xff]
    %v1716 = vld [vmem:[#allocation6 + $0x418] sm:$0xff]
    %v1717 = vld [vmem:[#allocation6 + $0x420] sm:$0xff]
    %v1718 = vld [vmem:[#allocation6 + $0x428] sm:$0xff]
    %v1719 = vld [vmem:[#allocation6 + $0x430] sm:$0xff]
    %v1720 = vld [vmem:[#allocation6 + $0x438] sm:$0xff]
    %v1721 = vld [vmem:[#allocation6 + $0x440] sm:$0xff]
    %v1722 = vld [vmem:[#allocation6 + $0x448] sm:$0xff]
    %v1723 = vld [vmem:[#allocation6 + $0x450] sm:$0xff]
    %v1724 = vld [vmem:[#allocation6 + $0x458] sm:$0xff]
    %v1725 = vld [vmem:[#allocation6 + $0x460] sm:$0xff]
    %v1726 = vld [vmem:[#allocation6 + $0x468] sm:$0xff]
    %v1727 = vld [vmem:[#allocation6 + $0x470] sm:$0xff]
    %v1728 = vld [vmem:[#allocation6 + $0x478] sm:$0xff]
    %v1729 = vld [vmem:[#allocation6 + $0x480] sm:$0xff]
    %v1730 = vld [vmem:[#allocation6 + $0x488] sm:$0xff]
    %v1731 = vld [vmem:[#allocation6 + $0x490] sm:$0xff]
    %v1732 = vld [vmem:[#allocation6 + $0x498] sm:$0xff]
    %v1733 = vld [vmem:[#allocation6 + $0x4a0] sm:$0xff]
    %v1734 = vld [vmem:[#allocation6 + $0x4a8] sm:$0xff]
    %v1735 = vld [vmem:[#allocation6 + $0x4b0] sm:$0xff]
    %v1736 = vld [vmem:[#allocation6 + $0x4b8] sm:$0xff]
    %v1737 = vld [vmem:[#allocation6 + $0x4c0] sm:$0xff]
    %v1738 = vld [vmem:[#allocation6 + $0x4c8] sm:$0xff]
    %v1739 = vld [vmem:[#allocation6 + $0x4d0] sm:$0xff]
    %v1740 = vld [vmem:[#allocation6 + $0x4d8] sm:$0xff]
    %v1741 = vld [vmem:[#allocation6 + $0x4e0] sm:$0xff]
    %v1742 = vld [vmem:[#allocation6 + $0x4e8] sm:$0xff]
    %v1743 = vld [vmem:[#allocation6 + $0x4f0] sm:$0xff]
    %v1744 = vld [vmem:[#allocation6 + $0x4f8] sm:$0xff]
    %v1745 = vld [vmem:[#allocation6 + $0x500] sm:$0xff]
    %v1746 = vld [vmem:[#allocation6 + $0x508] sm:$0xff]
    %v1747 = vld [vmem:[#allocation6 + $0x510] sm:$0xff]
    %v1748 = vld [vmem:[#allocation6 + $0x518] sm:$0xff]
    %v1749 = vld [vmem:[#allocation6 + $0x520] sm:$0xff]
    %v1750 = vld [vmem:[#allocation6 + $0x528] sm:$0xff]
    %v1751 = vld [vmem:[#allocation6 + $0x530] sm:$0xff]
    %v1752 = vld [vmem:[#allocation6 + $0x538] sm:$0xff]
    %v1753 = vld [vmem:[#allocation6 + $0x540] sm:$0xff]
    %v1754 = vld [vmem:[#allocation6 + $0x548] sm:$0xff]
    %v1755 = vld [vmem:[#allocation6 + $0x550] sm:$0xff]
    %v1756 = vld [vmem:[#allocation6 + $0x558] sm:$0xff]
    %v1757 = vld [vmem:[#allocation6 + $0x560] sm:$0xff]
    %v1758 = vld [vmem:[#allocation6 + $0x568] sm:$0xff]
    %v1759 = vld [vmem:[#allocation6 + $0x570] sm:$0xff]
    %v1760 = vld [vmem:[#allocation6 + $0x578] sm:$0xff]
    %v1761 = vld [vmem:[#allocation6 + $0x580] sm:$0xff]
    %v1762 = vld [vmem:[#allocation6 + $0x588] sm:$0xff]
    %v1763 = vld [vmem:[#allocation6 + $0x590] sm:$0xff]
    %v1764 = vld [vmem:[#allocation6 + $0x598] sm:$0xff]
    %v1765 = vld [vmem:[#allocation6 + $0x5a0] sm:$0xff]
    %v1766 = vld [vmem:[#allocation6 + $0x5a8] sm:$0xff]
    %v1767 = vld [vmem:[#allocation6 + $0x5b0] sm:$0xff]
    %v1768 = vld [vmem:[#allocation6 + $0x5b8] sm:$0xff]
    %v1769 = vld [vmem:[#allocation6 + $0x5c0] sm:$0xff]
    %v1770 = vld [vmem:[#allocation6 + $0x5c8] sm:$0xff]
    %v1771 = vld [vmem:[#allocation6 + $0x5d0] sm:$0xff]
    %v1772 = vld [vmem:[#allocation6 + $0x5d8] sm:$0xff]
    %v1773 = vld [vmem:[#allocation6 + $0x5e0] sm:$0xff]
    %v1774 = vld [vmem:[#allocation6 + $0x5e8] sm:$0xff]
    %v1775 = vld [vmem:[#allocation6 + $0x5f0] sm:$0xff]
    %v1776 = vld [vmem:[#allocation6 + $0x5f8] sm:$0xff]
    %v1777 = vld [vmem:[#allocation6 + $0x600] sm:$0xff]
    %v1778 = vld [vmem:[#allocation6 + $0x608] sm:$0xff]
    %v1779 = vld [vmem:[#allocation6 + $0x610] sm:$0xff]
    %v1780 = vld [vmem:[#allocation6 + $0x618] sm:$0xff]
    %v1781 = vld [vmem:[#allocation6 + $0x620] sm:$0xff]
    %v1782 = vld [vmem:[#allocation6 + $0x628] sm:$0xff]
    %v1783 = vld [vmem:[#allocation6 + $0x630] sm:$0xff]
    %v1784 = vld [vmem:[#allocation6 + $0x638] sm:$0xff]
    %v1785 = vld [vmem:[#allocation6 + $0x640] sm:$0xff]
    %v1786 = vld [vmem:[#allocation6 + $0x648] sm:$0xff]
    %v1787 = vld [vmem:[#allocation6 + $0x650] sm:$0xff]
    %v1788 = vld [vmem:[#allocation6 + $0x658] sm:$0xff]
    %v1789 = vld [vmem:[#allocation6 + $0x660] sm:$0xff]
    %v1790 = vld [vmem:[#allocation6 + $0x668] sm:$0xff]
    %v1791 = vld [vmem:[#allocation6 + $0x670] sm:$0xff]
    %v1792 = vld [vmem:[#allocation6 + $0x678] sm:$0xff]
    %v1793 = vld [vmem:[#allocation6 + $0x680] sm:$0xff]
    %v1794 = vld [vmem:[#allocation6 + $0x688] sm:$0xff]
    %v1795 = vld [vmem:[#allocation6 + $0x690] sm:$0xff]
    %v1796 = vld [vmem:[#allocation6 + $0x698] sm:$0xff]
    %v1797 = vld [vmem:[#allocation6 + $0x6a0] sm:$0xff]
    %v1798 = vld [vmem:[#allocation6 + $0x6a8] sm:$0xff]
    %v1799 = vld [vmem:[#allocation6 + $0x6b0] sm:$0xff]
    %v1800 = vld [vmem:[#allocation6 + $0x6b8] sm:$0xff]
    %v1801 = vld [vmem:[#allocation6 + $0x6c0] sm:$0xff]
    %v1802 = vld [vmem:[#allocation6 + $0x6c8] sm:$0xff]
    %v1803 = vld [vmem:[#allocation6 + $0x6d0] sm:$0xff]
    %v1804 = vld [vmem:[#allocation6 + $0x6d8] sm:$0xff]
    %v1805 = vld [vmem:[#allocation6 + $0x6e0] sm:$0xff]
    %v1806 = vld [vmem:[#allocation6 + $0x6e8] sm:$0xff]
    %v1807 = vld [vmem:[#allocation6 + $0x6f0] sm:$0xff]
    %v1808 = vld [vmem:[#allocation6 + $0x6f8] sm:$0xff]
    %v1809 = vld [vmem:[#allocation6 + $0x700] sm:$0xff]
    %v1810 = vld [vmem:[#allocation6 + $0x708] sm:$0xff]
    %v1811 = vld [vmem:[#allocation6 + $0x710] sm:$0xff]
    %v1812 = vld [vmem:[#allocation6 + $0x718] sm:$0xff]
    %v1813 = vld [vmem:[#allocation6 + $0x720] sm:$0xff]
    %v1814 = vld [vmem:[#allocation6 + $0x728] sm:$0xff]
    %v1815 = vld [vmem:[#allocation6 + $0x730] sm:$0xff]
    %v1816 = vld [vmem:[#allocation6 + $0x738] sm:$0xff]
    %v1817 = vld [vmem:[#allocation6 + $0x740] sm:$0xff]
    %v1818 = vld [vmem:[#allocation6 + $0x748] sm:$0xff]
    %v1819 = vld [vmem:[#allocation6 + $0x750] sm:$0xff]
    %v1820 = vld [vmem:[#allocation6 + $0x758] sm:$0xff]
    %v1821 = vld [vmem:[#allocation6 + $0x760] sm:$0xff]
    %v1822 = vld [vmem:[#allocation6 + $0x768] sm:$0xff]
    %v1823 = vld [vmem:[#allocation6 + $0x770] sm:$0xff]
    %v1824 = vld [vmem:[#allocation6 + $0x778] sm:$0xff]
    %v1825 = vld [vmem:[#allocation6 + $0x780] sm:$0xff]
    %v1826 = vld [vmem:[#allocation6 + $0x788] sm:$0xff]
    %v1827 = vld [vmem:[#allocation6 + $0x790] sm:$0xff]
    %v1828 = vld [vmem:[#allocation6 + $0x798] sm:$0xff]
    %v1829 = vld [vmem:[#allocation6 + $0x7a0] sm:$0xff]
    %v1830 = vld [vmem:[#allocation6 + $0x7a8] sm:$0xff]
    %v1831 = vld [vmem:[#allocation6 + $0x7b0] sm:$0xff]
    %v1832 = vld [vmem:[#allocation6 + $0x7b8] sm:$0xff]
    %v1833 = vld [vmem:[#allocation6 + $0x7c0] sm:$0xff]
    %v1834 = vld [vmem:[#allocation6 + $0x7c8] sm:$0xff]
    %v1835 = vld [vmem:[#allocation6 + $0x7d0] sm:$0xff]
    %v1836 = vld [vmem:[#allocation6 + $0x7d8] sm:$0xff]
    %v1837 = vld [vmem:[#allocation6 + $0x7e0] sm:$0xff]
    %v1838 = vld [vmem:[#allocation6 + $0x7e8] sm:$0xff]
    %v1839 = vld [vmem:[#allocation6 + $0x7f0] sm:$0xff]
    %v1840 = vld [vmem:[#allocation6 + $0x7f8] sm:$0xff]
    %v1841 = vld [vmem:[#allocation6 + $0x800] sm:$0xff]
    %v1842 = vld [vmem:[#allocation6 + $0x808] sm:$0xff]
    %v1843 = vld [vmem:[#allocation6 + $0x810] sm:$0xff]
    %v1844 = vld [vmem:[#allocation6 + $0x818] sm:$0xff]
    %v1845 = vld [vmem:[#allocation6 + $0x820] sm:$0xff]
    %v1846 = vld [vmem:[#allocation6 + $0x828] sm:$0xff]
    %v1847 = vld [vmem:[#allocation6 + $0x830] sm:$0xff]
    %v1848 = vld [vmem:[#allocation6 + $0x838] sm:$0xff]
    %v1849 = vld [vmem:[#allocation6 + $0x840] sm:$0xff]
    %v1850 = vld [vmem:[#allocation6 + $0x848] sm:$0xff]
    %v1851 = vld [vmem:[#allocation6 + $0x850] sm:$0xff]
    %v1852 = vld [vmem:[#allocation6 + $0x858] sm:$0xff]
    %v1853 = vld [vmem:[#allocation6 + $0x860] sm:$0xff]
    %v1854 = vld [vmem:[#allocation6 + $0x868] sm:$0xff]
    %v1855 = vld [vmem:[#allocation6 + $0x870] sm:$0xff]
    %v1856 = vld [vmem:[#allocation6 + $0x878] sm:$0xff]
    %v1857 = vld [vmem:[#allocation6 + $0x880] sm:$0xff]
    %v1858 = vld [vmem:[#allocation6 + $0x888] sm:$0xff]
    %v1859 = vld [vmem:[#allocation6 + $0x890] sm:$0xff]
    %v1860 = vld [vmem:[#allocation6 + $0x898] sm:$0xff]
    %v1861 = vld [vmem:[#allocation6 + $0x8a0] sm:$0xff]
    %v1862 = vld [vmem:[#allocation6 + $0x8a8] sm:$0xff]
    %v1863 = vld [vmem:[#allocation6 + $0x8b0] sm:$0xff]
    %v1864 = vld [vmem:[#allocation6 + $0x8b8] sm:$0xff]
    %v1865 = vld [vmem:[#allocation6 + $0x8c0] sm:$0xff]
    %v1866 = vld [vmem:[#allocation6 + $0x8c8] sm:$0xff]
    %v1867 = vld [vmem:[#allocation6 + $0x8d0] sm:$0xff]
    %v1868 = vld [vmem:[#allocation6 + $0x8d8] sm:$0xff]
    %v1869 = vld [vmem:[#allocation6 + $0x8e0] sm:$0xff]
    %v1870 = vld [vmem:[#allocation6 + $0x8e8] sm:$0xff]
    %v1871 = vld [vmem:[#allocation6 + $0x8f0] sm:$0xff]
    %v1872 = vld [vmem:[#allocation6 + $0x8f8] sm:$0xff]
    %v1873 = vld [vmem:[#allocation6 + $0x900] sm:$0xff]
    %v1874 = vld [vmem:[#allocation6 + $0x908] sm:$0xff]
    %v1875 = vld [vmem:[#allocation6 + $0x910] sm:$0xff]
    %v1876 = vld [vmem:[#allocation6 + $0x918] sm:$0xff]
    %v1877 = vld [vmem:[#allocation6 + $0x920] sm:$0xff]
    %v1878 = vld [vmem:[#allocation6 + $0x928] sm:$0xff]
    %v1879 = vld [vmem:[#allocation6 + $0x930] sm:$0xff]
    %v1880 = vld [vmem:[#allocation6 + $0x938] sm:$0xff]
    %v1881 = vld [vmem:[#allocation6 + $0x940] sm:$0xff]
    %v1882 = vld [vmem:[#allocation6 + $0x948] sm:$0xff]
    %v1883 = vld [vmem:[#allocation6 + $0x950] sm:$0xff]
    %v1884 = vld [vmem:[#allocation6 + $0x958] sm:$0xff]
    %v1885 = vld [vmem:[#allocation6 + $0x960] sm:$0xff]
    %v1886 = vld [vmem:[#allocation6 + $0x968] sm:$0xff]
    %v1887 = vld [vmem:[#allocation6 + $0x970] sm:$0xff]
    %v1888 = vld [vmem:[#allocation6 + $0x978] sm:$0xff]
    %v1889 = vld [vmem:[#allocation6 + $0x980] sm:$0xff]
    %v1890 = vld [vmem:[#allocation6 + $0x988] sm:$0xff]
    %v1891 = vld [vmem:[#allocation6 + $0x990] sm:$0xff]
    %v1892 = vld [vmem:[#allocation6 + $0x998] sm:$0xff]
    %v1893 = vld [vmem:[#allocation6 + $0x9a0] sm:$0xff]
    %v1894 = vld [vmem:[#allocation6 + $0x9a8] sm:$0xff]
    %v1895 = vld [vmem:[#allocation6 + $0x9b0] sm:$0xff]
    %v1896 = vld [vmem:[#allocation6 + $0x9b8] sm:$0xff]
    %v1897 = vld [vmem:[#allocation6 + $0x9c0] sm:$0xff]
    %v1898 = vld [vmem:[#allocation6 + $0x9c8] sm:$0xff]
    %v1899 = vld [vmem:[#allocation6 + $0x9d0] sm:$0xff]
    %v1900 = vld [vmem:[#allocation6 + $0x9d8] sm:$0xff]
    %v1901 = vld [vmem:[#allocation6 + $0x9e0] sm:$0xff]
    %v1902 = vld [vmem:[#allocation6 + $0x9e8] sm:$0xff]
    %v1903 = vld [vmem:[#allocation6 + $0x9f0] sm:$0xff]
    %v1904 = vld [vmem:[#allocation6 + $0x9f8] sm:$0xff]
    %v1905 = vld [vmem:[#allocation6 + $0xa00] sm:$0xff]
    %v1906 = vld [vmem:[#allocation6 + $0xa08] sm:$0xff]
    %v1907 = vld [vmem:[#allocation6 + $0xa10] sm:$0xff]
    %v1908 = vld [vmem:[#allocation6 + $0xa18] sm:$0xff]
    %v1909 = vld [vmem:[#allocation6 + $0xa20] sm:$0xff]
    %v1910 = vld [vmem:[#allocation6 + $0xa28] sm:$0xff]
    %v1911 = vld [vmem:[#allocation6 + $0xa30] sm:$0xff]
    %v1912 = vld [vmem:[#allocation6 + $0xa38] sm:$0xff]
    %v1913 = vld [vmem:[#allocation6 + $0xa40] sm:$0xff]
    %v1914 = vld [vmem:[#allocation6 + $0xa48] sm:$0xff]
    %v1915 = vld [vmem:[#allocation6 + $0xa50] sm:$0xff]
    %v1916 = vld [vmem:[#allocation6 + $0xa58] sm:$0xff]
    %v1917 = vld [vmem:[#allocation6 + $0xa60] sm:$0xff]
    %v1918 = vld [vmem:[#allocation6 + $0xa68] sm:$0xff]
    %v1919 = vld [vmem:[#allocation6 + $0xa70] sm:$0xff]
    %v1920 = vld [vmem:[#allocation6 + $0xa78] sm:$0xff]
    %v1921 = vld [vmem:[#allocation6 + $0xa80] sm:$0xff]
    %v1922 = vld [vmem:[#allocation6 + $0xa88] sm:$0xff]
    %v1923 = vld [vmem:[#allocation6 + $0xa90] sm:$0xff]
    %v1924 = vld [vmem:[#allocation6 + $0xa98] sm:$0xff]
    %v1925 = vld [vmem:[#allocation6 + $0xaa0] sm:$0xff]
    %v1926 = vld [vmem:[#allocation6 + $0xaa8] sm:$0xff]
    %v1927 = vld [vmem:[#allocation6 + $0xab0] sm:$0xff]
    %v1928 = vld [vmem:[#allocation6 + $0xab8] sm:$0xff]
    %v1929 = vld [vmem:[#allocation6 + $0xac0] sm:$0xff]
    %v1930 = vld [vmem:[#allocation6 + $0xac8] sm:$0xff]
    %v1931 = vld [vmem:[#allocation6 + $0xad0] sm:$0xff]
    %v1932 = vld [vmem:[#allocation6 + $0xad8] sm:$0xff]
    %v1933 = vld [vmem:[#allocation6 + $0xae0] sm:$0xff]
    %v1934 = vld [vmem:[#allocation6 + $0xae8] sm:$0xff]
    %v1935 = vld [vmem:[#allocation6 + $0xaf0] sm:$0xff]
    %v1936 = vld [vmem:[#allocation6 + $0xaf8] sm:$0xff]
    %v1937 = vld [vmem:[#allocation6 + $0xb00] sm:$0xff]
    %v1938 = vld [vmem:[#allocation6 + $0xb08] sm:$0xff]
    %v1939 = vld [vmem:[#allocation6 + $0xb10] sm:$0xff]
    %v1940 = vld [vmem:[#allocation6 + $0xb18] sm:$0xff]
    %v1941 = vld [vmem:[#allocation6 + $0xb20] sm:$0xff]
    %v1942 = vld [vmem:[#allocation6 + $0xb28] sm:$0xff]
    %v1943 = vld [vmem:[#allocation6 + $0xb30] sm:$0xff]
    %v1944 = vld [vmem:[#allocation6 + $0xb38] sm:$0xff]
    %v1945 = vld [vmem:[#allocation6 + $0xb40] sm:$0xff]
    %v1946 = vld [vmem:[#allocation6 + $0xb48] sm:$0xff]
    %v1947 = vld [vmem:[#allocation6 + $0xb50] sm:$0xff]
    %v1948 = vld [vmem:[#allocation6 + $0xb58] sm:$0xff]
    %v1949 = vld [vmem:[#allocation6 + $0xb60] sm:$0xff]
    %v1950 = vld [vmem:[#allocation6 + $0xb68] sm:$0xff]
    %v1951 = vld [vmem:[#allocation6 + $0xb70] sm:$0xff]
    %v1952 = vld [vmem:[#allocation6 + $0xb78] sm:$0xff]
    %v1953 = vld [vmem:[#allocation6 + $0xb80] sm:$0xff]
    %v1954 = vld [vmem:[#allocation6 + $0xb88] sm:$0xff]
    %v1955 = vld [vmem:[#allocation6 + $0xb90] sm:$0xff]
    %v1956 = vld [vmem:[#allocation6 + $0xb98] sm:$0xff]
    %v1957 = vld [vmem:[#allocation6 + $0xba0] sm:$0xff]
    %v1958 = vld [vmem:[#allocation6 + $0xba8] sm:$0xff]
    %v1959 = vld [vmem:[#allocation6 + $0xbb0] sm:$0xff]
    %v1960 = vld [vmem:[#allocation6 + $0xbb8] sm:$0xff]
    %v1961 = vld [vmem:[#allocation6 + $0xbc0] sm:$0xff]
    %v1962 = vld [vmem:[#allocation6 + $0xbc8] sm:$0xff]
    %v1963 = vld [vmem:[#allocation6 + $0xbd0] sm:$0xff]
    %v1964 = vld [vmem:[#allocation6 + $0xbd8] sm:$0xff]
    %v1965 = vld [vmem:[#allocation6 + $0xbe0] sm:$0xff]
    %v1966 = vld [vmem:[#allocation6 + $0xbe8] sm:$0xff]
    %v1967 = vld [vmem:[#allocation6 + $0xbf0] sm:$0xff]
    %v1968 = vld [vmem:[#allocation6 + $0xbf8] sm:$0xff]
    %v1969 = vld [vmem:[#allocation6 + $0xc00] sm:$0xff]
    %v1970 = vld [vmem:[#allocation6 + $0xc08] sm:$0xff]
    %v1971 = vld [vmem:[#allocation6 + $0xc10] sm:$0xff]
    %v1972 = vld [vmem:[#allocation6 + $0xc18] sm:$0xff]
    %v1973 = vld [vmem:[#allocation6 + $0xc20] sm:$0xff]
    %v1974 = vld [vmem:[#allocation6 + $0xc28] sm:$0xff]
    %v1975 = vld [vmem:[#allocation6 + $0xc30] sm:$0xff]
    %v1976 = vld [vmem:[#allocation6 + $0xc38] sm:$0xff]
    %v1977 = vld [vmem:[#allocation6 + $0xc40] sm:$0xff]
    %v1978 = vld [vmem:[#allocation6 + $0xc48] sm:$0xff]
    %v1979 = vld [vmem:[#allocation6 + $0xc50] sm:$0xff]
    %v1980 = vld [vmem:[#allocation6 + $0xc58] sm:$0xff]
    %v1981 = vld [vmem:[#allocation6 + $0xc60] sm:$0xff]
    %v1982 = vld [vmem:[#allocation6 + $0xc68] sm:$0xff]
    %v1983 = vld [vmem:[#allocation6 + $0xc70] sm:$0xff]
    %v1984 = vld [vmem:[#allocation6 + $0xc78] sm:$0xff]
    %v1985 = vld [vmem:[#allocation6 + $0xc80] sm:$0xff]
    %v1986 = vld [vmem:[#allocation6 + $0xc88] sm:$0xff]
    %v1987 = vld [vmem:[#allocation6 + $0xc90] sm:$0xff]
    %v1988 = vld [vmem:[#allocation6 + $0xc98] sm:$0xff]
    %v1989 = vld [vmem:[#allocation6 + $0xca0] sm:$0xff]
    %v1990 = vld [vmem:[#allocation6 + $0xca8] sm:$0xff]
    %v1991 = vld [vmem:[#allocation6 + $0xcb0] sm:$0xff]
    %v1992 = vld [vmem:[#allocation6 + $0xcb8] sm:$0xff]
    %v1993 = vld [vmem:[#allocation6 + $0xcc0] sm:$0xff]
    %v1994 = vld [vmem:[#allocation6 + $0xcc8] sm:$0xff]
    %v1995 = vld [vmem:[#allocation6 + $0xcd0] sm:$0xff]
    %v1996 = vld [vmem:[#allocation6 + $0xcd8] sm:$0xff]
    %v1997 = vld [vmem:[#allocation6 + $0xce0] sm:$0xff]
    %v1998 = vld [vmem:[#allocation6 + $0xce8] sm:$0xff]
    %v1999 = vld [vmem:[#allocation6 + $0xcf0] sm:$0xff]
    %v2000 = vld [vmem:[#allocation6 + $0xcf8] sm:$0xff]
    %v2001 = vld [vmem:[#allocation6 + $0xd00] sm:$0xff]
    %v2002 = vld [vmem:[#allocation6 + $0xd08] sm:$0xff]
    %v2003 = vld [vmem:[#allocation6 + $0xd10] sm:$0xff]
    %v2004 = vld [vmem:[#allocation6 + $0xd18] sm:$0xff]
    %v2005 = vld [vmem:[#allocation6 + $0xd20] sm:$0xff]
    %v2006 = vld [vmem:[#allocation6 + $0xd28] sm:$0xff]
    %v2007 = vld [vmem:[#allocation6 + $0xd30] sm:$0xff]
    %v2008 = vld [vmem:[#allocation6 + $0xd38] sm:$0xff]
    %v2009 = vld [vmem:[#allocation6 + $0xd40] sm:$0xff]
    %v2010 = vld [vmem:[#allocation6 + $0xd48] sm:$0xff]
    %v2011 = vld [vmem:[#allocation6 + $0xd50] sm:$0xff]
    %v2012 = vld [vmem:[#allocation6 + $0xd58] sm:$0xff]
    %v2013 = vld [vmem:[#allocation6 + $0xd60] sm:$0xff]
    %v2014 = vld [vmem:[#allocation6 + $0xd68] sm:$0xff]
    %v2015 = vld [vmem:[#allocation6 + $0xd70] sm:$0xff]
    %v2016 = vld [vmem:[#allocation6 + $0xd78] sm:$0xff]
    %v2017 = vld [vmem:[#allocation6 + $0xd80] sm:$0xff]
    %v2018 = vld [vmem:[#allocation6 + $0xd88] sm:$0xff]
    %v2019 = vld [vmem:[#allocation6 + $0xd90] sm:$0xff]
    %v2020 = vld [vmem:[#allocation6 + $0xd98] sm:$0xff]
    %v2021 = vld [vmem:[#allocation6 + $0xda0] sm:$0xff]
    %v2022 = vld [vmem:[#allocation6 + $0xda8] sm:$0xff]
    %v2023 = vld [vmem:[#allocation6 + $0xdb0] sm:$0xff]
    %v2024 = vld [vmem:[#allocation6 + $0xdb8] sm:$0xff]
    %v2025 = vld [vmem:[#allocation6 + $0xdc0] sm:$0xff]
    %v2026 = vld [vmem:[#allocation6 + $0xdc8] sm:$0xff]
    %v2027 = vld [vmem:[#allocation6 + $0xdd0] sm:$0xff]
    %v2028 = vld [vmem:[#allocation6 + $0xdd8] sm:$0xff]
    %v2029 = vld [vmem:[#allocation6 + $0xde0] sm:$0xff]
    %v2030 = vld [vmem:[#allocation6 + $0xde8] sm:$0xff]
    %v2031 = vld [vmem:[#allocation6 + $0xdf0] sm:$0xff]
    %v2032 = vld [vmem:[#allocation6 + $0xdf8] sm:$0xff]
    %v2033 = vld [vmem:[#allocation6 + $0xe00] sm:$0xff]
    %v2034 = vld [vmem:[#allocation6 + $0xe08] sm:$0xff]
    %v2035 = vld [vmem:[#allocation6 + $0xe10] sm:$0xff]
    %v2036 = vld [vmem:[#allocation6 + $0xe18] sm:$0xff]
    %v2037 = vld [vmem:[#allocation6 + $0xe20] sm:$0xff]
    %v2038 = vld [vmem:[#allocation6 + $0xe28] sm:$0xff]
    %v2039 = vld [vmem:[#allocation6 + $0xe30] sm:$0xff]
    %v2040 = vld [vmem:[#allocation6 + $0xe38] sm:$0xff]
    %v2041 = vld [vmem:[#allocation6 + $0xe40] sm:$0xff]
    %v2042 = vld [vmem:[#allocation6 + $0xe48] sm:$0xff]
    %v2043 = vld [vmem:[#allocation6 + $0xe50] sm:$0xff]
    %v2044 = vld [vmem:[#allocation6 + $0xe58] sm:$0xff]
    %v2045 = vld [vmem:[#allocation6 + $0xe60] sm:$0xff]
    %v2046 = vld [vmem:[#allocation6 + $0xe68] sm:$0xff]
    %v2047 = vld [vmem:[#allocation6 + $0xe70] sm:$0xff]
    %v2048 = vld [vmem:[#allocation6 + $0xe78] sm:$0xff]
    %v2049 = vld [vmem:[#allocation6 + $0xe80] sm:$0xff]
    %v2050 = vld [vmem:[#allocation6 + $0xe88] sm:$0xff]
    %v2051 = vld [vmem:[#allocation6 + $0xe90] sm:$0xff]
    %v2052 = vld [vmem:[#allocation6 + $0xe98] sm:$0xff]
    %v2053 = vld [vmem:[#allocation6 + $0xea0] sm:$0xff]
    %v2054 = vld [vmem:[#allocation6 + $0xea8] sm:$0xff]
    %v2055 = vld [vmem:[#allocation6 + $0xeb0] sm:$0xff]
    %v2056 = vld [vmem:[#allocation6 + $0xeb8] sm:$0xff]
    %v2057 = vld [vmem:[#allocation6 + $0xec0] sm:$0xff]
    %v2058 = vld [vmem:[#allocation6 + $0xec8] sm:$0xff]
    %v2059 = vld [vmem:[#allocation6 + $0xed0] sm:$0xff]
    %v2060 = vld [vmem:[#allocation6 + $0xed8] sm:$0xff]
    %v2061 = vld [vmem:[#allocation6 + $0xee0] sm:$0xff]
    %v2062 = vld [vmem:[#allocation6 + $0xee8] sm:$0xff]
    %v2063 = vld [vmem:[#allocation6 + $0xef0] sm:$0xff]
    %v2064 = vld [vmem:[#allocation6 + $0xef8] sm:$0xff]
    %v2065 = vld [vmem:[#allocation6 + $0xf00] sm:$0xff]
    %v2066 = vld [vmem:[#allocation6 + $0xf08] sm:$0xff]
    %v2067 = vld [vmem:[#allocation6 + $0xf10] sm:$0xff]
    %v2068 = vld [vmem:[#allocation6 + $0xf18] sm:$0xff]
    %v2069 = vld [vmem:[#allocation6 + $0xf20] sm:$0xff]
    %v2070 = vld [vmem:[#allocation6 + $0xf28] sm:$0xff]
    %v2071 = vld [vmem:[#allocation6 + $0xf30] sm:$0xff]
    %v2072 = vld [vmem:[#allocation6 + $0xf38] sm:$0xff]
    %v2073 = vld [vmem:[#allocation6 + $0xf40] sm:$0xff]
    %v2074 = vld [vmem:[#allocation6 + $0xf48] sm:$0xff]
    %v2075 = vld [vmem:[#allocation6 + $0xf50] sm:$0xff]
    %v2076 = vld [vmem:[#allocation6 + $0xf58] sm:$0xff]
    %v2077 = vld [vmem:[#allocation6 + $0xf60] sm:$0xff]
    %v2078 = vld [vmem:[#allocation6 + $0xf68] sm:$0xff]
    %v2079 = vld [vmem:[#allocation6 + $0xf70] sm:$0xff]
    %v2080 = vld [vmem:[#allocation6 + $0xf78] sm:$0xff]
    %v2081 = vld [vmem:[#allocation6 + $0xf80] sm:$0xff]
    %v2082 = vld [vmem:[#allocation6 + $0xf88] sm:$0xff]
    %v2083 = vld [vmem:[#allocation6 + $0xf90] sm:$0xff]
    %v2084 = vld [vmem:[#allocation6 + $0xf98] sm:$0xff]
    %v2085 = vld [vmem:[#allocation6 + $0xfa0] sm:$0xff]
    %v2086 = vld [vmem:[#allocation6 + $0xfa8] sm:$0xff]
    %v2087 = vld [vmem:[#allocation6 + $0xfb0] sm:$0xff]
    %v2088 = vld [vmem:[#allocation6 + $0xfb8] sm:$0xff]
    %v2089 = vld [vmem:[#allocation6 + $0xfc0] sm:$0xff]
    %v2090 = vld [vmem:[#allocation6 + $0xfc8] sm:$0xff]
    %v2091 = vld [vmem:[#allocation6 + $0xfd0] sm:$0xff]
    %v2092 = vld [vmem:[#allocation6 + $0xfd8] sm:$0xff]
    %v2093 = vld [vmem:[#allocation6 + $0xfe0] sm:$0xff]
    %v2094 = vld [vmem:[#allocation6 + $0xfe8] sm:$0xff]
    %v2095 = vld [vmem:[#allocation6 + $0xff0] sm:$0xff]
    %v2096 = vld [vmem:[#allocation6 + $0xff8] sm:$0xff]
    %v2097 = vld [vmem:[#allocation7] sm:$0xf]
    %v2099 = vperm.slane %v2097, 0
    %v2100 = vperm.slane %v2097, 1
    %v2101 = vperm.slane %v2097, 2
    %v2102 = vperm.slane %v2097, 3
    %v2619 = vunpack.c.l.b16 %v1585
    %v2620 = vunpack.c.h.b16 %v1585
    %v2621 = vunpack.c.l.b16 %v1586
    %v2622 = vunpack.c.h.b16 %v1586
    %v2623 = vunpack.c.l.b16 %v1587
    %v2624 = vunpack.c.h.b16 %v1587
    %v2625 = vunpack.c.l.b16 %v1588
    %v2626 = vunpack.c.h.b16 %v1588
    %v2627 = vunpack.c.l.b16 %v1589
    %v2628 = vunpack.c.h.b16 %v1589
    %v2629 = vunpack.c.l.b16 %v1590
    %v2630 = vunpack.c.h.b16 %v1590
    %v2631 = vunpack.c.l.b16 %v1591
    %v2632 = vunpack.c.h.b16 %v1591
    %v2633 = vunpack.c.l.b16 %v1592
    %v2634 = vunpack.c.h.b16 %v1592
    %v2635 = vunpack.c.l.b16 %v1593
    %v2636 = vunpack.c.h.b16 %v1593
    %v2637 = vunpack.c.l.b16 %v1594
    %v2638 = vunpack.c.h.b16 %v1594
    %v2639 = vunpack.c.l.b16 %v1595
    %v2640 = vunpack.c.h.b16 %v1595
    %v2641 = vunpack.c.l.b16 %v1596
    %v2642 = vunpack.c.h.b16 %v1596
    %v2643 = vunpack.c.l.b16 %v1597
    %v2644 = vunpack.c.h.b16 %v1597
    %v2645 = vunpack.c.l.b16 %v1598
    %v2646 = vunpack.c.h.b16 %v1598
    %v2647 = vunpack.c.l.b16 %v1599
    %v2648 = vunpack.c.h.b16 %v1599
    %v2649 = vunpack.c.l.b16 %v1600
    %v2650 = vunpack.c.h.b16 %v1600
    %v2651 = vunpack.c.l.b16 %v1601
    %v2652 = vunpack.c.h.b16 %v1601
    %v2653 = vunpack.c.l.b16 %v1602
    %v2654 = vunpack.c.h.b16 %v1602
    %v2655 = vunpack.c.l.b16 %v1603
    %v2656 = vunpack.c.h.b16 %v1603
    %v2657 = vunpack.c.l.b16 %v1604
    %v2658 = vunpack.c.h.b16 %v1604
    %v2659 = vunpack.c.l.b16 %v1605
    %v2660 = vunpack.c.h.b16 %v1605
    %v2661 = vunpack.c.l.b16 %v1606
    %v2662 = vunpack.c.h.b16 %v1606
    %v2663 = vunpack.c.l.b16 %v1607
    %v2664 = vunpack.c.h.b16 %v1607
    %v2665 = vunpack.c.l.b16 %v1608
    %v2666 = vunpack.c.h.b16 %v1608
    %v2667 = vunpack.c.l.b16 %v1609
    %v2668 = vunpack.c.h.b16 %v1609
    %v2669 = vunpack.c.l.b16 %v1610
    %v2670 = vunpack.c.h.b16 %v1610
    %v2671 = vunpack.c.l.b16 %v1611
    %v2672 = vunpack.c.h.b16 %v1611
    %v2673 = vunpack.c.l.b16 %v1612
    %v2674 = vunpack.c.h.b16 %v1612
    %v2675 = vunpack.c.l.b16 %v1613
    %v2676 = vunpack.c.h.b16 %v1613
    %v2677 = vunpack.c.l.b16 %v1614
    %v2678 = vunpack.c.h.b16 %v1614
    %v2679 = vunpack.c.l.b16 %v1615
    %v2680 = vunpack.c.h.b16 %v1615
    %v2681 = vunpack.c.l.b16 %v1616
    %v2682 = vunpack.c.h.b16 %v1616
    %v2683 = vunpack.c.l.b16 %v1617
    %v2684 = vunpack.c.h.b16 %v1617
    %v2685 = vunpack.c.l.b16 %v1618
    %v2686 = vunpack.c.h.b16 %v1618
    %v2687 = vunpack.c.l.b16 %v1619
    %v2688 = vunpack.c.h.b16 %v1619
    %v2689 = vunpack.c.l.b16 %v1620
    %v2690 = vunpack.c.h.b16 %v1620
    %v2691 = vunpack.c.l.b16 %v1621
    %v2692 = vunpack.c.h.b16 %v1621
    %v2693 = vunpack.c.l.b16 %v1622
    %v2694 = vunpack.c.h.b16 %v1622
    %v2695 = vunpack.c.l.b16 %v1623
    %v2696 = vunpack.c.h.b16 %v1623
    %v2697 = vunpack.c.l.b16 %v1624
    %v2698 = vunpack.c.h.b16 %v1624
    %v2699 = vunpack.c.l.b16 %v1625
    %v2700 = vunpack.c.h.b16 %v1625
    %v2701 = vunpack.c.l.b16 %v1626
    %v2702 = vunpack.c.h.b16 %v1626
    %v2703 = vunpack.c.l.b16 %v1627
    %v2704 = vunpack.c.h.b16 %v1627
    %v2705 = vunpack.c.l.b16 %v1628
    %v2706 = vunpack.c.h.b16 %v1628
    %v2707 = vunpack.c.l.b16 %v1629
    %v2708 = vunpack.c.h.b16 %v1629
    %v2709 = vunpack.c.l.b16 %v1630
    %v2710 = vunpack.c.h.b16 %v1630
    %v2711 = vunpack.c.l.b16 %v1631
    %v2712 = vunpack.c.h.b16 %v1631
    %v2713 = vunpack.c.l.b16 %v1632
    %v2714 = vunpack.c.h.b16 %v1632
    %v2715 = vunpack.c.l.b16 %v1633
    %v2716 = vunpack.c.h.b16 %v1633
    %v2717 = vunpack.c.l.b16 %v1634
    %v2718 = vunpack.c.h.b16 %v1634
    %v2719 = vunpack.c.l.b16 %v1635
    %v2720 = vunpack.c.h.b16 %v1635
    %v2721 = vunpack.c.l.b16 %v1636
    %v2722 = vunpack.c.h.b16 %v1636
    %v2723 = vunpack.c.l.b16 %v1637
    %v2724 = vunpack.c.h.b16 %v1637
    %v2725 = vunpack.c.l.b16 %v1638
    %v2726 = vunpack.c.h.b16 %v1638
    %v2727 = vunpack.c.l.b16 %v1639
    %v2728 = vunpack.c.h.b16 %v1639
    %v2729 = vunpack.c.l.b16 %v1640
    %v2730 = vunpack.c.h.b16 %v1640
    %v2731 = vunpack.c.l.b16 %v1641
    %v2732 = vunpack.c.h.b16 %v1641
    %v2733 = vunpack.c.l.b16 %v1642
    %v2734 = vunpack.c.h.b16 %v1642
    %v2735 = vunpack.c.l.b16 %v1643
    %v2736 = vunpack.c.h.b16 %v1643
    %v2737 = vunpack.c.l.b16 %v1644
    %v2738 = vunpack.c.h.b16 %v1644
    %v2739 = vunpack.c.l.b16 %v1645
    %v2740 = vunpack.c.h.b16 %v1645
    %v2741 = vunpack.c.l.b16 %v1646
    %v2742 = vunpack.c.h.b16 %v1646
    %v2743 = vunpack.c.l.b16 %v1647
    %v2744 = vunpack.c.h.b16 %v1647
    %v2745 = vunpack.c.l.b16 %v1648
    %v2746 = vunpack.c.h.b16 %v1648
    %v2747 = vunpack.c.l.b16 %v1649
    %v2748 = vunpack.c.h.b16 %v1649
    %v2749 = vunpack.c.l.b16 %v1650
    %v2750 = vunpack.c.h.b16 %v1650
    %v2751 = vunpack.c.l.b16 %v1651
    %v2752 = vunpack.c.h.b16 %v1651
    %v2753 = vunpack.c.l.b16 %v1652
    %v2754 = vunpack.c.h.b16 %v1652
    %v2755 = vunpack.c.l.b16 %v1653
    %v2756 = vunpack.c.h.b16 %v1653
    %v2757 = vunpack.c.l.b16 %v1654
    %v2758 = vunpack.c.h.b16 %v1654
    %v2759 = vunpack.c.l.b16 %v1655
    %v2760 = vunpack.c.h.b16 %v1655
    %v2761 = vunpack.c.l.b16 %v1656
    %v2762 = vunpack.c.h.b16 %v1656
    %v2763 = vunpack.c.l.b16 %v1657
    %v2764 = vunpack.c.h.b16 %v1657
    %v2765 = vunpack.c.l.b16 %v1658
    %v2766 = vunpack.c.h.b16 %v1658
    %v2767 = vunpack.c.l.b16 %v1659
    %v2768 = vunpack.c.h.b16 %v1659
    %v2769 = vunpack.c.l.b16 %v1660
    %v2770 = vunpack.c.h.b16 %v1660
    %v2771 = vunpack.c.l.b16 %v1661
    %v2772 = vunpack.c.h.b16 %v1661
    %v2773 = vunpack.c.l.b16 %v1662
    %v2774 = vunpack.c.h.b16 %v1662
    %v2775 = vunpack.c.l.b16 %v1663
    %v2776 = vunpack.c.h.b16 %v1663
    %v2777 = vunpack.c.l.b16 %v1664
    %v2778 = vunpack.c.h.b16 %v1664
    %v2779 = vunpack.c.l.b16 %v1665
    %v2780 = vunpack.c.h.b16 %v1665
    %v2781 = vunpack.c.l.b16 %v1666
    %v2782 = vunpack.c.h.b16 %v1666
    %v2783 = vunpack.c.l.b16 %v1667
    %v2784 = vunpack.c.h.b16 %v1667
    %v2785 = vunpack.c.l.b16 %v1668
    %v2786 = vunpack.c.h.b16 %v1668
    %v2787 = vunpack.c.l.b16 %v1669
    %v2788 = vunpack.c.h.b16 %v1669
    %v2789 = vunpack.c.l.b16 %v1670
    %v2790 = vunpack.c.h.b16 %v1670
    %v2791 = vunpack.c.l.b16 %v1671
    %v2792 = vunpack.c.h.b16 %v1671
    %v2793 = vunpack.c.l.b16 %v1672
    %v2794 = vunpack.c.h.b16 %v1672
    %v2795 = vunpack.c.l.b16 %v1673
    %v2796 = vunpack.c.h.b16 %v1673
    %v2797 = vunpack.c.l.b16 %v1674
    %v2798 = vunpack.c.h.b16 %v1674
    %v2799 = vunpack.c.l.b16 %v1675
    %v2800 = vunpack.c.h.b16 %v1675
    %v2801 = vunpack.c.l.b16 %v1676
    %v2802 = vunpack.c.h.b16 %v1676
    %v2803 = vunpack.c.l.b16 %v1677
    %v2804 = vunpack.c.h.b16 %v1677
    %v2805 = vunpack.c.l.b16 %v1678
    %v2806 = vunpack.c.h.b16 %v1678
    %v2807 = vunpack.c.l.b16 %v1679
    %v2808 = vunpack.c.h.b16 %v1679
    %v2809 = vunpack.c.l.b16 %v1680
    %v2810 = vunpack.c.h.b16 %v1680
    %v2811 = vunpack.c.l.b16 %v1681
    %v2812 = vunpack.c.h.b16 %v1681
    %v2813 = vunpack.c.l.b16 %v1682
    %v2814 = vunpack.c.h.b16 %v1682
    %v2815 = vunpack.c.l.b16 %v1683
    %v2816 = vunpack.c.h.b16 %v1683
    %v2817 = vunpack.c.l.b16 %v1684
    %v2818 = vunpack.c.h.b16 %v1684
    %v2819 = vunpack.c.l.b16 %v1685
    %v2820 = vunpack.c.h.b16 %v1685
    %v2821 = vunpack.c.l.b16 %v1686
    %v2822 = vunpack.c.h.b16 %v1686
    %v2823 = vunpack.c.l.b16 %v1687
    %v2824 = vunpack.c.h.b16 %v1687
    %v2825 = vunpack.c.l.b16 %v1688
    %v2826 = vunpack.c.h.b16 %v1688
    %v2827 = vunpack.c.l.b16 %v1689
    %v2828 = vunpack.c.h.b16 %v1689
    %v2829 = vunpack.c.l.b16 %v1690
    %v2830 = vunpack.c.h.b16 %v1690
    %v2831 = vunpack.c.l.b16 %v1691
    %v2832 = vunpack.c.h.b16 %v1691
    %v2833 = vunpack.c.l.b16 %v1692
    %v2834 = vunpack.c.h.b16 %v1692
    %v2835 = vunpack.c.l.b16 %v1693
    %v2836 = vunpack.c.h.b16 %v1693
    %v2837 = vunpack.c.l.b16 %v1694
    %v2838 = vunpack.c.h.b16 %v1694
    %v2839 = vunpack.c.l.b16 %v1695
    %v2840 = vunpack.c.h.b16 %v1695
    %v2841 = vunpack.c.l.b16 %v1696
    %v2842 = vunpack.c.h.b16 %v1696
    %v2843 = vunpack.c.l.b16 %v1697
    %v2844 = vunpack.c.h.b16 %v1697
    %v2845 = vunpack.c.l.b16 %v1698
    %v2846 = vunpack.c.h.b16 %v1698
    %v2847 = vunpack.c.l.b16 %v1699
    %v2848 = vunpack.c.h.b16 %v1699
    %v2849 = vunpack.c.l.b16 %v1700
    %v2850 = vunpack.c.h.b16 %v1700
    %v2851 = vunpack.c.l.b16 %v1701
    %v2852 = vunpack.c.h.b16 %v1701
    %v2853 = vunpack.c.l.b16 %v1702
    %v2854 = vunpack.c.h.b16 %v1702
    %v2855 = vunpack.c.l.b16 %v1703
    %v2856 = vunpack.c.h.b16 %v1703
    %v2857 = vunpack.c.l.b16 %v1704
    %v2858 = vunpack.c.h.b16 %v1704
    %v2859 = vunpack.c.l.b16 %v1705
    %v2860 = vunpack.c.h.b16 %v1705
    %v2861 = vunpack.c.l.b16 %v1706
    %v2862 = vunpack.c.h.b16 %v1706
    %v2863 = vunpack.c.l.b16 %v1707
    %v2864 = vunpack.c.h.b16 %v1707
    %v2865 = vunpack.c.l.b16 %v1708
    %v2866 = vunpack.c.h.b16 %v1708
    %v2867 = vunpack.c.l.b16 %v1709
    %v2868 = vunpack.c.h.b16 %v1709
    %v2869 = vunpack.c.l.b16 %v1710
    %v2870 = vunpack.c.h.b16 %v1710
    %v2871 = vunpack.c.l.b16 %v1711
    %v2872 = vunpack.c.h.b16 %v1711
    %v2873 = vunpack.c.l.b16 %v1712
    %v2874 = vunpack.c.h.b16 %v1712
    %v2875 = vunpack.c.l.b16 %v1713
    %v2876 = vunpack.c.h.b16 %v1713
    %v2877 = vunpack.c.l.b16 %v1714
    %v2878 = vunpack.c.h.b16 %v1714
    %v2879 = vunpack.c.l.b16 %v1715
    %v2880 = vunpack.c.h.b16 %v1715
    %v2881 = vunpack.c.l.b16 %v1716
    %v2882 = vunpack.c.h.b16 %v1716
    %v2883 = vunpack.c.l.b16 %v1717
    %v2884 = vunpack.c.h.b16 %v1717
    %v2885 = vunpack.c.l.b16 %v1718
    %v2886 = vunpack.c.h.b16 %v1718
    %v2887 = vunpack.c.l.b16 %v1719
    %v2888 = vunpack.c.h.b16 %v1719
    %v2889 = vunpack.c.l.b16 %v1720
    %v2890 = vunpack.c.h.b16 %v1720
    %v2891 = vunpack.c.l.b16 %v1721
    %v2892 = vunpack.c.h.b16 %v1721
    %v2893 = vunpack.c.l.b16 %v1722
    %v2894 = vunpack.c.h.b16 %v1722
    %v2895 = vunpack.c.l.b16 %v1723
    %v2896 = vunpack.c.h.b16 %v1723
    %v2897 = vunpack.c.l.b16 %v1724
    %v2898 = vunpack.c.h.b16 %v1724
    %v2899 = vunpack.c.l.b16 %v1725
    %v2900 = vunpack.c.h.b16 %v1725
    %v2901 = vunpack.c.l.b16 %v1726
    %v2902 = vunpack.c.h.b16 %v1726
    %v2903 = vunpack.c.l.b16 %v1727
    %v2904 = vunpack.c.h.b16 %v1727
    %v2905 = vunpack.c.l.b16 %v1728
    %v2906 = vunpack.c.h.b16 %v1728
    %v2907 = vunpack.c.l.b16 %v1729
    %v2908 = vunpack.c.h.b16 %v1729
    %v2909 = vunpack.c.l.b16 %v1730
    %v2910 = vunpack.c.h.b16 %v1730
    %v2911 = vunpack.c.l.b16 %v1731
    %v2912 = vunpack.c.h.b16 %v1731
    %v2913 = vunpack.c.l.b16 %v1732
    %v2914 = vunpack.c.h.b16 %v1732
    %v2915 = vunpack.c.l.b16 %v1733
    %v2916 = vunpack.c.h.b16 %v1733
    %v2917 = vunpack.c.l.b16 %v1734
    %v2918 = vunpack.c.h.b16 %v1734
    %v2919 = vunpack.c.l.b16 %v1735
    %v2920 = vunpack.c.h.b16 %v1735
    %v2921 = vunpack.c.l.b16 %v1736
    %v2922 = vunpack.c.h.b16 %v1736
    %v2923 = vunpack.c.l.b16 %v1737
    %v2924 = vunpack.c.h.b16 %v1737
    %v2925 = vunpack.c.l.b16 %v1738
    %v2926 = vunpack.c.h.b16 %v1738
    %v2927 = vunpack.c.l.b16 %v1739
    %v2928 = vunpack.c.h.b16 %v1739
    %v2929 = vunpack.c.l.b16 %v1740
    %v2930 = vunpack.c.h.b16 %v1740
    %v2931 = vunpack.c.l.b16 %v1741
    %v2932 = vunpack.c.h.b16 %v1741
    %v2933 = vunpack.c.l.b16 %v1742
    %v2934 = vunpack.c.h.b16 %v1742
    %v2935 = vunpack.c.l.b16 %v1743
    %v2936 = vunpack.c.h.b16 %v1743
    %v2937 = vunpack.c.l.b16 %v1744
    %v2938 = vunpack.c.h.b16 %v1744
    %v2939 = vunpack.c.l.b16 %v1745
    %v2940 = vunpack.c.h.b16 %v1745
    %v2941 = vunpack.c.l.b16 %v1746
    %v2942 = vunpack.c.h.b16 %v1746
    %v2943 = vunpack.c.l.b16 %v1747
    %v2944 = vunpack.c.h.b16 %v1747
    %v2945 = vunpack.c.l.b16 %v1748
    %v2946 = vunpack.c.h.b16 %v1748
    %v2947 = vunpack.c.l.b16 %v1749
    %v2948 = vunpack.c.h.b16 %v1749
    %v2949 = vunpack.c.l.b16 %v1750
    %v2950 = vunpack.c.h.b16 %v1750
    %v2951 = vunpack.c.l.b16 %v1751
    %v2952 = vunpack.c.h.b16 %v1751
    %v2953 = vunpack.c.l.b16 %v1752
    %v2954 = vunpack.c.h.b16 %v1752
    %v2955 = vunpack.c.l.b16 %v1753
    %v2956 = vunpack.c.h.b16 %v1753
    %v2957 = vunpack.c.l.b16 %v1754
    %v2958 = vunpack.c.h.b16 %v1754
    %v2959 = vunpack.c.l.b16 %v1755
    %v2960 = vunpack.c.h.b16 %v1755
    %v2961 = vunpack.c.l.b16 %v1756
    %v2962 = vunpack.c.h.b16 %v1756
    %v2963 = vunpack.c.l.b16 %v1757
    %v2964 = vunpack.c.h.b16 %v1757
    %v2965 = vunpack.c.l.b16 %v1758
    %v2966 = vunpack.c.h.b16 %v1758
    %v2967 = vunpack.c.l.b16 %v1759
    %v2968 = vunpack.c.h.b16 %v1759
    %v2969 = vunpack.c.l.b16 %v1760
    %v2970 = vunpack.c.h.b16 %v1760
    %v2971 = vunpack.c.l.b16 %v1761
    %v2972 = vunpack.c.h.b16 %v1761
    %v2973 = vunpack.c.l.b16 %v1762
    %v2974 = vunpack.c.h.b16 %v1762
    %v2975 = vunpack.c.l.b16 %v1763
    %v2976 = vunpack.c.h.b16 %v1763
    %v2977 = vunpack.c.l.b16 %v1764
    %v2978 = vunpack.c.h.b16 %v1764
    %v2979 = vunpack.c.l.b16 %v1765
    %v2980 = vunpack.c.h.b16 %v1765
    %v2981 = vunpack.c.l.b16 %v1766
    %v2982 = vunpack.c.h.b16 %v1766
    %v2983 = vunpack.c.l.b16 %v1767
    %v2984 = vunpack.c.h.b16 %v1767
    %v2985 = vunpack.c.l.b16 %v1768
    %v2986 = vunpack.c.h.b16 %v1768
    %v2987 = vunpack.c.l.b16 %v1769
    %v2988 = vunpack.c.h.b16 %v1769
    %v2989 = vunpack.c.l.b16 %v1770
    %v2990 = vunpack.c.h.b16 %v1770
    %v2991 = vunpack.c.l.b16 %v1771
    %v2992 = vunpack.c.h.b16 %v1771
    %v2993 = vunpack.c.l.b16 %v1772
    %v2994 = vunpack.c.h.b16 %v1772
    %v2995 = vunpack.c.l.b16 %v1773
    %v2996 = vunpack.c.h.b16 %v1773
    %v2997 = vunpack.c.l.b16 %v1774
    %v2998 = vunpack.c.h.b16 %v1774
    %v2999 = vunpack.c.l.b16 %v1775
    %v3000 = vunpack.c.h.b16 %v1775
    %v3001 = vunpack.c.l.b16 %v1776
    %v3002 = vunpack.c.h.b16 %v1776
    %v3003 = vunpack.c.l.b16 %v1777
    %v3004 = vunpack.c.h.b16 %v1777
    %v3005 = vunpack.c.l.b16 %v1778
    %v3006 = vunpack.c.h.b16 %v1778
    %v3007 = vunpack.c.l.b16 %v1779
    %v3008 = vunpack.c.h.b16 %v1779
    %v3009 = vunpack.c.l.b16 %v1780
    %v3010 = vunpack.c.h.b16 %v1780
    %v3011 = vunpack.c.l.b16 %v1781
    %v3012 = vunpack.c.h.b16 %v1781
    %v3013 = vunpack.c.l.b16 %v1782
    %v3014 = vunpack.c.h.b16 %v1782
    %v3015 = vunpack.c.l.b16 %v1783
    %v3016 = vunpack.c.h.b16 %v1783
    %v3017 = vunpack.c.l.b16 %v1784
    %v3018 = vunpack.c.h.b16 %v1784
    %v3019 = vunpack.c.l.b16 %v1785
    %v3020 = vunpack.c.h.b16 %v1785
    %v3021 = vunpack.c.l.b16 %v1786
    %v3022 = vunpack.c.h.b16 %v1786
    %v3023 = vunpack.c.l.b16 %v1787
    %v3024 = vunpack.c.h.b16 %v1787
    %v3025 = vunpack.c.l.b16 %v1788
    %v3026 = vunpack.c.h.b16 %v1788
    %v3027 = vunpack.c.l.b16 %v1789
    %v3028 = vunpack.c.h.b16 %v1789
    %v3029 = vunpack.c.l.b16 %v1790
    %v3030 = vunpack.c.h.b16 %v1790
    %v3031 = vunpack.c.l.b16 %v1791
    %v3032 = vunpack.c.h.b16 %v1791
    %v3033 = vunpack.c.l.b16 %v1792
    %v3034 = vunpack.c.h.b16 %v1792
    %v3035 = vunpack.c.l.b16 %v1793
    %v3036 = vunpack.c.h.b16 %v1793
    %v3037 = vunpack.c.l.b16 %v1794
    %v3038 = vunpack.c.h.b16 %v1794
    %v3039 = vunpack.c.l.b16 %v1795
    %v3040 = vunpack.c.h.b16 %v1795
    %v3041 = vunpack.c.l.b16 %v1796
    %v3042 = vunpack.c.h.b16 %v1796
    %v3043 = vunpack.c.l.b16 %v1797
    %v3044 = vunpack.c.h.b16 %v1797
    %v3045 = vunpack.c.l.b16 %v1798
    %v3046 = vunpack.c.h.b16 %v1798
    %v3047 = vunpack.c.l.b16 %v1799
    %v3048 = vunpack.c.h.b16 %v1799
    %v3049 = vunpack.c.l.b16 %v1800
    %v3050 = vunpack.c.h.b16 %v1800
    %v3051 = vunpack.c.l.b16 %v1801
    %v3052 = vunpack.c.h.b16 %v1801
    %v3053 = vunpack.c.l.b16 %v1802
    %v3054 = vunpack.c.h.b16 %v1802
    %v3055 = vunpack.c.l.b16 %v1803
    %v3056 = vunpack.c.h.b16 %v1803
    %v3057 = vunpack.c.l.b16 %v1804
    %v3058 = vunpack.c.h.b16 %v1804
    %v3059 = vunpack.c.l.b16 %v1805
    %v3060 = vunpack.c.h.b16 %v1805
    %v3061 = vunpack.c.l.b16 %v1806
    %v3062 = vunpack.c.h.b16 %v1806
    %v3063 = vunpack.c.l.b16 %v1807
    %v3064 = vunpack.c.h.b16 %v1807
    %v3065 = vunpack.c.l.b16 %v1808
    %v3066 = vunpack.c.h.b16 %v1808
    %v3067 = vunpack.c.l.b16 %v1809
    %v3068 = vunpack.c.h.b16 %v1809
    %v3069 = vunpack.c.l.b16 %v1810
    %v3070 = vunpack.c.h.b16 %v1810
    %v3071 = vunpack.c.l.b16 %v1811
    %v3072 = vunpack.c.h.b16 %v1811
    %v3073 = vunpack.c.l.b16 %v1812
    %v3074 = vunpack.c.h.b16 %v1812
    %v3075 = vunpack.c.l.b16 %v1813
    %v3076 = vunpack.c.h.b16 %v1813
    %v3077 = vunpack.c.l.b16 %v1814
    %v3078 = vunpack.c.h.b16 %v1814
    %v3079 = vunpack.c.l.b16 %v1815
    %v3080 = vunpack.c.h.b16 %v1815
    %v3081 = vunpack.c.l.b16 %v1816
    %v3082 = vunpack.c.h.b16 %v1816
    %v3083 = vunpack.c.l.b16 %v1817
    %v3084 = vunpack.c.h.b16 %v1817
    %v3085 = vunpack.c.l.b16 %v1818
    %v3086 = vunpack.c.h.b16 %v1818
    %v3087 = vunpack.c.l.b16 %v1819
    %v3088 = vunpack.c.h.b16 %v1819
    %v3089 = vunpack.c.l.b16 %v1820
    %v3090 = vunpack.c.h.b16 %v1820
    %v3091 = vunpack.c.l.b16 %v1821
    %v3092 = vunpack.c.h.b16 %v1821
    %v3093 = vunpack.c.l.b16 %v1822
    %v3094 = vunpack.c.h.b16 %v1822
    %v3095 = vunpack.c.l.b16 %v1823
    %v3096 = vunpack.c.h.b16 %v1823
    %v3097 = vunpack.c.l.b16 %v1824
    %v3098 = vunpack.c.h.b16 %v1824
    %v3099 = vunpack.c.l.b16 %v1825
    %v3100 = vunpack.c.h.b16 %v1825
    %v3101 = vunpack.c.l.b16 %v1826
    %v3102 = vunpack.c.h.b16 %v1826
    %v3103 = vunpack.c.l.b16 %v1827
    %v3104 = vunpack.c.h.b16 %v1827
    %v3105 = vunpack.c.l.b16 %v1828
    %v3106 = vunpack.c.h.b16 %v1828
    %v3107 = vunpack.c.l.b16 %v1829
    %v3108 = vunpack.c.h.b16 %v1829
    %v3109 = vunpack.c.l.b16 %v1830
    %v3110 = vunpack.c.h.b16 %v1830
    %v3111 = vunpack.c.l.b16 %v1831
    %v3112 = vunpack.c.h.b16 %v1831
    %v3113 = vunpack.c.l.b16 %v1832
    %v3114 = vunpack.c.h.b16 %v1832
    %v3115 = vunpack.c.l.b16 %v1833
    %v3116 = vunpack.c.h.b16 %v1833
    %v3117 = vunpack.c.l.b16 %v1834
    %v3118 = vunpack.c.h.b16 %v1834
    %v3119 = vunpack.c.l.b16 %v1835
    %v3120 = vunpack.c.h.b16 %v1835
    %v3121 = vunpack.c.l.b16 %v1836
    %v3122 = vunpack.c.h.b16 %v1836
    %v3123 = vunpack.c.l.b16 %v1837
    %v3124 = vunpack.c.h.b16 %v1837
    %v3125 = vunpack.c.l.b16 %v1838
    %v3126 = vunpack.c.h.b16 %v1838
    %v3127 = vunpack.c.l.b16 %v1839
    %v3128 = vunpack.c.h.b16 %v1839
    %v3129 = vunpack.c.l.b16 %v1840
    %v3130 = vunpack.c.h.b16 %v1840
    %v3131 = vunpack.c.l.b16 %v1841
    %v3132 = vunpack.c.h.b16 %v1841
    %v3133 = vunpack.c.l.b16 %v1842
    %v3134 = vunpack.c.h.b16 %v1842
    %v3135 = vunpack.c.l.b16 %v1843
    %v3136 = vunpack.c.h.b16 %v1843
    %v3137 = vunpack.c.l.b16 %v1844
    %v3138 = vunpack.c.h.b16 %v1844
    %v3139 = vunpack.c.l.b16 %v1845
    %v3140 = vunpack.c.h.b16 %v1845
    %v3141 = vunpack.c.l.b16 %v1846
    %v3142 = vunpack.c.h.b16 %v1846
    %v3143 = vunpack.c.l.b16 %v1847
    %v3144 = vunpack.c.h.b16 %v1847
    %v3145 = vunpack.c.l.b16 %v1848
    %v3146 = vunpack.c.h.b16 %v1848
    %v3147 = vunpack.c.l.b16 %v1849
    %v3148 = vunpack.c.h.b16 %v1849
    %v3149 = vunpack.c.l.b16 %v1850
    %v3150 = vunpack.c.h.b16 %v1850
    %v3151 = vunpack.c.l.b16 %v1851
    %v3152 = vunpack.c.h.b16 %v1851
    %v3153 = vunpack.c.l.b16 %v1852
    %v3154 = vunpack.c.h.b16 %v1852
    %v3155 = vunpack.c.l.b16 %v1853
    %v3156 = vunpack.c.h.b16 %v1853
    %v3157 = vunpack.c.l.b16 %v1854
    %v3158 = vunpack.c.h.b16 %v1854
    %v3159 = vunpack.c.l.b16 %v1855
    %v3160 = vunpack.c.h.b16 %v1855
    %v3161 = vunpack.c.l.b16 %v1856
    %v3162 = vunpack.c.h.b16 %v1856
    %v3163 = vunpack.c.l.b16 %v1857
    %v3164 = vunpack.c.h.b16 %v1857
    %v3165 = vunpack.c.l.b16 %v1858
    %v3166 = vunpack.c.h.b16 %v1858
    %v3167 = vunpack.c.l.b16 %v1859
    %v3168 = vunpack.c.h.b16 %v1859
    %v3169 = vunpack.c.l.b16 %v1860
    %v3170 = vunpack.c.h.b16 %v1860
    %v3171 = vunpack.c.l.b16 %v1861
    %v3172 = vunpack.c.h.b16 %v1861
    %v3173 = vunpack.c.l.b16 %v1862
    %v3174 = vunpack.c.h.b16 %v1862
    %v3175 = vunpack.c.l.b16 %v1863
    %v3176 = vunpack.c.h.b16 %v1863
    %v3177 = vunpack.c.l.b16 %v1864
    %v3178 = vunpack.c.h.b16 %v1864
    %v3179 = vunpack.c.l.b16 %v1865
    %v3180 = vunpack.c.h.b16 %v1865
    %v3181 = vunpack.c.l.b16 %v1866
    %v3182 = vunpack.c.h.b16 %v1866
    %v3183 = vunpack.c.l.b16 %v1867
    %v3184 = vunpack.c.h.b16 %v1867
    %v3185 = vunpack.c.l.b16 %v1868
    %v3186 = vunpack.c.h.b16 %v1868
    %v3187 = vunpack.c.l.b16 %v1869
    %v3188 = vunpack.c.h.b16 %v1869
    %v3189 = vunpack.c.l.b16 %v1870
    %v3190 = vunpack.c.h.b16 %v1870
    %v3191 = vunpack.c.l.b16 %v1871
    %v3192 = vunpack.c.h.b16 %v1871
    %v3193 = vunpack.c.l.b16 %v1872
    %v3194 = vunpack.c.h.b16 %v1872
    %v3195 = vunpack.c.l.b16 %v1873
    %v3196 = vunpack.c.h.b16 %v1873
    %v3197 = vunpack.c.l.b16 %v1874
    %v3198 = vunpack.c.h.b16 %v1874
    %v3199 = vunpack.c.l.b16 %v1875
    %v3200 = vunpack.c.h.b16 %v1875
    %v3201 = vunpack.c.l.b16 %v1876
    %v3202 = vunpack.c.h.b16 %v1876
    %v3203 = vunpack.c.l.b16 %v1877
    %v3204 = vunpack.c.h.b16 %v1877
    %v3205 = vunpack.c.l.b16 %v1878
    %v3206 = vunpack.c.h.b16 %v1878
    %v3207 = vunpack.c.l.b16 %v1879
    %v3208 = vunpack.c.h.b16 %v1879
    %v3209 = vunpack.c.l.b16 %v1880
    %v3210 = vunpack.c.h.b16 %v1880
    %v3211 = vunpack.c.l.b16 %v1881
    %v3212 = vunpack.c.h.b16 %v1881
    %v3213 = vunpack.c.l.b16 %v1882
    %v3214 = vunpack.c.h.b16 %v1882
    %v3215 = vunpack.c.l.b16 %v1883
    %v3216 = vunpack.c.h.b16 %v1883
    %v3217 = vunpack.c.l.b16 %v1884
    %v3218 = vunpack.c.h.b16 %v1884
    %v3219 = vunpack.c.l.b16 %v1885
    %v3220 = vunpack.c.h.b16 %v1885
    %v3221 = vunpack.c.l.b16 %v1886
    %v3222 = vunpack.c.h.b16 %v1886
    %v3223 = vunpack.c.l.b16 %v1887
    %v3224 = vunpack.c.h.b16 %v1887
    %v3225 = vunpack.c.l.b16 %v1888
    %v3226 = vunpack.c.h.b16 %v1888
    %v3227 = vunpack.c.l.b16 %v1889
    %v3228 = vunpack.c.h.b16 %v1889
    %v3229 = vunpack.c.l.b16 %v1890
    %v3230 = vunpack.c.h.b16 %v1890
    %v3231 = vunpack.c.l.b16 %v1891
    %v3232 = vunpack.c.h.b16 %v1891
    %v3233 = vunpack.c.l.b16 %v1892
    %v3234 = vunpack.c.h.b16 %v1892
    %v3235 = vunpack.c.l.b16 %v1893
    %v3236 = vunpack.c.h.b16 %v1893
    %v3237 = vunpack.c.l.b16 %v1894
    %v3238 = vunpack.c.h.b16 %v1894
    %v3239 = vunpack.c.l.b16 %v1895
    %v3240 = vunpack.c.h.b16 %v1895
    %v3241 = vunpack.c.l.b16 %v1896
    %v3242 = vunpack.c.h.b16 %v1896
    %v3243 = vunpack.c.l.b16 %v1897
    %v3244 = vunpack.c.h.b16 %v1897
    %v3245 = vunpack.c.l.b16 %v1898
    %v3246 = vunpack.c.h.b16 %v1898
    %v3247 = vunpack.c.l.b16 %v1899
    %v3248 = vunpack.c.h.b16 %v1899
    %v3249 = vunpack.c.l.b16 %v1900
    %v3250 = vunpack.c.h.b16 %v1900
    %v3251 = vunpack.c.l.b16 %v1901
    %v3252 = vunpack.c.h.b16 %v1901
    %v3253 = vunpack.c.l.b16 %v1902
    %v3254 = vunpack.c.h.b16 %v1902
    %v3255 = vunpack.c.l.b16 %v1903
    %v3256 = vunpack.c.h.b16 %v1903
    %v3257 = vunpack.c.l.b16 %v1904
    %v3258 = vunpack.c.h.b16 %v1904
    %v3259 = vunpack.c.l.b16 %v1905
    %v3260 = vunpack.c.h.b16 %v1905
    %v3261 = vunpack.c.l.b16 %v1906
    %v3262 = vunpack.c.h.b16 %v1906
    %v3263 = vunpack.c.l.b16 %v1907
    %v3264 = vunpack.c.h.b16 %v1907
    %v3265 = vunpack.c.l.b16 %v1908
    %v3266 = vunpack.c.h.b16 %v1908
    %v3267 = vunpack.c.l.b16 %v1909
    %v3268 = vunpack.c.h.b16 %v1909
    %v3269 = vunpack.c.l.b16 %v1910
    %v3270 = vunpack.c.h.b16 %v1910
    %v3271 = vunpack.c.l.b16 %v1911
    %v3272 = vunpack.c.h.b16 %v1911
    %v3273 = vunpack.c.l.b16 %v1912
    %v3274 = vunpack.c.h.b16 %v1912
    %v3275 = vunpack.c.l.b16 %v1913
    %v3276 = vunpack.c.h.b16 %v1913
    %v3277 = vunpack.c.l.b16 %v1914
    %v3278 = vunpack.c.h.b16 %v1914
    %v3279 = vunpack.c.l.b16 %v1915
    %v3280 = vunpack.c.h.b16 %v1915
    %v3281 = vunpack.c.l.b16 %v1916
    %v3282 = vunpack.c.h.b16 %v1916
    %v3283 = vunpack.c.l.b16 %v1917
    %v3284 = vunpack.c.h.b16 %v1917
    %v3285 = vunpack.c.l.b16 %v1918
    %v3286 = vunpack.c.h.b16 %v1918
    %v3287 = vunpack.c.l.b16 %v1919
    %v3288 = vunpack.c.h.b16 %v1919
    %v3289 = vunpack.c.l.b16 %v1920
    %v3290 = vunpack.c.h.b16 %v1920
    %v3291 = vunpack.c.l.b16 %v1921
    %v3292 = vunpack.c.h.b16 %v1921
    %v3293 = vunpack.c.l.b16 %v1922
    %v3294 = vunpack.c.h.b16 %v1922
    %v3295 = vunpack.c.l.b16 %v1923
    %v3296 = vunpack.c.h.b16 %v1923
    %v3297 = vunpack.c.l.b16 %v1924
    %v3298 = vunpack.c.h.b16 %v1924
    %v3299 = vunpack.c.l.b16 %v1925
    %v3300 = vunpack.c.h.b16 %v1925
    %v3301 = vunpack.c.l.b16 %v1926
    %v3302 = vunpack.c.h.b16 %v1926
    %v3303 = vunpack.c.l.b16 %v1927
    %v3304 = vunpack.c.h.b16 %v1927
    %v3305 = vunpack.c.l.b16 %v1928
    %v3306 = vunpack.c.h.b16 %v1928
    %v3307 = vunpack.c.l.b16 %v1929
    %v3308 = vunpack.c.h.b16 %v1929
    %v3309 = vunpack.c.l.b16 %v1930
    %v3310 = vunpack.c.h.b16 %v1930
    %v3311 = vunpack.c.l.b16 %v1931
    %v3312 = vunpack.c.h.b16 %v1931
    %v3313 = vunpack.c.l.b16 %v1932
    %v3314 = vunpack.c.h.b16 %v1932
    %v3315 = vunpack.c.l.b16 %v1933
    %v3316 = vunpack.c.h.b16 %v1933
    %v3317 = vunpack.c.l.b16 %v1934
    %v3318 = vunpack.c.h.b16 %v1934
    %v3319 = vunpack.c.l.b16 %v1935
    %v3320 = vunpack.c.h.b16 %v1935
    %v3321 = vunpack.c.l.b16 %v1936
    %v3322 = vunpack.c.h.b16 %v1936
    %v3323 = vunpack.c.l.b16 %v1937
    %v3324 = vunpack.c.h.b16 %v1937
    %v3325 = vunpack.c.l.b16 %v1938
    %v3326 = vunpack.c.h.b16 %v1938
    %v3327 = vunpack.c.l.b16 %v1939
    %v3328 = vunpack.c.h.b16 %v1939
    %v3329 = vunpack.c.l.b16 %v1940
    %v3330 = vunpack.c.h.b16 %v1940
    %v3331 = vunpack.c.l.b16 %v1941
    %v3332 = vunpack.c.h.b16 %v1941
    %v3333 = vunpack.c.l.b16 %v1942
    %v3334 = vunpack.c.h.b16 %v1942
    %v3335 = vunpack.c.l.b16 %v1943
    %v3336 = vunpack.c.h.b16 %v1943
    %v3337 = vunpack.c.l.b16 %v1944
    %v3338 = vunpack.c.h.b16 %v1944
    %v3339 = vunpack.c.l.b16 %v1945
    %v3340 = vunpack.c.h.b16 %v1945
    %v3341 = vunpack.c.l.b16 %v1946
    %v3342 = vunpack.c.h.b16 %v1946
    %v3343 = vunpack.c.l.b16 %v1947
    %v3344 = vunpack.c.h.b16 %v1947
    %v3345 = vunpack.c.l.b16 %v1948
    %v3346 = vunpack.c.h.b16 %v1948
    %v3347 = vunpack.c.l.b16 %v1949
    %v3348 = vunpack.c.h.b16 %v1949
    %v3349 = vunpack.c.l.b16 %v1950
    %v3350 = vunpack.c.h.b16 %v1950
    %v3351 = vunpack.c.l.b16 %v1951
    %v3352 = vunpack.c.h.b16 %v1951
    %v3353 = vunpack.c.l.b16 %v1952
    %v3354 = vunpack.c.h.b16 %v1952
    %v3355 = vunpack.c.l.b16 %v1953
    %v3356 = vunpack.c.h.b16 %v1953
    %v3357 = vunpack.c.l.b16 %v1954
    %v3358 = vunpack.c.h.b16 %v1954
    %v3359 = vunpack.c.l.b16 %v1955
    %v3360 = vunpack.c.h.b16 %v1955
    %v3361 = vunpack.c.l.b16 %v1956
    %v3362 = vunpack.c.h.b16 %v1956
    %v3363 = vunpack.c.l.b16 %v1957
    %v3364 = vunpack.c.h.b16 %v1957
    %v3365 = vunpack.c.l.b16 %v1958
    %v3366 = vunpack.c.h.b16 %v1958
    %v3367 = vunpack.c.l.b16 %v1959
    %v3368 = vunpack.c.h.b16 %v1959
    %v3369 = vunpack.c.l.b16 %v1960
    %v3370 = vunpack.c.h.b16 %v1960
    %v3371 = vunpack.c.l.b16 %v1961
    %v3372 = vunpack.c.h.b16 %v1961
    %v3373 = vunpack.c.l.b16 %v1962
    %v3374 = vunpack.c.h.b16 %v1962
    %v3375 = vunpack.c.l.b16 %v1963
    %v3376 = vunpack.c.h.b16 %v1963
    %v3377 = vunpack.c.l.b16 %v1964
    %v3378 = vunpack.c.h.b16 %v1964
    %v3379 = vunpack.c.l.b16 %v1965
    %v3380 = vunpack.c.h.b16 %v1965
    %v3381 = vunpack.c.l.b16 %v1966
    %v3382 = vunpack.c.h.b16 %v1966
    %v3383 = vunpack.c.l.b16 %v1967
    %v3384 = vunpack.c.h.b16 %v1967
    %v3385 = vunpack.c.l.b16 %v1968
    %v3386 = vunpack.c.h.b16 %v1968
    %v3387 = vunpack.c.l.b16 %v1969
    %v3388 = vunpack.c.h.b16 %v1969
    %v3389 = vunpack.c.l.b16 %v1970
    %v3390 = vunpack.c.h.b16 %v1970
    %v3391 = vunpack.c.l.b16 %v1971
    %v3392 = vunpack.c.h.b16 %v1971
    %v3393 = vunpack.c.l.b16 %v1972
    %v3394 = vunpack.c.h.b16 %v1972
    %v3395 = vunpack.c.l.b16 %v1973
    %v3396 = vunpack.c.h.b16 %v1973
    %v3397 = vunpack.c.l.b16 %v1974
    %v3398 = vunpack.c.h.b16 %v1974
    %v3399 = vunpack.c.l.b16 %v1975
    %v3400 = vunpack.c.h.b16 %v1975
    %v3401 = vunpack.c.l.b16 %v1976
    %v3402 = vunpack.c.h.b16 %v1976
    %v3403 = vunpack.c.l.b16 %v1977
    %v3404 = vunpack.c.h.b16 %v1977
    %v3405 = vunpack.c.l.b16 %v1978
    %v3406 = vunpack.c.h.b16 %v1978
    %v3407 = vunpack.c.l.b16 %v1979
    %v3408 = vunpack.c.h.b16 %v1979
    %v3409 = vunpack.c.l.b16 %v1980
    %v3410 = vunpack.c.h.b16 %v1980
    %v3411 = vunpack.c.l.b16 %v1981
    %v3412 = vunpack.c.h.b16 %v1981
    %v3413 = vunpack.c.l.b16 %v1982
    %v3414 = vunpack.c.h.b16 %v1982
    %v3415 = vunpack.c.l.b16 %v1983
    %v3416 = vunpack.c.h.b16 %v1983
    %v3417 = vunpack.c.l.b16 %v1984
    %v3418 = vunpack.c.h.b16 %v1984
    %v3419 = vunpack.c.l.b16 %v1985
    %v3420 = vunpack.c.h.b16 %v1985
    %v3421 = vunpack.c.l.b16 %v1986
    %v3422 = vunpack.c.h.b16 %v1986
    %v3423 = vunpack.c.l.b16 %v1987
    %v3424 = vunpack.c.h.b16 %v1987
    %v3425 = vunpack.c.l.b16 %v1988
    %v3426 = vunpack.c.h.b16 %v1988
    %v3427 = vunpack.c.l.b16 %v1989
    %v3428 = vunpack.c.h.b16 %v1989
    %v3429 = vunpack.c.l.b16 %v1990
    %v3430 = vunpack.c.h.b16 %v1990
    %v3431 = vunpack.c.l.b16 %v1991
    %v3432 = vunpack.c.h.b16 %v1991
    %v3433 = vunpack.c.l.b16 %v1992
    %v3434 = vunpack.c.h.b16 %v1992
    %v3435 = vunpack.c.l.b16 %v1993
    %v3436 = vunpack.c.h.b16 %v1993
    %v3437 = vunpack.c.l.b16 %v1994
    %v3438 = vunpack.c.h.b16 %v1994
    %v3439 = vunpack.c.l.b16 %v1995
    %v3440 = vunpack.c.h.b16 %v1995
    %v3441 = vunpack.c.l.b16 %v1996
    %v3442 = vunpack.c.h.b16 %v1996
    %v3443 = vunpack.c.l.b16 %v1997
    %v3444 = vunpack.c.h.b16 %v1997
    %v3445 = vunpack.c.l.b16 %v1998
    %v3446 = vunpack.c.h.b16 %v1998
    %v3447 = vunpack.c.l.b16 %v1999
    %v3448 = vunpack.c.h.b16 %v1999
    %v3449 = vunpack.c.l.b16 %v2000
    %v3450 = vunpack.c.h.b16 %v2000
    %v3451 = vunpack.c.l.b16 %v2001
    %v3452 = vunpack.c.h.b16 %v2001
    %v3453 = vunpack.c.l.b16 %v2002
    %v3454 = vunpack.c.h.b16 %v2002
    %v3455 = vunpack.c.l.b16 %v2003
    %v3456 = vunpack.c.h.b16 %v2003
    %v3457 = vunpack.c.l.b16 %v2004
    %v3458 = vunpack.c.h.b16 %v2004
    %v3459 = vunpack.c.l.b16 %v2005
    %v3460 = vunpack.c.h.b16 %v2005
    %v3461 = vunpack.c.l.b16 %v2006
    %v3462 = vunpack.c.h.b16 %v2006
    %v3463 = vunpack.c.l.b16 %v2007
    %v3464 = vunpack.c.h.b16 %v2007
    %v3465 = vunpack.c.l.b16 %v2008
    %v3466 = vunpack.c.h.b16 %v2008
    %v3467 = vunpack.c.l.b16 %v2009
    %v3468 = vunpack.c.h.b16 %v2009
    %v3469 = vunpack.c.l.b16 %v2010
    %v3470 = vunpack.c.h.b16 %v2010
    %v3471 = vunpack.c.l.b16 %v2011
    %v3472 = vunpack.c.h.b16 %v2011
    %v3473 = vunpack.c.l.b16 %v2012
    %v3474 = vunpack.c.h.b16 %v2012
    %v3475 = vunpack.c.l.b16 %v2013
    %v3476 = vunpack.c.h.b16 %v2013
    %v3477 = vunpack.c.l.b16 %v2014
    %v3478 = vunpack.c.h.b16 %v2014
    %v3479 = vunpack.c.l.b16 %v2015
    %v3480 = vunpack.c.h.b16 %v2015
    %v3481 = vunpack.c.l.b16 %v2016
    %v3482 = vunpack.c.h.b16 %v2016
    %v3483 = vunpack.c.l.b16 %v2017
    %v3484 = vunpack.c.h.b16 %v2017
    %v3485 = vunpack.c.l.b16 %v2018
    %v3486 = vunpack.c.h.b16 %v2018
    %v3487 = vunpack.c.l.b16 %v2019
    %v3488 = vunpack.c.h.b16 %v2019
    %v3489 = vunpack.c.l.b16 %v2020
    %v3490 = vunpack.c.h.b16 %v2020
    %v3491 = vunpack.c.l.b16 %v2021
    %v3492 = vunpack.c.h.b16 %v2021
    %v3493 = vunpack.c.l.b16 %v2022
    %v3494 = vunpack.c.h.b16 %v2022
    %v3495 = vunpack.c.l.b16 %v2023
    %v3496 = vunpack.c.h.b16 %v2023
    %v3497 = vunpack.c.l.b16 %v2024
    %v3498 = vunpack.c.h.b16 %v2024
    %v3499 = vunpack.c.l.b16 %v2025
    %v3500 = vunpack.c.h.b16 %v2025
    %v3501 = vunpack.c.l.b16 %v2026
    %v3502 = vunpack.c.h.b16 %v2026
    %v3503 = vunpack.c.l.b16 %v2027
    %v3504 = vunpack.c.h.b16 %v2027
    %v3505 = vunpack.c.l.b16 %v2028
    %v3506 = vunpack.c.h.b16 %v2028
    %v3507 = vunpack.c.l.b16 %v2029
    %v3508 = vunpack.c.h.b16 %v2029
    %v3509 = vunpack.c.l.b16 %v2030
    %v3510 = vunpack.c.h.b16 %v2030
    %v3511 = vunpack.c.l.b16 %v2031
    %v3512 = vunpack.c.h.b16 %v2031
    %v3513 = vunpack.c.l.b16 %v2032
    %v3514 = vunpack.c.h.b16 %v2032
    %v3515 = vunpack.c.l.b16 %v2033
    %v3516 = vunpack.c.h.b16 %v2033
    %v3517 = vunpack.c.l.b16 %v2034
    %v3518 = vunpack.c.h.b16 %v2034
    %v3519 = vunpack.c.l.b16 %v2035
    %v3520 = vunpack.c.h.b16 %v2035
    %v3521 = vunpack.c.l.b16 %v2036
    %v3522 = vunpack.c.h.b16 %v2036
    %v3523 = vunpack.c.l.b16 %v2037
    %v3524 = vunpack.c.h.b16 %v2037
    %v3525 = vunpack.c.l.b16 %v2038
    %v3526 = vunpack.c.h.b16 %v2038
    %v3527 = vunpack.c.l.b16 %v2039
    %v3528 = vunpack.c.h.b16 %v2039
    %v3529 = vunpack.c.l.b16 %v2040
    %v3530 = vunpack.c.h.b16 %v2040
    %v3531 = vunpack.c.l.b16 %v2041
    %v3532 = vunpack.c.h.b16 %v2041
    %v3533 = vunpack.c.l.b16 %v2042
    %v3534 = vunpack.c.h.b16 %v2042
    %v3535 = vunpack.c.l.b16 %v2043
    %v3536 = vunpack.c.h.b16 %v2043
    %v3537 = vunpack.c.l.b16 %v2044
    %v3538 = vunpack.c.h.b16 %v2044
    %v3539 = vunpack.c.l.b16 %v2045
    %v3540 = vunpack.c.h.b16 %v2045
    %v3541 = vunpack.c.l.b16 %v2046
    %v3542 = vunpack.c.h.b16 %v2046
    %v3543 = vunpack.c.l.b16 %v2047
    %v3544 = vunpack.c.h.b16 %v2047
    %v3545 = vunpack.c.l.b16 %v2048
    %v3546 = vunpack.c.h.b16 %v2048
    %v3547 = vunpack.c.l.b16 %v2049
    %v3548 = vunpack.c.h.b16 %v2049
    %v3549 = vunpack.c.l.b16 %v2050
    %v3550 = vunpack.c.h.b16 %v2050
    %v3551 = vunpack.c.l.b16 %v2051
    %v3552 = vunpack.c.h.b16 %v2051
    %v3553 = vunpack.c.l.b16 %v2052
    %v3554 = vunpack.c.h.b16 %v2052
    %v3555 = vunpack.c.l.b16 %v2053
    %v3556 = vunpack.c.h.b16 %v2053
    %v3557 = vunpack.c.l.b16 %v2054
    %v3558 = vunpack.c.h.b16 %v2054
    %v3559 = vunpack.c.l.b16 %v2055
    %v3560 = vunpack.c.h.b16 %v2055
    %v3561 = vunpack.c.l.b16 %v2056
    %v3562 = vunpack.c.h.b16 %v2056
    %v3563 = vunpack.c.l.b16 %v2057
    %v3564 = vunpack.c.h.b16 %v2057
    %v3565 = vunpack.c.l.b16 %v2058
    %v3566 = vunpack.c.h.b16 %v2058
    %v3567 = vunpack.c.l.b16 %v2059
    %v3568 = vunpack.c.h.b16 %v2059
    %v3569 = vunpack.c.l.b16 %v2060
    %v3570 = vunpack.c.h.b16 %v2060
    %v3571 = vunpack.c.l.b16 %v2061
    %v3572 = vunpack.c.h.b16 %v2061
    %v3573 = vunpack.c.l.b16 %v2062
    %v3574 = vunpack.c.h.b16 %v2062
    %v3575 = vunpack.c.l.b16 %v2063
    %v3576 = vunpack.c.h.b16 %v2063
    %v3577 = vunpack.c.l.b16 %v2064
    %v3578 = vunpack.c.h.b16 %v2064
    %v3579 = vunpack.c.l.b16 %v2065
    %v3580 = vunpack.c.h.b16 %v2065
    %v3581 = vunpack.c.l.b16 %v2066
    %v3582 = vunpack.c.h.b16 %v2066
    %v3583 = vunpack.c.l.b16 %v2067
    %v3584 = vunpack.c.h.b16 %v2067
    %v3585 = vunpack.c.l.b16 %v2068
    %v3586 = vunpack.c.h.b16 %v2068
    %v3587 = vunpack.c.l.b16 %v2069
    %v3588 = vunpack.c.h.b16 %v2069
    %v3589 = vunpack.c.l.b16 %v2070
    %v3590 = vunpack.c.h.b16 %v2070
    %v3591 = vunpack.c.l.b16 %v2071
    %v3592 = vunpack.c.h.b16 %v2071
    %v3593 = vunpack.c.l.b16 %v2072
    %v3594 = vunpack.c.h.b16 %v2072
    %v3595 = vunpack.c.l.b16 %v2073
    %v3596 = vunpack.c.h.b16 %v2073
    %v3597 = vunpack.c.l.b16 %v2074
    %v3598 = vunpack.c.h.b16 %v2074
    %v3599 = vunpack.c.l.b16 %v2075
    %v3600 = vunpack.c.h.b16 %v2075
    %v3601 = vunpack.c.l.b16 %v2076
    %v3602 = vunpack.c.h.b16 %v2076
    %v3603 = vunpack.c.l.b16 %v2077
    %v3604 = vunpack.c.h.b16 %v2077
    %v3605 = vunpack.c.l.b16 %v2078
    %v3606 = vunpack.c.h.b16 %v2078
    %v3607 = vunpack.c.l.b16 %v2079
    %v3608 = vunpack.c.h.b16 %v2079
    %v3609 = vunpack.c.l.b16 %v2080
    %v3610 = vunpack.c.h.b16 %v2080
    %v3611 = vunpack.c.l.b16 %v2081
    %v3612 = vunpack.c.h.b16 %v2081
    %v3613 = vunpack.c.l.b16 %v2082
    %v3614 = vunpack.c.h.b16 %v2082
    %v3615 = vunpack.c.l.b16 %v2083
    %v3616 = vunpack.c.h.b16 %v2083
    %v3617 = vunpack.c.l.b16 %v2084
    %v3618 = vunpack.c.h.b16 %v2084
    %v3619 = vunpack.c.l.b16 %v2085
    %v3620 = vunpack.c.h.b16 %v2085
    %v3621 = vunpack.c.l.b16 %v2086
    %v3622 = vunpack.c.h.b16 %v2086
    %v3623 = vunpack.c.l.b16 %v2087
    %v3624 = vunpack.c.h.b16 %v2087
    %v3625 = vunpack.c.l.b16 %v2088
    %v3626 = vunpack.c.h.b16 %v2088
    %v3627 = vunpack.c.l.b16 %v2089
    %v3628 = vunpack.c.h.b16 %v2089
    %v3629 = vunpack.c.l.b16 %v2090
    %v3630 = vunpack.c.h.b16 %v2090
    %v3631 = vunpack.c.l.b16 %v2091
    %v3632 = vunpack.c.h.b16 %v2091
    %v3633 = vunpack.c.l.b16 %v2092
    %v3634 = vunpack.c.h.b16 %v2092
    %v3635 = vunpack.c.l.b16 %v2093
    %v3636 = vunpack.c.h.b16 %v2093
    %v3637 = vunpack.c.l.b16 %v2094
    %v3638 = vunpack.c.h.b16 %v2094
    %v3639 = vunpack.c.l.b16 %v2095
    %v3640 = vunpack.c.h.b16 %v2095
    %v3641 = vunpack.c.l.b16 %v2096
    %v3642 = vunpack.c.h.b16 %v2096
    %v3643 = vpack.c.b16 %v2623, %v2619
    %v3644 = vpack.c.b16 %v2624, %v2620
    %v3645 = vpack.c.b16 %v2625, %v2621
    %v3646 = vpack.c.b16 %v2626, %v2622
    %v3647 = vpack.c.b16 %v2631, %v2627
    %v3648 = vpack.c.b16 %v2632, %v2628
    %v3649 = vpack.c.b16 %v2633, %v2629
    %v3650 = vpack.c.b16 %v2634, %v2630
    %v3651 = vpack.c.b16 %v2639, %v2635
    %v3652 = vpack.c.b16 %v2640, %v2636
    %v3653 = vpack.c.b16 %v2641, %v2637
    %v3654 = vpack.c.b16 %v2642, %v2638
    %v3655 = vpack.c.b16 %v2647, %v2643
    %v3656 = vpack.c.b16 %v2648, %v2644
    %v3657 = vpack.c.b16 %v2649, %v2645
    %v3658 = vpack.c.b16 %v2650, %v2646
    %v3659 = vpack.c.b16 %v2655, %v2651
    %v3660 = vpack.c.b16 %v2656, %v2652
    %v3661 = vpack.c.b16 %v2657, %v2653
    %v3662 = vpack.c.b16 %v2658, %v2654
    %v3663 = vpack.c.b16 %v2663, %v2659
    %v3664 = vpack.c.b16 %v2664, %v2660
    %v3665 = vpack.c.b16 %v2665, %v2661
    %v3666 = vpack.c.b16 %v2666, %v2662
    %v3667 = vpack.c.b16 %v2671, %v2667
    %v3668 = vpack.c.b16 %v2672, %v2668
    %v3669 = vpack.c.b16 %v2673, %v2669
    %v3670 = vpack.c.b16 %v2674, %v2670
    %v3671 = vpack.c.b16 %v2679, %v2675
    %v3672 = vpack.c.b16 %v2680, %v2676
    %v3673 = vpack.c.b16 %v2681, %v2677
    %v3674 = vpack.c.b16 %v2682, %v2678
    %v3675 = vpack.c.b16 %v2687, %v2683
    %v3676 = vpack.c.b16 %v2688, %v2684
    %v3677 = vpack.c.b16 %v2689, %v2685
    %v3678 = vpack.c.b16 %v2690, %v2686
    %v3679 = vpack.c.b16 %v2695, %v2691
    %v3680 = vpack.c.b16 %v2696, %v2692
    %v3681 = vpack.c.b16 %v2697, %v2693
    %v3682 = vpack.c.b16 %v2698, %v2694
    %v3683 = vpack.c.b16 %v2703, %v2699
    %v3684 = vpack.c.b16 %v2704, %v2700
    %v3685 = vpack.c.b16 %v2705, %v2701
    %v3686 = vpack.c.b16 %v2706, %v2702
    %v3687 = vpack.c.b16 %v2711, %v2707
    %v3688 = vpack.c.b16 %v2712, %v2708
    %v3689 = vpack.c.b16 %v2713, %v2709
    %v3690 = vpack.c.b16 %v2714, %v2710
    %v3691 = vpack.c.b16 %v2719, %v2715
    %v3692 = vpack.c.b16 %v2720, %v2716
    %v3693 = vpack.c.b16 %v2721, %v2717
    %v3694 = vpack.c.b16 %v2722, %v2718
    %v3695 = vpack.c.b16 %v2727, %v2723
    %v3696 = vpack.c.b16 %v2728, %v2724
    %v3697 = vpack.c.b16 %v2729, %v2725
    %v3698 = vpack.c.b16 %v2730, %v2726
    %v3699 = vpack.c.b16 %v2735, %v2731
    %v3700 = vpack.c.b16 %v2736, %v2732
    %v3701 = vpack.c.b16 %v2737, %v2733
    %v3702 = vpack.c.b16 %v2738, %v2734
    %v3703 = vpack.c.b16 %v2743, %v2739
    %v3704 = vpack.c.b16 %v2744, %v2740
    %v3705 = vpack.c.b16 %v2745, %v2741
    %v3706 = vpack.c.b16 %v2746, %v2742
    %v3707 = vpack.c.b16 %v2751, %v2747
    %v3708 = vpack.c.b16 %v2752, %v2748
    %v3709 = vpack.c.b16 %v2753, %v2749
    %v3710 = vpack.c.b16 %v2754, %v2750
    %v3711 = vpack.c.b16 %v2759, %v2755
    %v3712 = vpack.c.b16 %v2760, %v2756
    %v3713 = vpack.c.b16 %v2761, %v2757
    %v3714 = vpack.c.b16 %v2762, %v2758
    %v3715 = vpack.c.b16 %v2767, %v2763
    %v3716 = vpack.c.b16 %v2768, %v2764
    %v3717 = vpack.c.b16 %v2769, %v2765
    %v3718 = vpack.c.b16 %v2770, %v2766
    %v3719 = vpack.c.b16 %v2775, %v2771
    %v3720 = vpack.c.b16 %v2776, %v2772
    %v3721 = vpack.c.b16 %v2777, %v2773
    %v3722 = vpack.c.b16 %v2778, %v2774
    %v3723 = vpack.c.b16 %v2783, %v2779
    %v3724 = vpack.c.b16 %v2784, %v2780
    %v3725 = vpack.c.b16 %v2785, %v2781
    %v3726 = vpack.c.b16 %v2786, %v2782
    %v3727 = vpack.c.b16 %v2791, %v2787
    %v3728 = vpack.c.b16 %v2792, %v2788
    %v3729 = vpack.c.b16 %v2793, %v2789
    %v3730 = vpack.c.b16 %v2794, %v2790
    %v3731 = vpack.c.b16 %v2799, %v2795
    %v3732 = vpack.c.b16 %v2800, %v2796
    %v3733 = vpack.c.b16 %v2801, %v2797
    %v3734 = vpack.c.b16 %v2802, %v2798
    %v3735 = vpack.c.b16 %v2807, %v2803
    %v3736 = vpack.c.b16 %v2808, %v2804
    %v3737 = vpack.c.b16 %v2809, %v2805
    %v3738 = vpack.c.b16 %v2810, %v2806
    %v3739 = vpack.c.b16 %v2815, %v2811
    %v3740 = vpack.c.b16 %v2816, %v2812
    %v3741 = vpack.c.b16 %v2817, %v2813
    %v3742 = vpack.c.b16 %v2818, %v2814
    %v3743 = vpack.c.b16 %v2823, %v2819
    %v3744 = vpack.c.b16 %v2824, %v2820
    %v3745 = vpack.c.b16 %v2825, %v2821
    %v3746 = vpack.c.b16 %v2826, %v2822
    %v3747 = vpack.c.b16 %v2831, %v2827
    %v3748 = vpack.c.b16 %v2832, %v2828
    %v3749 = vpack.c.b16 %v2833, %v2829
    %v3750 = vpack.c.b16 %v2834, %v2830
    %v3751 = vpack.c.b16 %v2839, %v2835
    %v3752 = vpack.c.b16 %v2840, %v2836
    %v3753 = vpack.c.b16 %v2841, %v2837
    %v3754 = vpack.c.b16 %v2842, %v2838
    %v3755 = vpack.c.b16 %v2847, %v2843
    %v3756 = vpack.c.b16 %v2848, %v2844
    %v3757 = vpack.c.b16 %v2849, %v2845
    %v3758 = vpack.c.b16 %v2850, %v2846
    %v3759 = vpack.c.b16 %v2855, %v2851
    %v3760 = vpack.c.b16 %v2856, %v2852
    %v3761 = vpack.c.b16 %v2857, %v2853
    %v3762 = vpack.c.b16 %v2858, %v2854
    %v3763 = vpack.c.b16 %v2863, %v2859
    %v3764 = vpack.c.b16 %v2864, %v2860
    %v3765 = vpack.c.b16 %v2865, %v2861
    %v3766 = vpack.c.b16 %v2866, %v2862
    %v3767 = vpack.c.b16 %v2871, %v2867
    %v3768 = vpack.c.b16 %v2872, %v2868
    %v3769 = vpack.c.b16 %v2873, %v2869
    %v3770 = vpack.c.b16 %v2874, %v2870
    %v3771 = vpack.c.b16 %v2879, %v2875
    %v3772 = vpack.c.b16 %v2880, %v2876
    %v3773 = vpack.c.b16 %v2881, %v2877
    %v3774 = vpack.c.b16 %v2882, %v2878
    %v3775 = vpack.c.b16 %v2887, %v2883
    %v3776 = vpack.c.b16 %v2888, %v2884
    %v3777 = vpack.c.b16 %v2889, %v2885
    %v3778 = vpack.c.b16 %v2890, %v2886
    %v3779 = vpack.c.b16 %v2895, %v2891
    %v3780 = vpack.c.b16 %v2896, %v2892
    %v3781 = vpack.c.b16 %v2897, %v2893
    %v3782 = vpack.c.b16 %v2898, %v2894
    %v3783 = vpack.c.b16 %v2903, %v2899
    %v3784 = vpack.c.b16 %v2904, %v2900
    %v3785 = vpack.c.b16 %v2905, %v2901
    %v3786 = vpack.c.b16 %v2906, %v2902
    %v3787 = vpack.c.b16 %v2911, %v2907
    %v3788 = vpack.c.b16 %v2912, %v2908
    %v3789 = vpack.c.b16 %v2913, %v2909
    %v3790 = vpack.c.b16 %v2914, %v2910
    %v3791 = vpack.c.b16 %v2919, %v2915
    %v3792 = vpack.c.b16 %v2920, %v2916
    %v3793 = vpack.c.b16 %v2921, %v2917
    %v3794 = vpack.c.b16 %v2922, %v2918
    %v3795 = vpack.c.b16 %v2927, %v2923
    %v3796 = vpack.c.b16 %v2928, %v2924
    %v3797 = vpack.c.b16 %v2929, %v2925
    %v3798 = vpack.c.b16 %v2930, %v2926
    %v3799 = vpack.c.b16 %v2935, %v2931
    %v3800 = vpack.c.b16 %v2936, %v2932
    %v3801 = vpack.c.b16 %v2937, %v2933
    %v3802 = vpack.c.b16 %v2938, %v2934
    %v3803 = vpack.c.b16 %v2943, %v2939
    %v3804 = vpack.c.b16 %v2944, %v2940
    %v3805 = vpack.c.b16 %v2945, %v2941
    %v3806 = vpack.c.b16 %v2946, %v2942
    %v3807 = vpack.c.b16 %v2951, %v2947
    %v3808 = vpack.c.b16 %v2952, %v2948
    %v3809 = vpack.c.b16 %v2953, %v2949
    %v3810 = vpack.c.b16 %v2954, %v2950
    %v3811 = vpack.c.b16 %v2959, %v2955
    %v3812 = vpack.c.b16 %v2960, %v2956
    %v3813 = vpack.c.b16 %v2961, %v2957
    %v3814 = vpack.c.b16 %v2962, %v2958
    %v3815 = vpack.c.b16 %v2967, %v2963
    %v3816 = vpack.c.b16 %v2968, %v2964
    %v3817 = vpack.c.b16 %v2969, %v2965
    %v3818 = vpack.c.b16 %v2970, %v2966
    %v3819 = vpack.c.b16 %v2975, %v2971
    %v3820 = vpack.c.b16 %v2976, %v2972
    %v3821 = vpack.c.b16 %v2977, %v2973
    %v3822 = vpack.c.b16 %v2978, %v2974
    %v3823 = vpack.c.b16 %v2983, %v2979
    %v3824 = vpack.c.b16 %v2984, %v2980
    %v3825 = vpack.c.b16 %v2985, %v2981
    %v3826 = vpack.c.b16 %v2986, %v2982
    %v3827 = vpack.c.b16 %v2991, %v2987
    %v3828 = vpack.c.b16 %v2992, %v2988
    %v3829 = vpack.c.b16 %v2993, %v2989
    %v3830 = vpack.c.b16 %v2994, %v2990
    %v3831 = vpack.c.b16 %v2999, %v2995
    %v3832 = vpack.c.b16 %v3000, %v2996
    %v3833 = vpack.c.b16 %v3001, %v2997
    %v3834 = vpack.c.b16 %v3002, %v2998
    %v3835 = vpack.c.b16 %v3007, %v3003
    %v3836 = vpack.c.b16 %v3008, %v3004
    %v3837 = vpack.c.b16 %v3009, %v3005
    %v3838 = vpack.c.b16 %v3010, %v3006
    %v3839 = vpack.c.b16 %v3015, %v3011
    %v3840 = vpack.c.b16 %v3016, %v3012
    %v3841 = vpack.c.b16 %v3017, %v3013
    %v3842 = vpack.c.b16 %v3018, %v3014
    %v3843 = vpack.c.b16 %v3023, %v3019
    %v3844 = vpack.c.b16 %v3024, %v3020
    %v3845 = vpack.c.b16 %v3025, %v3021
    %v3846 = vpack.c.b16 %v3026, %v3022
    %v3847 = vpack.c.b16 %v3031, %v3027
    %v3848 = vpack.c.b16 %v3032, %v3028
    %v3849 = vpack.c.b16 %v3033, %v3029
    %v3850 = vpack.c.b16 %v3034, %v3030
    %v3851 = vpack.c.b16 %v3039, %v3035
    %v3852 = vpack.c.b16 %v3040, %v3036
    %v3853 = vpack.c.b16 %v3041, %v3037
    %v3854 = vpack.c.b16 %v3042, %v3038
    %v3855 = vpack.c.b16 %v3047, %v3043
    %v3856 = vpack.c.b16 %v3048, %v3044
    %v3857 = vpack.c.b16 %v3049, %v3045
    %v3858 = vpack.c.b16 %v3050, %v3046
    %v3859 = vpack.c.b16 %v3055, %v3051
    %v3860 = vpack.c.b16 %v3056, %v3052
    %v3861 = vpack.c.b16 %v3057, %v3053
    %v3862 = vpack.c.b16 %v3058, %v3054
    %v3863 = vpack.c.b16 %v3063, %v3059
    %v3864 = vpack.c.b16 %v3064, %v3060
    %v3865 = vpack.c.b16 %v3065, %v3061
    %v3866 = vpack.c.b16 %v3066, %v3062
    %v3867 = vpack.c.b16 %v3071, %v3067
    %v3868 = vpack.c.b16 %v3072, %v3068
    %v3869 = vpack.c.b16 %v3073, %v3069
    %v3870 = vpack.c.b16 %v3074, %v3070
    %v3871 = vpack.c.b16 %v3079, %v3075
    %v3872 = vpack.c.b16 %v3080, %v3076
    %v3873 = vpack.c.b16 %v3081, %v3077
    %v3874 = vpack.c.b16 %v3082, %v3078
    %v3875 = vpack.c.b16 %v3087, %v3083
    %v3876 = vpack.c.b16 %v3088, %v3084
    %v3877 = vpack.c.b16 %v3089, %v3085
    %v3878 = vpack.c.b16 %v3090, %v3086
    %v3879 = vpack.c.b16 %v3095, %v3091
    %v3880 = vpack.c.b16 %v3096, %v3092
    %v3881 = vpack.c.b16 %v3097, %v3093
    %v3882 = vpack.c.b16 %v3098, %v3094
    %v3883 = vpack.c.b16 %v3103, %v3099
    %v3884 = vpack.c.b16 %v3104, %v3100
    %v3885 = vpack.c.b16 %v3105, %v3101
    %v3886 = vpack.c.b16 %v3106, %v3102
    %v3887 = vpack.c.b16 %v3111, %v3107
    %v3888 = vpack.c.b16 %v3112, %v3108
    %v3889 = vpack.c.b16 %v3113, %v3109
    %v3890 = vpack.c.b16 %v3114, %v3110
    %v3891 = vpack.c.b16 %v3119, %v3115
    %v3892 = vpack.c.b16 %v3120, %v3116
    %v3893 = vpack.c.b16 %v3121, %v3117
    %v3894 = vpack.c.b16 %v3122, %v3118
    %v3895 = vpack.c.b16 %v3127, %v3123
    %v3896 = vpack.c.b16 %v3128, %v3124
    %v3897 = vpack.c.b16 %v3129, %v3125
    %v3898 = vpack.c.b16 %v3130, %v3126
    %v3899 = vpack.c.b16 %v3135, %v3131
    %v3900 = vpack.c.b16 %v3136, %v3132
    %v3901 = vpack.c.b16 %v3137, %v3133
    %v3902 = vpack.c.b16 %v3138, %v3134
    %v3903 = vpack.c.b16 %v3143, %v3139
    %v3904 = vpack.c.b16 %v3144, %v3140
    %v3905 = vpack.c.b16 %v3145, %v3141
    %v3906 = vpack.c.b16 %v3146, %v3142
    %v3907 = vpack.c.b16 %v3151, %v3147
    %v3908 = vpack.c.b16 %v3152, %v3148
    %v3909 = vpack.c.b16 %v3153, %v3149
    %v3910 = vpack.c.b16 %v3154, %v3150
    %v3911 = vpack.c.b16 %v3159, %v3155
    %v3912 = vpack.c.b16 %v3160, %v3156
    %v3913 = vpack.c.b16 %v3161, %v3157
    %v3914 = vpack.c.b16 %v3162, %v3158
    %v3915 = vpack.c.b16 %v3167, %v3163
    %v3916 = vpack.c.b16 %v3168, %v3164
    %v3917 = vpack.c.b16 %v3169, %v3165
    %v3918 = vpack.c.b16 %v3170, %v3166
    %v3919 = vpack.c.b16 %v3175, %v3171
    %v3920 = vpack.c.b16 %v3176, %v3172
    %v3921 = vpack.c.b16 %v3177, %v3173
    %v3922 = vpack.c.b16 %v3178, %v3174
    %v3923 = vpack.c.b16 %v3183, %v3179
    %v3924 = vpack.c.b16 %v3184, %v3180
    %v3925 = vpack.c.b16 %v3185, %v3181
    %v3926 = vpack.c.b16 %v3186, %v3182
    %v3927 = vpack.c.b16 %v3191, %v3187
    %v3928 = vpack.c.b16 %v3192, %v3188
    %v3929 = vpack.c.b16 %v3193, %v3189
    %v3930 = vpack.c.b16 %v3194, %v3190
    %v3931 = vpack.c.b16 %v3199, %v3195
    %v3932 = vpack.c.b16 %v3200, %v3196
    %v3933 = vpack.c.b16 %v3201, %v3197
    %v3934 = vpack.c.b16 %v3202, %v3198
    %v3935 = vpack.c.b16 %v3207, %v3203
    %v3936 = vpack.c.b16 %v3208, %v3204
    %v3937 = vpack.c.b16 %v3209, %v3205
    %v3938 = vpack.c.b16 %v3210, %v3206
    %v3939 = vpack.c.b16 %v3215, %v3211
    %v3940 = vpack.c.b16 %v3216, %v3212
    %v3941 = vpack.c.b16 %v3217, %v3213
    %v3942 = vpack.c.b16 %v3218, %v3214
    %v3943 = vpack.c.b16 %v3223, %v3219
    %v3944 = vpack.c.b16 %v3224, %v3220
    %v3945 = vpack.c.b16 %v3225, %v3221
    %v3946 = vpack.c.b16 %v3226, %v3222
    %v3947 = vpack.c.b16 %v3231, %v3227
    %v3948 = vpack.c.b16 %v3232, %v3228
    %v3949 = vpack.c.b16 %v3233, %v3229
    %v3950 = vpack.c.b16 %v3234, %v3230
    %v3951 = vpack.c.b16 %v3239, %v3235
    %v3952 = vpack.c.b16 %v3240, %v3236
    %v3953 = vpack.c.b16 %v3241, %v3237
    %v3954 = vpack.c.b16 %v3242, %v3238
    %v3955 = vpack.c.b16 %v3247, %v3243
    %v3956 = vpack.c.b16 %v3248, %v3244
    %v3957 = vpack.c.b16 %v3249, %v3245
    %v3958 = vpack.c.b16 %v3250, %v3246
    %v3959 = vpack.c.b16 %v3255, %v3251
    %v3960 = vpack.c.b16 %v3256, %v3252
    %v3961 = vpack.c.b16 %v3257, %v3253
    %v3962 = vpack.c.b16 %v3258, %v3254
    %v3963 = vpack.c.b16 %v3263, %v3259
    %v3964 = vpack.c.b16 %v3264, %v3260
    %v3965 = vpack.c.b16 %v3265, %v3261
    %v3966 = vpack.c.b16 %v3266, %v3262
    %v3967 = vpack.c.b16 %v3271, %v3267
    %v3968 = vpack.c.b16 %v3272, %v3268
    %v3969 = vpack.c.b16 %v3273, %v3269
    %v3970 = vpack.c.b16 %v3274, %v3270
    %v3971 = vpack.c.b16 %v3279, %v3275
    %v3972 = vpack.c.b16 %v3280, %v3276
    %v3973 = vpack.c.b16 %v3281, %v3277
    %v3974 = vpack.c.b16 %v3282, %v3278
    %v3975 = vpack.c.b16 %v3287, %v3283
    %v3976 = vpack.c.b16 %v3288, %v3284
    %v3977 = vpack.c.b16 %v3289, %v3285
    %v3978 = vpack.c.b16 %v3290, %v3286
    %v3979 = vpack.c.b16 %v3295, %v3291
    %v3980 = vpack.c.b16 %v3296, %v3292
    %v3981 = vpack.c.b16 %v3297, %v3293
    %v3982 = vpack.c.b16 %v3298, %v3294
    %v3983 = vpack.c.b16 %v3303, %v3299
    %v3984 = vpack.c.b16 %v3304, %v3300
    %v3985 = vpack.c.b16 %v3305, %v3301
    %v3986 = vpack.c.b16 %v3306, %v3302
    %v3987 = vpack.c.b16 %v3311, %v3307
    %v3988 = vpack.c.b16 %v3312, %v3308
    %v3989 = vpack.c.b16 %v3313, %v3309
    %v3990 = vpack.c.b16 %v3314, %v3310
    %v3991 = vpack.c.b16 %v3319, %v3315
    %v3992 = vpack.c.b16 %v3320, %v3316
    %v3993 = vpack.c.b16 %v3321, %v3317
    %v3994 = vpack.c.b16 %v3322, %v3318
    %v3995 = vpack.c.b16 %v3327, %v3323
    %v3996 = vpack.c.b16 %v3328, %v3324
    %v3997 = vpack.c.b16 %v3329, %v3325
    %v3998 = vpack.c.b16 %v3330, %v3326
    %v3999 = vpack.c.b16 %v3335, %v3331
    %v4000 = vpack.c.b16 %v3336, %v3332
    %v4001 = vpack.c.b16 %v3337, %v3333
    %v4002 = vpack.c.b16 %v3338, %v3334
    %v4003 = vpack.c.b16 %v3343, %v3339
    %v4004 = vpack.c.b16 %v3344, %v3340
    %v4005 = vpack.c.b16 %v3345, %v3341
    %v4006 = vpack.c.b16 %v3346, %v3342
    %v4007 = vpack.c.b16 %v3351, %v3347
    %v4008 = vpack.c.b16 %v3352, %v3348
    %v4009 = vpack.c.b16 %v3353, %v3349
    %v4010 = vpack.c.b16 %v3354, %v3350
    %v4011 = vpack.c.b16 %v3359, %v3355
    %v4012 = vpack.c.b16 %v3360, %v3356
    %v4013 = vpack.c.b16 %v3361, %v3357
    %v4014 = vpack.c.b16 %v3362, %v3358
    %v4015 = vpack.c.b16 %v3367, %v3363
    %v4016 = vpack.c.b16 %v3368, %v3364
    %v4017 = vpack.c.b16 %v3369, %v3365
    %v4018 = vpack.c.b16 %v3370, %v3366
    %v4019 = vpack.c.b16 %v3375, %v3371
    %v4020 = vpack.c.b16 %v3376, %v3372
    %v4021 = vpack.c.b16 %v3377, %v3373
    %v4022 = vpack.c.b16 %v3378, %v3374
    %v4023 = vpack.c.b16 %v3383, %v3379
    %v4024 = vpack.c.b16 %v3384, %v3380
    %v4025 = vpack.c.b16 %v3385, %v3381
    %v4026 = vpack.c.b16 %v3386, %v3382
    %v4027 = vpack.c.b16 %v3391, %v3387
    %v4028 = vpack.c.b16 %v3392, %v3388
    %v4029 = vpack.c.b16 %v3393, %v3389
    %v4030 = vpack.c.b16 %v3394, %v3390
    %v4031 = vpack.c.b16 %v3399, %v3395
    %v4032 = vpack.c.b16 %v3400, %v3396
    %v4033 = vpack.c.b16 %v3401, %v3397
    %v4034 = vpack.c.b16 %v3402, %v3398
    %v4035 = vpack.c.b16 %v3407, %v3403
    %v4036 = vpack.c.b16 %v3408, %v3404
    %v4037 = vpack.c.b16 %v3409, %v3405
    %v4038 = vpack.c.b16 %v3410, %v3406
    %v4039 = vpack.c.b16 %v3415, %v3411
    %v4040 = vpack.c.b16 %v3416, %v3412
    %v4041 = vpack.c.b16 %v3417, %v3413
    %v4042 = vpack.c.b16 %v3418, %v3414
    %v4043 = vpack.c.b16 %v3423, %v3419
    %v4044 = vpack.c.b16 %v3424, %v3420
    %v4045 = vpack.c.b16 %v3425, %v3421
    %v4046 = vpack.c.b16 %v3426, %v3422
    %v4047 = vpack.c.b16 %v3431, %v3427
    %v4048 = vpack.c.b16 %v3432, %v3428
    %v4049 = vpack.c.b16 %v3433, %v3429
    %v4050 = vpack.c.b16 %v3434, %v3430
    %v4051 = vpack.c.b16 %v3439, %v3435
    %v4052 = vpack.c.b16 %v3440, %v3436
    %v4053 = vpack.c.b16 %v3441, %v3437
    %v4054 = vpack.c.b16 %v3442, %v3438
    %v4055 = vpack.c.b16 %v3447, %v3443
    %v4056 = vpack.c.b16 %v3448, %v3444
    %v4057 = vpack.c.b16 %v3449, %v3445
    %v4058 = vpack.c.b16 %v3450, %v3446
    %v4059 = vpack.c.b16 %v3455, %v3451
    %v4060 = vpack.c.b16 %v3456, %v3452
    %v4061 = vpack.c.b16 %v3457, %v3453
    %v4062 = vpack.c.b16 %v3458, %v3454
    %v4063 = vpack.c.b16 %v3463, %v3459
    %v4064 = vpack.c.b16 %v3464, %v3460
    %v4065 = vpack.c.b16 %v3465, %v3461
    %v4066 = vpack.c.b16 %v3466, %v3462
    %v4067 = vpack.c.b16 %v3471, %v3467
    %v4068 = vpack.c.b16 %v3472, %v3468
    %v4069 = vpack.c.b16 %v3473, %v3469
    %v4070 = vpack.c.b16 %v3474, %v3470
    %v4071 = vpack.c.b16 %v3479, %v3475
    %v4072 = vpack.c.b16 %v3480, %v3476
    %v4073 = vpack.c.b16 %v3481, %v3477
    %v4074 = vpack.c.b16 %v3482, %v3478
    %v4075 = vpack.c.b16 %v3487, %v3483
    %v4076 = vpack.c.b16 %v3488, %v3484
    %v4077 = vpack.c.b16 %v3489, %v3485
    %v4078 = vpack.c.b16 %v3490, %v3486
    %v4079 = vpack.c.b16 %v3495, %v3491
    %v4080 = vpack.c.b16 %v3496, %v3492
    %v4081 = vpack.c.b16 %v3497, %v3493
    %v4082 = vpack.c.b16 %v3498, %v3494
    %v4083 = vpack.c.b16 %v3503, %v3499
    %v4084 = vpack.c.b16 %v3504, %v3500
    %v4085 = vpack.c.b16 %v3505, %v3501
    %v4086 = vpack.c.b16 %v3506, %v3502
    %v4087 = vpack.c.b16 %v3511, %v3507
    %v4088 = vpack.c.b16 %v3512, %v3508
    %v4089 = vpack.c.b16 %v3513, %v3509
    %v4090 = vpack.c.b16 %v3514, %v3510
    %v4091 = vpack.c.b16 %v3519, %v3515
    %v4092 = vpack.c.b16 %v3520, %v3516
    %v4093 = vpack.c.b16 %v3521, %v3517
    %v4094 = vpack.c.b16 %v3522, %v3518
    %v4095 = vpack.c.b16 %v3527, %v3523
    %v4096 = vpack.c.b16 %v3528, %v3524
    %v4097 = vpack.c.b16 %v3529, %v3525
    %v4098 = vpack.c.b16 %v3530, %v3526
    %v4099 = vpack.c.b16 %v3535, %v3531
    %v4100 = vpack.c.b16 %v3536, %v3532
    %v4101 = vpack.c.b16 %v3537, %v3533
    %v4102 = vpack.c.b16 %v3538, %v3534
    %v4103 = vpack.c.b16 %v3543, %v3539
    %v4104 = vpack.c.b16 %v3544, %v3540
    %v4105 = vpack.c.b16 %v3545, %v3541
    %v4106 = vpack.c.b16 %v3546, %v3542
    %v4107 = vpack.c.b16 %v3551, %v3547
    %v4108 = vpack.c.b16 %v3552, %v3548
    %v4109 = vpack.c.b16 %v3553, %v3549
    %v4110 = vpack.c.b16 %v3554, %v3550
    %v4111 = vpack.c.b16 %v3559, %v3555
    %v4112 = vpack.c.b16 %v3560, %v3556
    %v4113 = vpack.c.b16 %v3561, %v3557
    %v4114 = vpack.c.b16 %v3562, %v3558
    %v4115 = vpack.c.b16 %v3567, %v3563
    %v4116 = vpack.c.b16 %v3568, %v3564
    %v4117 = vpack.c.b16 %v3569, %v3565
    %v4118 = vpack.c.b16 %v3570, %v3566
    %v4119 = vpack.c.b16 %v3575, %v3571
    %v4120 = vpack.c.b16 %v3576, %v3572
    %v4121 = vpack.c.b16 %v3577, %v3573
    %v4122 = vpack.c.b16 %v3578, %v3574
    %v4123 = vpack.c.b16 %v3583, %v3579
    %v4124 = vpack.c.b16 %v3584, %v3580
    %v4125 = vpack.c.b16 %v3585, %v3581
    %v4126 = vpack.c.b16 %v3586, %v3582
    %v4127 = vpack.c.b16 %v3591, %v3587
    %v4128 = vpack.c.b16 %v3592, %v3588
    %v4129 = vpack.c.b16 %v3593, %v3589
    %v4130 = vpack.c.b16 %v3594, %v3590
    %v4131 = vpack.c.b16 %v3599, %v3595
    %v4132 = vpack.c.b16 %v3600, %v3596
    %v4133 = vpack.c.b16 %v3601, %v3597
    %v4134 = vpack.c.b16 %v3602, %v3598
    %v4135 = vpack.c.b16 %v3607, %v3603
    %v4136 = vpack.c.b16 %v3608, %v3604
    %v4137 = vpack.c.b16 %v3609, %v3605
    %v4138 = vpack.c.b16 %v3610, %v3606
    %v4139 = vpack.c.b16 %v3615, %v3611
    %v4140 = vpack.c.b16 %v3616, %v3612
    %v4141 = vpack.c.b16 %v3617, %v3613
    %v4142 = vpack.c.b16 %v3618, %v3614
    %v4143 = vpack.c.b16 %v3623, %v3619
    %v4144 = vpack.c.b16 %v3624, %v3620
    %v4145 = vpack.c.b16 %v3625, %v3621
    %v4146 = vpack.c.b16 %v3626, %v3622
    %v4147 = vpack.c.b16 %v3631, %v3627
    %v4148 = vpack.c.b16 %v3632, %v3628
    %v4149 = vpack.c.b16 %v3633, %v3629
    %v4150 = vpack.c.b16 %v3634, %v3630
    %v4151 = vpack.c.b16 %v3639, %v3635
    %v4152 = vpack.c.b16 %v3640, %v3636
    %v4153 = vpack.c.b16 %v3641, %v3637
    %v4154 = vpack.c.b16 %v3642, %v3638
    %4667 = vmatpush.bf16.msra.mxu0 %v3671
    %4668 = vmatpush.bf16.msra.mxu0 %v3667
    %4669 = vmatpush.bf16.msra.mxu0 %v3663
    %4670 = vmatpush.bf16.msra.mxu0 %v3659
    %4671 = vmatpush.bf16.msra.mxu0 %v3655
    %4672 = vmatpush.bf16.msra.mxu0 %v3651
    %4673 = vmatpush.bf16.msra.mxu0 %v3647
    %4674 = vmatpush.bf16.msra.mxu0 %v3643
    %4675 = vmatmul.bf16.gmra.mxu0 %v1569
    %v4676 = vpop.f32.mrf.mxu0
    %v4677 = vadd.f32 %v2099, %v4676
    %v4678 = vpop.f32.mrf.mxu0
    %v4679 = vadd.f32 %v2099, %v4678
    %4680 = vdwg.mxu0
    %4681 = vmatpush.bf16.msra.mxu0 %v3703
    %4682 = vmatpush.bf16.msra.mxu0 %v3699
    %4683 = vmatpush.bf16.msra.mxu0 %v3695
    %4684 = vmatpush.bf16.msra.mxu0 %v3691
    %4685 = vmatpush.bf16.msra.mxu0 %v3687
    %4686 = vmatpush.bf16.msra.mxu0 %v3683
    %4687 = vmatpush.bf16.msra.mxu0 %v3679
    %4688 = vmatpush.bf16.msra.mxu0 %v3675
    %4689 = vmatmul.bf16.gmra.mxu0 %v1570
    %v4690 = vpop.f32.mrf.mxu0
    %v4691 = vadd.f32 %v4677, %v4690
    %v4692 = vpop.f32.mrf.mxu0
    %v4693 = vadd.f32 %v4679, %v4692
    %4694 = vdwg.mxu0
    %4695 = vmatpush.bf16.msra.mxu0 %v3735
    %4696 = vmatpush.bf16.msra.mxu0 %v3731
    %4697 = vmatpush.bf16.msra.mxu0 %v3727
    %4698 = vmatpush.bf16.msra.mxu0 %v3723
    %4699 = vmatpush.bf16.msra.mxu0 %v3719
    %4700 = vmatpush.bf16.msra.mxu0 %v3715
    %4701 = vmatpush.bf16.msra.mxu0 %v3711
    %4702 = vmatpush.bf16.msra.mxu0 %v3707
    %4703 = vmatmul.bf16.gmra.mxu0 %v1571
    %v4704 = vpop.f32.mrf.mxu0
    %v4705 = vadd.f32 %v4691, %v4704
    %v4706 = vpop.f32.mrf.mxu0
    %v4707 = vadd.f32 %v4693, %v4706
    %4708 = vdwg.mxu0
    %4709 = vmatpush.bf16.msra.mxu0 %v3767
    %4710 = vmatpush.bf16.msra.mxu0 %v3763
    %4711 = vmatpush.bf16.msra.mxu0 %v3759
    %4712 = vmatpush.bf16.msra.mxu0 %v3755
    %4713 = vmatpush.bf16.msra.mxu0 %v3751
    %4714 = vmatpush.bf16.msra.mxu0 %v3747
    %4715 = vmatpush.bf16.msra.mxu0 %v3743
    %4716 = vmatpush.bf16.msra.mxu0 %v3739
    %4717 = vmatmul.bf16.gmra.mxu0 %v1572
    %v4718 = vpop.f32.mrf.mxu0
    %v4719 = vadd.f32 %v4705, %v4718
    %v4720 = vpop.f32.mrf.mxu0
    %v4721 = vadd.f32 %v4707, %v4720
    %4722 = vdwg.mxu0
    %4723 = vmatpush.bf16.msra.mxu0 %v3799
    %4724 = vmatpush.bf16.msra.mxu0 %v3795
    %4725 = vmatpush.bf16.msra.mxu0 %v3791
    %4726 = vmatpush.bf16.msra.mxu0 %v3787
    %4727 = vmatpush.bf16.msra.mxu0 %v3783
    %4728 = vmatpush.bf16.msra.mxu0 %v3779
    %4729 = vmatpush.bf16.msra.mxu0 %v3775
    %4730 = vmatpush.bf16.msra.mxu0 %v3771
    %4731 = vmatmul.bf16.gmra.mxu0 %v1573
    %v4732 = vpop.f32.mrf.mxu0
    %v4733 = vadd.f32 %v4719, %v4732
    %v4734 = vpop.f32.mrf.mxu0
    %v4735 = vadd.f32 %v4721, %v4734
    %4736 = vdwg.mxu0
    %4737 = vmatpush.bf16.msra.mxu0 %v3831
    %4738 = vmatpush.bf16.msra.mxu0 %v3827
    %4739 = vmatpush.bf16.msra.mxu0 %v3823
    %4740 = vmatpush.bf16.msra.mxu0 %v3819
    %4741 = vmatpush.bf16.msra.mxu0 %v3815
    %4742 = vmatpush.bf16.msra.mxu0 %v3811
    %4743 = vmatpush.bf16.msra.mxu0 %v3807
    %4744 = vmatpush.bf16.msra.mxu0 %v3803
    %4745 = vmatmul.bf16.gmra.mxu0 %v1574
    %v4746 = vpop.f32.mrf.mxu0
    %v4747 = vadd.f32 %v4733, %v4746
    %v4748 = vpop.f32.mrf.mxu0
    %v4749 = vadd.f32 %v4735, %v4748
    %4750 = vdwg.mxu0
    %4751 = vmatpush.bf16.msra.mxu0 %v3863
    %4752 = vmatpush.bf16.msra.mxu0 %v3859
    %4753 = vmatpush.bf16.msra.mxu0 %v3855
    %4754 = vmatpush.bf16.msra.mxu0 %v3851
    %4755 = vmatpush.bf16.msra.mxu0 %v3847
    %4756 = vmatpush.bf16.msra.mxu0 %v3843
    %4757 = vmatpush.bf16.msra.mxu0 %v3839
    %4758 = vmatpush.bf16.msra.mxu0 %v3835
    %4759 = vmatmul.bf16.gmra.mxu0 %v1575
    %v4760 = vpop.f32.mrf.mxu0
    %v4761 = vadd.f32 %v4747, %v4760
    %v4762 = vpop.f32.mrf.mxu0
    %v4763 = vadd.f32 %v4749, %v4762
    %4764 = vdwg.mxu0
    %4765 = vmatpush.bf16.msra.mxu0 %v3895
    %4766 = vmatpush.bf16.msra.mxu0 %v3891
    %4767 = vmatpush.bf16.msra.mxu0 %v3887
    %4768 = vmatpush.bf16.msra.mxu0 %v3883
    %4769 = vmatpush.bf16.msra.mxu0 %v3879
    %4770 = vmatpush.bf16.msra.mxu0 %v3875
    %4771 = vmatpush.bf16.msra.mxu0 %v3871
    %4772 = vmatpush.bf16.msra.mxu0 %v3867
    %4773 = vmatmul.bf16.gmra.mxu0 %v1576
    %v4774 = vpop.f32.mrf.mxu0
    %v4775 = vadd.f32 %v4761, %v4774
    %v4776 = vpop.f32.mrf.mxu0
    %v4777 = vadd.f32 %v4763, %v4776
    %4778 = vdwg.mxu0
    %4779 = vmatpush.bf16.msra.mxu0 %v3927
    %4780 = vmatpush.bf16.msra.mxu0 %v3923
    %4781 = vmatpush.bf16.msra.mxu0 %v3919
    %4782 = vmatpush.bf16.msra.mxu0 %v3915
    %4783 = vmatpush.bf16.msra.mxu0 %v3911
    %4784 = vmatpush.bf16.msra.mxu0 %v3907
    %4785 = vmatpush.bf16.msra.mxu0 %v3903
    %4786 = vmatpush.bf16.msra.mxu0 %v3899
    %4787 = vmatmul.bf16.gmra.mxu0 %v1577
    %v4788 = vpop.f32.mrf.mxu0
    %v4789 = vadd.f32 %v4775, %v4788
    %v4790 = vpop.f32.mrf.mxu0
    %v4791 = vadd.f32 %v4777, %v4790
    %4792 = vdwg.mxu0
    %4793 = vmatpush.bf16.msra.mxu0 %v3959
    %4794 = vmatpush.bf16.msra.mxu0 %v3955
    %4795 = vmatpush.bf16.msra.mxu0 %v3951
    %4796 = vmatpush.bf16.msra.mxu0 %v3947
    %4797 = vmatpush.bf16.msra.mxu0 %v3943
    %4798 = vmatpush.bf16.msra.mxu0 %v3939
    %4799 = vmatpush.bf16.msra.mxu0 %v3935
    %4800 = vmatpush.bf16.msra.mxu0 %v3931
    %4801 = vmatmul.bf16.gmra.mxu0 %v1578
    %v4802 = vpop.f32.mrf.mxu0
    %v4803 = vadd.f32 %v4789, %v4802
    %v4804 = vpop.f32.mrf.mxu0
    %v4805 = vadd.f32 %v4791, %v4804
    %4806 = vdwg.mxu0
    %4807 = vmatpush.bf16.msra.mxu0 %v3991
    %4808 = vmatpush.bf16.msra.mxu0 %v3987
    %4809 = vmatpush.bf16.msra.mxu0 %v3983
    %4810 = vmatpush.bf16.msra.mxu0 %v3979
    %4811 = vmatpush.bf16.msra.mxu0 %v3975
    %4812 = vmatpush.bf16.msra.mxu0 %v3971
    %4813 = vmatpush.bf16.msra.mxu0 %v3967
    %4814 = vmatpush.bf16.msra.mxu0 %v3963
    %4815 = vmatmul.bf16.gmra.mxu0 %v1579
    %v4816 = vpop.f32.mrf.mxu0
    %v4817 = vadd.f32 %v4803, %v4816
    %v4818 = vpop.f32.mrf.mxu0
    %v4819 = vadd.f32 %v4805, %v4818
    %4820 = vdwg.mxu0
    %4821 = vmatpush.bf16.msra.mxu0 %v4023
    %4822 = vmatpush.bf16.msra.mxu0 %v4019
    %4823 = vmatpush.bf16.msra.mxu0 %v4015
    %4824 = vmatpush.bf16.msra.mxu0 %v4011
    %4825 = vmatpush.bf16.msra.mxu0 %v4007
    %4826 = vmatpush.bf16.msra.mxu0 %v4003
    %4827 = vmatpush.bf16.msra.mxu0 %v3999
    %4828 = vmatpush.bf16.msra.mxu0 %v3995
    %4829 = vmatmul.bf16.gmra.mxu0 %v1580
    %v4830 = vpop.f32.mrf.mxu0
    %v4831 = vadd.f32 %v4817, %v4830
    %v4832 = vpop.f32.mrf.mxu0
    %v4833 = vadd.f32 %v4819, %v4832
    %4834 = vdwg.mxu0
    %4835 = vmatpush.bf16.msra.mxu0 %v4055
    %4836 = vmatpush.bf16.msra.mxu0 %v4051
    %4837 = vmatpush.bf16.msra.mxu0 %v4047
    %4838 = vmatpush.bf16.msra.mxu0 %v4043
    %4839 = vmatpush.bf16.msra.mxu0 %v4039
    %4840 = vmatpush.bf16.msra.mxu0 %v4035
    %4841 = vmatpush.bf16.msra.mxu0 %v4031
    %4842 = vmatpush.bf16.msra.mxu0 %v4027
    %4843 = vmatmul.bf16.gmra.mxu0 %v1581
    %v4844 = vpop.f32.mrf.mxu0
    %v4845 = vadd.f32 %v4831, %v4844
    %v4846 = vpop.f32.mrf.mxu0
    %v4847 = vadd.f32 %v4833, %v4846
    %4848 = vdwg.mxu0
    %4849 = vmatpush.bf16.msra.mxu0 %v4087
    %4850 = vmatpush.bf16.msra.mxu0 %v4083
    %4851 = vmatpush.bf16.msra.mxu0 %v4079
    %4852 = vmatpush.bf16.msra.mxu0 %v4075
    %4853 = vmatpush.bf16.msra.mxu0 %v4071
    %4854 = vmatpush.bf16.msra.mxu0 %v4067
    %4855 = vmatpush.bf16.msra.mxu0 %v4063
    %4856 = vmatpush.bf16.msra.mxu0 %v4059
    %4857 = vmatmul.bf16.gmra.mxu0 %v1582
    %v4858 = vpop.f32.mrf.mxu0
    %v4859 = vadd.f32 %v4845, %v4858
    %v4860 = vpop.f32.mrf.mxu0
    %v4861 = vadd.f32 %v4847, %v4860
    %4862 = vdwg.mxu0
    %4863 = vmatpush.bf16.msra.mxu0 %v4119
    %4864 = vmatpush.bf16.msra.mxu0 %v4115
    %4865 = vmatpush.bf16.msra.mxu0 %v4111
    %4866 = vmatpush.bf16.msra.mxu0 %v4107
    %4867 = vmatpush.bf16.msra.mxu0 %v4103
    %4868 = vmatpush.bf16.msra.mxu0 %v4099
    %4869 = vmatpush.bf16.msra.mxu0 %v4095
    %4870 = vmatpush.bf16.msra.mxu0 %v4091
    %4871 = vmatmul.bf16.gmra.mxu0 %v1583
    %v4872 = vpop.f32.mrf.mxu0
    %v4873 = vadd.f32 %v4859, %v4872
    %v4874 = vpop.f32.mrf.mxu0
    %v4875 = vadd.f32 %v4861, %v4874
    %4876 = vdwg.mxu0
    %4877 = vmatpush.bf16.msra.mxu0 %v4151
    %4878 = vmatpush.bf16.msra.mxu0 %v4147
    %4879 = vmatpush.bf16.msra.mxu0 %v4143
    %4880 = vmatpush.bf16.msra.mxu0 %v4139
    %4881 = vmatpush.bf16.msra.mxu0 %v4135
    %4882 = vmatpush.bf16.msra.mxu0 %v4131
    %4883 = vmatpush.bf16.msra.mxu0 %v4127
    %4884 = vmatpush.bf16.msra.mxu0 %v4123
    %4885 = vmatmul.bf16.gmra.mxu0 %v1584
    %v4886 = vpop.f32.mrf.mxu0
    %v4887 = vadd.f32 %v4873, %v4886
    %v4888 = vpop.f32.mrf.mxu0
    %v4889 = vadd.f32 %v4875, %v4888
    %4890 = vdwg.mxu0
    %4891 = vmatpush.bf16.msra.mxu0 %v3672
    %4892 = vmatpush.bf16.msra.mxu0 %v3668
    %4893 = vmatpush.bf16.msra.mxu0 %v3664
    %4894 = vmatpush.bf16.msra.mxu0 %v3660
    %4895 = vmatpush.bf16.msra.mxu0 %v3656
    %4896 = vmatpush.bf16.msra.mxu0 %v3652
    %4897 = vmatpush.bf16.msra.mxu0 %v3648
    %4898 = vmatpush.bf16.msra.mxu0 %v3644
    %4899 = vmatmul.bf16.gmra.mxu0 %v1569
    %v4900 = vpop.f32.mrf.mxu0
    %v4901 = vadd.f32 %v2100, %v4900
    %v4902 = vpop.f32.mrf.mxu0
    %v4903 = vadd.f32 %v2100, %v4902
    %4904 = vdwg.mxu0
    %4905 = vmatpush.bf16.msra.mxu0 %v3704
    %4906 = vmatpush.bf16.msra.mxu0 %v3700
    %4907 = vmatpush.bf16.msra.mxu0 %v3696
    %4908 = vmatpush.bf16.msra.mxu0 %v3692
    %4909 = vmatpush.bf16.msra.mxu0 %v3688
    %4910 = vmatpush.bf16.msra.mxu0 %v3684
    %4911 = vmatpush.bf16.msra.mxu0 %v3680
    %4912 = vmatpush.bf16.msra.mxu0 %v3676
    %4913 = vmatmul.bf16.gmra.mxu0 %v1570
    %v4914 = vpop.f32.mrf.mxu0
    %v4915 = vadd.f32 %v4901, %v4914
    %v4916 = vpop.f32.mrf.mxu0
    %v4917 = vadd.f32 %v4903, %v4916
    %4918 = vdwg.mxu0
    %4919 = vmatpush.bf16.msra.mxu0 %v3736
    %4920 = vmatpush.bf16.msra.mxu0 %v3732
    %4921 = vmatpush.bf16.msra.mxu0 %v3728
    %4922 = vmatpush.bf16.msra.mxu0 %v3724
    %4923 = vmatpush.bf16.msra.mxu0 %v3720
    %4924 = vmatpush.bf16.msra.mxu0 %v3716
    %4925 = vmatpush.bf16.msra.mxu0 %v3712
    %4926 = vmatpush.bf16.msra.mxu0 %v3708
    %4927 = vmatmul.bf16.gmra.mxu0 %v1571
    %v4928 = vpop.f32.mrf.mxu0
    %v4929 = vadd.f32 %v4915, %v4928
    %v4930 = vpop.f32.mrf.mxu0
    %v4931 = vadd.f32 %v4917, %v4930
    %4932 = vdwg.mxu0
    %4933 = vmatpush.bf16.msra.mxu0 %v3768
    %4934 = vmatpush.bf16.msra.mxu0 %v3764
    %4935 = vmatpush.bf16.msra.mxu0 %v3760
    %4936 = vmatpush.bf16.msra.mxu0 %v3756
    %4937 = vmatpush.bf16.msra.mxu0 %v3752
    %4938 = vmatpush.bf16.msra.mxu0 %v3748
    %4939 = vmatpush.bf16.msra.mxu0 %v3744
    %4940 = vmatpush.bf16.msra.mxu0 %v3740
    %4941 = vmatmul.bf16.gmra.mxu0 %v1572
    %v4942 = vpop.f32.mrf.mxu0
    %v4943 = vadd.f32 %v4929, %v4942
    %v4944 = vpop.f32.mrf.mxu0
    %v4945 = vadd.f32 %v4931, %v4944
    %4946 = vdwg.mxu0
    %4947 = vmatpush.bf16.msra.mxu0 %v3800
    %4948 = vmatpush.bf16.msra.mxu0 %v3796
    %4949 = vmatpush.bf16.msra.mxu0 %v3792
    %4950 = vmatpush.bf16.msra.mxu0 %v3788
    %4951 = vmatpush.bf16.msra.mxu0 %v3784
    %4952 = vmatpush.bf16.msra.mxu0 %v3780
    %4953 = vmatpush.bf16.msra.mxu0 %v3776
    %4954 = vmatpush.bf16.msra.mxu0 %v3772
    %4955 = vmatmul.bf16.gmra.mxu0 %v1573
    %v4956 = vpop.f32.mrf.mxu0
    %v4957 = vadd.f32 %v4943, %v4956
    %v4958 = vpop.f32.mrf.mxu0
    %v4959 = vadd.f32 %v4945, %v4958
    %4960 = vdwg.mxu0
    %4961 = vmatpush.bf16.msra.mxu0 %v3832
    %4962 = vmatpush.bf16.msra.mxu0 %v3828
    %4963 = vmatpush.bf16.msra.mxu0 %v3824
    %4964 = vmatpush.bf16.msra.mxu0 %v3820
    %4965 = vmatpush.bf16.msra.mxu0 %v3816
    %4966 = vmatpush.bf16.msra.mxu0 %v3812
    %4967 = vmatpush.bf16.msra.mxu0 %v3808
    %4968 = vmatpush.bf16.msra.mxu0 %v3804
    %4969 = vmatmul.bf16.gmra.mxu0 %v1574
    %v4970 = vpop.f32.mrf.mxu0
    %v4971 = vadd.f32 %v4957, %v4970
    %v4972 = vpop.f32.mrf.mxu0
    %v4973 = vadd.f32 %v4959, %v4972
    %4974 = vdwg.mxu0
    %4975 = vmatpush.bf16.msra.mxu0 %v3864
    %4976 = vmatpush.bf16.msra.mxu0 %v3860
    %4977 = vmatpush.bf16.msra.mxu0 %v3856
    %4978 = vmatpush.bf16.msra.mxu0 %v3852
    %4979 = vmatpush.bf16.msra.mxu0 %v3848
    %4980 = vmatpush.bf16.msra.mxu0 %v3844
    %4981 = vmatpush.bf16.msra.mxu0 %v3840
    %4982 = vmatpush.bf16.msra.mxu0 %v3836
    %4983 = vmatmul.bf16.gmra.mxu0 %v1575
    %v4984 = vpop.f32.mrf.mxu0
    %v4985 = vadd.f32 %v4971, %v4984
    %v4986 = vpop.f32.mrf.mxu0
    %v4987 = vadd.f32 %v4973, %v4986
    %4988 = vdwg.mxu0
    %4989 = vmatpush.bf16.msra.mxu0 %v3896
    %4990 = vmatpush.bf16.msra.mxu0 %v3892
    %4991 = vmatpush.bf16.msra.mxu0 %v3888
    %4992 = vmatpush.bf16.msra.mxu0 %v3884
    %4993 = vmatpush.bf16.msra.mxu0 %v3880
    %4994 = vmatpush.bf16.msra.mxu0 %v3876
    %4995 = vmatpush.bf16.msra.mxu0 %v3872
    %4996 = vmatpush.bf16.msra.mxu0 %v3868
    %4997 = vmatmul.bf16.gmra.mxu0 %v1576
    %v4998 = vpop.f32.mrf.mxu0
    %v4999 = vadd.f32 %v4985, %v4998
    %v5000 = vpop.f32.mrf.mxu0
    %v5001 = vadd.f32 %v4987, %v5000
    %5002 = vdwg.mxu0
    %5003 = vmatpush.bf16.msra.mxu0 %v3928
    %5004 = vmatpush.bf16.msra.mxu0 %v3924
    %5005 = vmatpush.bf16.msra.mxu0 %v3920
    %5006 = vmatpush.bf16.msra.mxu0 %v3916
    %5007 = vmatpush.bf16.msra.mxu0 %v3912
    %5008 = vmatpush.bf16.msra.mxu0 %v3908
    %5009 = vmatpush.bf16.msra.mxu0 %v3904
    %5010 = vmatpush.bf16.msra.mxu0 %v3900
    %5011 = vmatmul.bf16.gmra.mxu0 %v1577
    %v5012 = vpop.f32.mrf.mxu0
    %v5013 = vadd.f32 %v4999, %v5012
    %v5014 = vpop.f32.mrf.mxu0
    %v5015 = vadd.f32 %v5001, %v5014
    %5016 = vdwg.mxu0
    %5017 = vmatpush.bf16.msra.mxu0 %v3960
    %5018 = vmatpush.bf16.msra.mxu0 %v3956
    %5019 = vmatpush.bf16.msra.mxu0 %v3952
    %5020 = vmatpush.bf16.msra.mxu0 %v3948
    %5021 = vmatpush.bf16.msra.mxu0 %v3944
    %5022 = vmatpush.bf16.msra.mxu0 %v3940
    %5023 = vmatpush.bf16.msra.mxu0 %v3936
    %5024 = vmatpush.bf16.msra.mxu0 %v3932
    %5025 = vmatmul.bf16.gmra.mxu0 %v1578
    %v5026 = vpop.f32.mrf.mxu0
    %v5027 = vadd.f32 %v5013, %v5026
    %v5028 = vpop.f32.mrf.mxu0
    %v5029 = vadd.f32 %v5015, %v5028
    %5030 = vdwg.mxu0
    %5031 = vmatpush.bf16.msra.mxu0 %v3992
    %5032 = vmatpush.bf16.msra.mxu0 %v3988
    %5033 = vmatpush.bf16.msra.mxu0 %v3984
    %5034 = vmatpush.bf16.msra.mxu0 %v3980
    %5035 = vmatpush.bf16.msra.mxu0 %v3976
    %5036 = vmatpush.bf16.msra.mxu0 %v3972
    %5037 = vmatpush.bf16.msra.mxu0 %v3968
    %5038 = vmatpush.bf16.msra.mxu0 %v3964
    %5039 = vmatmul.bf16.gmra.mxu0 %v1579
    %v5040 = vpop.f32.mrf.mxu0
    %v5041 = vadd.f32 %v5027, %v5040
    %v5042 = vpop.f32.mrf.mxu0
    %v5043 = vadd.f32 %v5029, %v5042
    %5044 = vdwg.mxu0
    %5045 = vmatpush.bf16.msra.mxu0 %v4024
    %5046 = vmatpush.bf16.msra.mxu0 %v4020
    %5047 = vmatpush.bf16.msra.mxu0 %v4016
    %5048 = vmatpush.bf16.msra.mxu0 %v4012
    %5049 = vmatpush.bf16.msra.mxu0 %v4008
    %5050 = vmatpush.bf16.msra.mxu0 %v4004
    %5051 = vmatpush.bf16.msra.mxu0 %v4000
    %5052 = vmatpush.bf16.msra.mxu0 %v3996
    %5053 = vmatmul.bf16.gmra.mxu0 %v1580
    %v5054 = vpop.f32.mrf.mxu0
    %v5055 = vadd.f32 %v5041, %v5054
    %v5056 = vpop.f32.mrf.mxu0
    %v5057 = vadd.f32 %v5043, %v5056
    %5058 = vdwg.mxu0
    %5059 = vmatpush.bf16.msra.mxu0 %v4056
    %5060 = vmatpush.bf16.msra.mxu0 %v4052
    %5061 = vmatpush.bf16.msra.mxu0 %v4048
    %5062 = vmatpush.bf16.msra.mxu0 %v4044
    %5063 = vmatpush.bf16.msra.mxu0 %v4040
    %5064 = vmatpush.bf16.msra.mxu0 %v4036
    %5065 = vmatpush.bf16.msra.mxu0 %v4032
    %5066 = vmatpush.bf16.msra.mxu0 %v4028
    %5067 = vmatmul.bf16.gmra.mxu0 %v1581
    %v5068 = vpop.f32.mrf.mxu0
    %v5069 = vadd.f32 %v5055, %v5068
    %v5070 = vpop.f32.mrf.mxu0
    %v5071 = vadd.f32 %v5057, %v5070
    %5072 = vdwg.mxu0
    %5073 = vmatpush.bf16.msra.mxu0 %v4088
    %5074 = vmatpush.bf16.msra.mxu0 %v4084
    %5075 = vmatpush.bf16.msra.mxu0 %v4080
    %5076 = vmatpush.bf16.msra.mxu0 %v4076
    %5077 = vmatpush.bf16.msra.mxu0 %v4072
    %5078 = vmatpush.bf16.msra.mxu0 %v4068
    %5079 = vmatpush.bf16.msra.mxu0 %v4064
    %5080 = vmatpush.bf16.msra.mxu0 %v4060
    %5081 = vmatmul.bf16.gmra.mxu0 %v1582
    %v5082 = vpop.f32.mrf.mxu0
    %v5083 = vadd.f32 %v5069, %v5082
    %v5084 = vpop.f32.mrf.mxu0
    %v5085 = vadd.f32 %v5071, %v5084
    %5086 = vdwg.mxu0
    %5087 = vmatpush.bf16.msra.mxu0 %v4120
    %5088 = vmatpush.bf16.msra.mxu0 %v4116
    %5089 = vmatpush.bf16.msra.mxu0 %v4112
    %5090 = vmatpush.bf16.msra.mxu0 %v4108
    %5091 = vmatpush.bf16.msra.mxu0 %v4104
    %5092 = vmatpush.bf16.msra.mxu0 %v4100
    %5093 = vmatpush.bf16.msra.mxu0 %v4096
    %5094 = vmatpush.bf16.msra.mxu0 %v4092
    %5095 = vmatmul.bf16.gmra.mxu0 %v1583
    %v5096 = vpop.f32.mrf.mxu0
    %v5097 = vadd.f32 %v5083, %v5096
    %v5098 = vpop.f32.mrf.mxu0
    %v5099 = vadd.f32 %v5085, %v5098
    %5100 = vdwg.mxu0
    %5101 = vmatpush.bf16.msra.mxu0 %v4152
    %5102 = vmatpush.bf16.msra.mxu0 %v4148
    %5103 = vmatpush.bf16.msra.mxu0 %v4144
    %5104 = vmatpush.bf16.msra.mxu0 %v4140
    %5105 = vmatpush.bf16.msra.mxu0 %v4136
    %5106 = vmatpush.bf16.msra.mxu0 %v4132
    %5107 = vmatpush.bf16.msra.mxu0 %v4128
    %5108 = vmatpush.bf16.msra.mxu0 %v4124
    %5109 = vmatmul.bf16.gmra.mxu0 %v1584
    %v5110 = vpop.f32.mrf.mxu0
    %v5111 = vadd.f32 %v5097, %v5110
    %v5112 = vpop.f32.mrf.mxu0
    %v5113 = vadd.f32 %v5099, %v5112
    %5114 = vdwg.mxu0
    %5115 = vmatpush.bf16.msra.mxu0 %v3673
    %5116 = vmatpush.bf16.msra.mxu0 %v3669
    %5117 = vmatpush.bf16.msra.mxu0 %v3665
    %5118 = vmatpush.bf16.msra.mxu0 %v3661
    %5119 = vmatpush.bf16.msra.mxu0 %v3657
    %5120 = vmatpush.bf16.msra.mxu0 %v3653
    %5121 = vmatpush.bf16.msra.mxu0 %v3649
    %5122 = vmatpush.bf16.msra.mxu0 %v3645
    %5123 = vmatmul.bf16.gmra.mxu0 %v1569
    %v5124 = vpop.f32.mrf.mxu0
    %v5125 = vadd.f32 %v2101, %v5124
    %v5126 = vpop.f32.mrf.mxu0
    %v5127 = vadd.f32 %v2101, %v5126
    %5128 = vdwg.mxu0
    %5129 = vmatpush.bf16.msra.mxu0 %v3705
    %5130 = vmatpush.bf16.msra.mxu0 %v3701
    %5131 = vmatpush.bf16.msra.mxu0 %v3697
    %5132 = vmatpush.bf16.msra.mxu0 %v3693
    %5133 = vmatpush.bf16.msra.mxu0 %v3689
    %5134 = vmatpush.bf16.msra.mxu0 %v3685
    %5135 = vmatpush.bf16.msra.mxu0 %v3681
    %5136 = vmatpush.bf16.msra.mxu0 %v3677
    %5137 = vmatmul.bf16.gmra.mxu0 %v1570
    %v5138 = vpop.f32.mrf.mxu0
    %v5139 = vadd.f32 %v5125, %v5138
    %v5140 = vpop.f32.mrf.mxu0
    %v5141 = vadd.f32 %v5127, %v5140
    %5142 = vdwg.mxu0
    %5143 = vmatpush.bf16.msra.mxu0 %v3737
    %5144 = vmatpush.bf16.msra.mxu0 %v3733
    %5145 = vmatpush.bf16.msra.mxu0 %v3729
    %5146 = vmatpush.bf16.msra.mxu0 %v3725
    %5147 = vmatpush.bf16.msra.mxu0 %v3721
    %5148 = vmatpush.bf16.msra.mxu0 %v3717
    %5149 = vmatpush.bf16.msra.mxu0 %v3713
    %5150 = vmatpush.bf16.msra.mxu0 %v3709
    %5151 = vmatmul.bf16.gmra.mxu0 %v1571
    %v5152 = vpop.f32.mrf.mxu0
    %v5153 = vadd.f32 %v5139, %v5152
    %v5154 = vpop.f32.mrf.mxu0
    %v5155 = vadd.f32 %v5141, %v5154
    %5156 = vdwg.mxu0
    %5157 = vmatpush.bf16.msra.mxu0 %v3769
    %5158 = vmatpush.bf16.msra.mxu0 %v3765
    %5159 = vmatpush.bf16.msra.mxu0 %v3761
    %5160 = vmatpush.bf16.msra.mxu0 %v3757
    %5161 = vmatpush.bf16.msra.mxu0 %v3753
    %5162 = vmatpush.bf16.msra.mxu0 %v3749
    %5163 = vmatpush.bf16.msra.mxu0 %v3745
    %5164 = vmatpush.bf16.msra.mxu0 %v3741
    %5165 = vmatmul.bf16.gmra.mxu0 %v1572
    %v5166 = vpop.f32.mrf.mxu0
    %v5167 = vadd.f32 %v5153, %v5166
    %v5168 = vpop.f32.mrf.mxu0
    %v5169 = vadd.f32 %v5155, %v5168
    %5170 = vdwg.mxu0
    %5171 = vmatpush.bf16.msra.mxu0 %v3801
    %5172 = vmatpush.bf16.msra.mxu0 %v3797
    %5173 = vmatpush.bf16.msra.mxu0 %v3793
    %5174 = vmatpush.bf16.msra.mxu0 %v3789
    %5175 = vmatpush.bf16.msra.mxu0 %v3785
    %5176 = vmatpush.bf16.msra.mxu0 %v3781
    %5177 = vmatpush.bf16.msra.mxu0 %v3777
    %5178 = vmatpush.bf16.msra.mxu0 %v3773
    %5179 = vmatmul.bf16.gmra.mxu0 %v1573
    %v5180 = vpop.f32.mrf.mxu0
    %v5181 = vadd.f32 %v5167, %v5180
    %v5182 = vpop.f32.mrf.mxu0
    %v5183 = vadd.f32 %v5169, %v5182
    %5184 = vdwg.mxu0
    %5185 = vmatpush.bf16.msra.mxu0 %v3833
    %5186 = vmatpush.bf16.msra.mxu0 %v3829
    %5187 = vmatpush.bf16.msra.mxu0 %v3825
    %5188 = vmatpush.bf16.msra.mxu0 %v3821
    %5189 = vmatpush.bf16.msra.mxu0 %v3817
    %5190 = vmatpush.bf16.msra.mxu0 %v3813
    %5191 = vmatpush.bf16.msra.mxu0 %v3809
    %5192 = vmatpush.bf16.msra.mxu0 %v3805
    %5193 = vmatmul.bf16.gmra.mxu0 %v1574
    %v5194 = vpop.f32.mrf.mxu0
    %v5195 = vadd.f32 %v5181, %v5194
    %v5196 = vpop.f32.mrf.mxu0
    %v5197 = vadd.f32 %v5183, %v5196
    %5198 = vdwg.mxu0
    %5199 = vmatpush.bf16.msra.mxu0 %v3865
    %5200 = vmatpush.bf16.msra.mxu0 %v3861
    %5201 = vmatpush.bf16.msra.mxu0 %v3857
    %5202 = vmatpush.bf16.msra.mxu0 %v3853
    %5203 = vmatpush.bf16.msra.mxu0 %v3849
    %5204 = vmatpush.bf16.msra.mxu0 %v3845
    %5205 = vmatpush.bf16.msra.mxu0 %v3841
    %5206 = vmatpush.bf16.msra.mxu0 %v3837
    %5207 = vmatmul.bf16.gmra.mxu0 %v1575
    %v5208 = vpop.f32.mrf.mxu0
    %v5209 = vadd.f32 %v5195, %v5208
    %v5210 = vpop.f32.mrf.mxu0
    %v5211 = vadd.f32 %v5197, %v5210
    %5212 = vdwg.mxu0
    %5213 = vmatpush.bf16.msra.mxu0 %v3897
    %5214 = vmatpush.bf16.msra.mxu0 %v3893
    %5215 = vmatpush.bf16.msra.mxu0 %v3889
    %5216 = vmatpush.bf16.msra.mxu0 %v3885
    %5217 = vmatpush.bf16.msra.mxu0 %v3881
    %5218 = vmatpush.bf16.msra.mxu0 %v3877
    %5219 = vmatpush.bf16.msra.mxu0 %v3873
    %5220 = vmatpush.bf16.msra.mxu0 %v3869
    %5221 = vmatmul.bf16.gmra.mxu0 %v1576
    %v5222 = vpop.f32.mrf.mxu0
    %v5223 = vadd.f32 %v5209, %v5222
    %v5224 = vpop.f32.mrf.mxu0
    %v5225 = vadd.f32 %v5211, %v5224
    %5226 = vdwg.mxu0
    %5227 = vmatpush.bf16.msra.mxu0 %v3929
    %5228 = vmatpush.bf16.msra.mxu0 %v3925
    %5229 = vmatpush.bf16.msra.mxu0 %v3921
    %5230 = vmatpush.bf16.msra.mxu0 %v3917
    %5231 = vmatpush.bf16.msra.mxu0 %v3913
    %5232 = vmatpush.bf16.msra.mxu0 %v3909
    %5233 = vmatpush.bf16.msra.mxu0 %v3905
    %5234 = vmatpush.bf16.msra.mxu0 %v3901
    %5235 = vmatmul.bf16.gmra.mxu0 %v1577
    %v5236 = vpop.f32.mrf.mxu0
    %v5237 = vadd.f32 %v5223, %v5236
    %v5238 = vpop.f32.mrf.mxu0
    %v5239 = vadd.f32 %v5225, %v5238
    %5240 = vdwg.mxu0
    %5241 = vmatpush.bf16.msra.mxu0 %v3961
    %5242 = vmatpush.bf16.msra.mxu0 %v3957
    %5243 = vmatpush.bf16.msra.mxu0 %v3953
    %5244 = vmatpush.bf16.msra.mxu0 %v3949
    %5245 = vmatpush.bf16.msra.mxu0 %v3945
    %5246 = vmatpush.bf16.msra.mxu0 %v3941
    %5247 = vmatpush.bf16.msra.mxu0 %v3937
    %5248 = vmatpush.bf16.msra.mxu0 %v3933
    %5249 = vmatmul.bf16.gmra.mxu0 %v1578
    %v5250 = vpop.f32.mrf.mxu0
    %v5251 = vadd.f32 %v5237, %v5250
    %v5252 = vpop.f32.mrf.mxu0
    %v5253 = vadd.f32 %v5239, %v5252
    %5254 = vdwg.mxu0
    %5255 = vmatpush.bf16.msra.mxu0 %v3993
    %5256 = vmatpush.bf16.msra.mxu0 %v3989
    %5257 = vmatpush.bf16.msra.mxu0 %v3985
    %5258 = vmatpush.bf16.msra.mxu0 %v3981
    %5259 = vmatpush.bf16.msra.mxu0 %v3977
    %5260 = vmatpush.bf16.msra.mxu0 %v3973
    %5261 = vmatpush.bf16.msra.mxu0 %v3969
    %5262 = vmatpush.bf16.msra.mxu0 %v3965
    %5263 = vmatmul.bf16.gmra.mxu0 %v1579
    %v5264 = vpop.f32.mrf.mxu0
    %v5265 = vadd.f32 %v5251, %v5264
    %v5266 = vpop.f32.mrf.mxu0
    %v5267 = vadd.f32 %v5253, %v5266
    %5268 = vdwg.mxu0
    %5269 = vmatpush.bf16.msra.mxu0 %v4025
    %5270 = vmatpush.bf16.msra.mxu0 %v4021
    %5271 = vmatpush.bf16.msra.mxu0 %v4017
    %5272 = vmatpush.bf16.msra.mxu0 %v4013
    %5273 = vmatpush.bf16.msra.mxu0 %v4009
    %5274 = vmatpush.bf16.msra.mxu0 %v4005
    %5275 = vmatpush.bf16.msra.mxu0 %v4001
    %5276 = vmatpush.bf16.msra.mxu0 %v3997
    %5277 = vmatmul.bf16.gmra.mxu0 %v1580
    %v5278 = vpop.f32.mrf.mxu0
    %v5279 = vadd.f32 %v5265, %v5278
    %v5280 = vpop.f32.mrf.mxu0
    %v5281 = vadd.f32 %v5267, %v5280
    %5282 = vdwg.mxu0
    %5283 = vmatpush.bf16.msra.mxu0 %v4057
    %5284 = vmatpush.bf16.msra.mxu0 %v4053
    %5285 = vmatpush.bf16.msra.mxu0 %v4049
    %5286 = vmatpush.bf16.msra.mxu0 %v4045
    %5287 = vmatpush.bf16.msra.mxu0 %v4041
    %5288 = vmatpush.bf16.msra.mxu0 %v4037
    %5289 = vmatpush.bf16.msra.mxu0 %v4033
    %5290 = vmatpush.bf16.msra.mxu0 %v4029
    %5291 = vmatmul.bf16.gmra.mxu0 %v1581
    %v5292 = vpop.f32.mrf.mxu0
    %v5293 = vadd.f32 %v5279, %v5292
    %v5294 = vpop.f32.mrf.mxu0
    %v5295 = vadd.f32 %v5281, %v5294
    %5296 = vdwg.mxu0
    %5297 = vmatpush.bf16.msra.mxu0 %v4089
    %5298 = vmatpush.bf16.msra.mxu0 %v4085
    %5299 = vmatpush.bf16.msra.mxu0 %v4081
    %5300 = vmatpush.bf16.msra.mxu0 %v4077
    %5301 = vmatpush.bf16.msra.mxu0 %v4073
    %5302 = vmatpush.bf16.msra.mxu0 %v4069
    %5303 = vmatpush.bf16.msra.mxu0 %v4065
    %5304 = vmatpush.bf16.msra.mxu0 %v4061
    %5305 = vmatmul.bf16.gmra.mxu0 %v1582
    %v5306 = vpop.f32.mrf.mxu0
    %v5307 = vadd.f32 %v5293, %v5306
    %v5308 = vpop.f32.mrf.mxu0
    %v5309 = vadd.f32 %v5295, %v5308
    %5310 = vdwg.mxu0
    %5311 = vmatpush.bf16.msra.mxu0 %v4121
    %5312 = vmatpush.bf16.msra.mxu0 %v4117
    %5313 = vmatpush.bf16.msra.mxu0 %v4113
    %5314 = vmatpush.bf16.msra.mxu0 %v4109
    %5315 = vmatpush.bf16.msra.mxu0 %v4105
    %5316 = vmatpush.bf16.msra.mxu0 %v4101
    %5317 = vmatpush.bf16.msra.mxu0 %v4097
    %5318 = vmatpush.bf16.msra.mxu0 %v4093
    %5319 = vmatmul.bf16.gmra.mxu0 %v1583
    %v5320 = vpop.f32.mrf.mxu0
    %v5321 = vadd.f32 %v5307, %v5320
    %v5322 = vpop.f32.mrf.mxu0
    %v5323 = vadd.f32 %v5309, %v5322
    %5324 = vdwg.mxu0
    %5325 = vmatpush.bf16.msra.mxu0 %v4153
    %5326 = vmatpush.bf16.msra.mxu0 %v4149
    %5327 = vmatpush.bf16.msra.mxu0 %v4145
    %5328 = vmatpush.bf16.msra.mxu0 %v4141
    %5329 = vmatpush.bf16.msra.mxu0 %v4137
    %5330 = vmatpush.bf16.msra.mxu0 %v4133
    %5331 = vmatpush.bf16.msra.mxu0 %v4129
    %5332 = vmatpush.bf16.msra.mxu0 %v4125
    %5333 = vmatmul.bf16.gmra.mxu0 %v1584
    %v5334 = vpop.f32.mrf.mxu0
    %v5335 = vadd.f32 %v5321, %v5334
    %v5336 = vpop.f32.mrf.mxu0
    %v5337 = vadd.f32 %v5323, %v5336
    %5338 = vdwg.mxu0
    %5339 = vmatpush.bf16.msra.mxu0 %v3674
    %5340 = vmatpush.bf16.msra.mxu0 %v3670
    %5341 = vmatpush.bf16.msra.mxu0 %v3666
    %5342 = vmatpush.bf16.msra.mxu0 %v3662
    %5343 = vmatpush.bf16.msra.mxu0 %v3658
    %5344 = vmatpush.bf16.msra.mxu0 %v3654
    %5345 = vmatpush.bf16.msra.mxu0 %v3650
    %5346 = vmatpush.bf16.msra.mxu0 %v3646
    %5347 = vmatmul.bf16.gmra.mxu0 %v1569
    %v5348 = vpop.f32.mrf.mxu0
    %v5349 = vadd.f32 %v2102, %v5348
    %v5350 = vpop.f32.mrf.mxu0
    %v5351 = vadd.f32 %v2102, %v5350
    %5352 = vdwg.mxu0
    %5353 = vmatpush.bf16.msra.mxu0 %v3706
    %5354 = vmatpush.bf16.msra.mxu0 %v3702
    %5355 = vmatpush.bf16.msra.mxu0 %v3698
    %5356 = vmatpush.bf16.msra.mxu0 %v3694
    %5357 = vmatpush.bf16.msra.mxu0 %v3690
    %5358 = vmatpush.bf16.msra.mxu0 %v3686
    %5359 = vmatpush.bf16.msra.mxu0 %v3682
    %5360 = vmatpush.bf16.msra.mxu0 %v3678
    %5361 = vmatmul.bf16.gmra.mxu0 %v1570
    %v5362 = vpop.f32.mrf.mxu0
    %v5363 = vadd.f32 %v5349, %v5362
    %v5364 = vpop.f32.mrf.mxu0
    %v5365 = vadd.f32 %v5351, %v5364
    %5366 = vdwg.mxu0
    %5367 = vmatpush.bf16.msra.mxu0 %v3738
    %5368 = vmatpush.bf16.msra.mxu0 %v3734
    %5369 = vmatpush.bf16.msra.mxu0 %v3730
    %5370 = vmatpush.bf16.msra.mxu0 %v3726
    %5371 = vmatpush.bf16.msra.mxu0 %v3722
    %5372 = vmatpush.bf16.msra.mxu0 %v3718
    %5373 = vmatpush.bf16.msra.mxu0 %v3714
    %5374 = vmatpush.bf16.msra.mxu0 %v3710
    %5375 = vmatmul.bf16.gmra.mxu0 %v1571
    %v5376 = vpop.f32.mrf.mxu0
    %v5377 = vadd.f32 %v5363, %v5376
    %v5378 = vpop.f32.mrf.mxu0
    %v5379 = vadd.f32 %v5365, %v5378
    %5380 = vdwg.mxu0
    %5381 = vmatpush.bf16.msra.mxu0 %v3770
    %5382 = vmatpush.bf16.msra.mxu0 %v3766
    %5383 = vmatpush.bf16.msra.mxu0 %v3762
    %5384 = vmatpush.bf16.msra.mxu0 %v3758
    %5385 = vmatpush.bf16.msra.mxu0 %v3754
    %5386 = vmatpush.bf16.msra.mxu0 %v3750
    %5387 = vmatpush.bf16.msra.mxu0 %v3746
    %5388 = vmatpush.bf16.msra.mxu0 %v3742
    %5389 = vmatmul.bf16.gmra.mxu0 %v1572
    %v5390 = vpop.f32.mrf.mxu0
    %v5391 = vadd.f32 %v5377, %v5390
    %v5392 = vpop.f32.mrf.mxu0
    %v5393 = vadd.f32 %v5379, %v5392
    %5394 = vdwg.mxu0
    %5395 = vmatpush.bf16.msra.mxu0 %v3802
    %5396 = vmatpush.bf16.msra.mxu0 %v3798
    %5397 = vmatpush.bf16.msra.mxu0 %v3794
    %5398 = vmatpush.bf16.msra.mxu0 %v3790
    %5399 = vmatpush.bf16.msra.mxu0 %v3786
    %5400 = vmatpush.bf16.msra.mxu0 %v3782
    %5401 = vmatpush.bf16.msra.mxu0 %v3778
    %5402 = vmatpush.bf16.msra.mxu0 %v3774
    %5403 = vmatmul.bf16.gmra.mxu0 %v1573
    %v5404 = vpop.f32.mrf.mxu0
    %v5405 = vadd.f32 %v5391, %v5404
    %v5406 = vpop.f32.mrf.mxu0
    %v5407 = vadd.f32 %v5393, %v5406
    %5408 = vdwg.mxu0
    %5409 = vmatpush.bf16.msra.mxu0 %v3834
    %5410 = vmatpush.bf16.msra.mxu0 %v3830
    %5411 = vmatpush.bf16.msra.mxu0 %v3826
    %5412 = vmatpush.bf16.msra.mxu0 %v3822
    %5413 = vmatpush.bf16.msra.mxu0 %v3818
    %5414 = vmatpush.bf16.msra.mxu0 %v3814
    %5415 = vmatpush.bf16.msra.mxu0 %v3810
    %5416 = vmatpush.bf16.msra.mxu0 %v3806
    %5417 = vmatmul.bf16.gmra.mxu0 %v1574
    %v5418 = vpop.f32.mrf.mxu0
    %v5419 = vadd.f32 %v5405, %v5418
    %v5420 = vpop.f32.mrf.mxu0
    %v5421 = vadd.f32 %v5407, %v5420
    %5422 = vdwg.mxu0
    %5423 = vmatpush.bf16.msra.mxu0 %v3866
    %5424 = vmatpush.bf16.msra.mxu0 %v3862
    %5425 = vmatpush.bf16.msra.mxu0 %v3858
    %5426 = vmatpush.bf16.msra.mxu0 %v3854
    %5427 = vmatpush.bf16.msra.mxu0 %v3850
    %5428 = vmatpush.bf16.msra.mxu0 %v3846
    %5429 = vmatpush.bf16.msra.mxu0 %v3842
    %5430 = vmatpush.bf16.msra.mxu0 %v3838
    %5431 = vmatmul.bf16.gmra.mxu0 %v1575
    %v5432 = vpop.f32.mrf.mxu0
    %v5433 = vadd.f32 %v5419, %v5432
    %v5434 = vpop.f32.mrf.mxu0
    %v5435 = vadd.f32 %v5421, %v5434
    %5436 = vdwg.mxu0
    %5437 = vmatpush.bf16.msra.mxu0 %v3898
    %5438 = vmatpush.bf16.msra.mxu0 %v3894
    %5439 = vmatpush.bf16.msra.mxu0 %v3890
    %5440 = vmatpush.bf16.msra.mxu0 %v3886
    %5441 = vmatpush.bf16.msra.mxu0 %v3882
    %5442 = vmatpush.bf16.msra.mxu0 %v3878
    %5443 = vmatpush.bf16.msra.mxu0 %v3874
    %5444 = vmatpush.bf16.msra.mxu0 %v3870
    %5445 = vmatmul.bf16.gmra.mxu0 %v1576
    %v5446 = vpop.f32.mrf.mxu0
    %v5447 = vadd.f32 %v5433, %v5446
    %v5448 = vpop.f32.mrf.mxu0
    %v5449 = vadd.f32 %v5435, %v5448
    %5450 = vdwg.mxu0
    %5451 = vmatpush.bf16.msra.mxu0 %v3930
    %5452 = vmatpush.bf16.msra.mxu0 %v3926
    %5453 = vmatpush.bf16.msra.mxu0 %v3922
    %5454 = vmatpush.bf16.msra.mxu0 %v3918
    %5455 = vmatpush.bf16.msra.mxu0 %v3914
    %5456 = vmatpush.bf16.msra.mxu0 %v3910
    %5457 = vmatpush.bf16.msra.mxu0 %v3906
    %5458 = vmatpush.bf16.msra.mxu0 %v3902
    %5459 = vmatmul.bf16.gmra.mxu0 %v1577
    %v5460 = vpop.f32.mrf.mxu0
    %v5461 = vadd.f32 %v5447, %v5460
    %v5462 = vpop.f32.mrf.mxu0
    %v5463 = vadd.f32 %v5449, %v5462
    %5464 = vdwg.mxu0
    %5465 = vmatpush.bf16.msra.mxu0 %v3962
    %5466 = vmatpush.bf16.msra.mxu0 %v3958
    %5467 = vmatpush.bf16.msra.mxu0 %v3954
    %5468 = vmatpush.bf16.msra.mxu0 %v3950
    %5469 = vmatpush.bf16.msra.mxu0 %v3946
    %5470 = vmatpush.bf16.msra.mxu0 %v3942
    %5471 = vmatpush.bf16.msra.mxu0 %v3938
    %5472 = vmatpush.bf16.msra.mxu0 %v3934
    %5473 = vmatmul.bf16.gmra.mxu0 %v1578
    %v5474 = vpop.f32.mrf.mxu0
    %v5475 = vadd.f32 %v5461, %v5474
    %v5476 = vpop.f32.mrf.mxu0
    %v5477 = vadd.f32 %v5463, %v5476
    %5478 = vdwg.mxu0
    %5479 = vmatpush.bf16.msra.mxu0 %v3994
    %5480 = vmatpush.bf16.msra.mxu0 %v3990
    %5481 = vmatpush.bf16.msra.mxu0 %v3986
    %5482 = vmatpush.bf16.msra.mxu0 %v3982
    %5483 = vmatpush.bf16.msra.mxu0 %v3978
    %5484 = vmatpush.bf16.msra.mxu0 %v3974
    %5485 = vmatpush.bf16.msra.mxu0 %v3970
    %5486 = vmatpush.bf16.msra.mxu0 %v3966
    %5487 = vmatmul.bf16.gmra.mxu0 %v1579
    %v5488 = vpop.f32.mrf.mxu0
    %v5489 = vadd.f32 %v5475, %v5488
    %v5490 = vpop.f32.mrf.mxu0
    %v5491 = vadd.f32 %v5477, %v5490
    %5492 = vdwg.mxu0
    %5493 = vmatpush.bf16.msra.mxu0 %v4026
    %5494 = vmatpush.bf16.msra.mxu0 %v4022
    %5495 = vmatpush.bf16.msra.mxu0 %v4018
    %5496 = vmatpush.bf16.msra.mxu0 %v4014
    %5497 = vmatpush.bf16.msra.mxu0 %v4010
    %5498 = vmatpush.bf16.msra.mxu0 %v4006
    %5499 = vmatpush.bf16.msra.mxu0 %v4002
    %5500 = vmatpush.bf16.msra.mxu0 %v3998
    %5501 = vmatmul.bf16.gmra.mxu0 %v1580
    %v5502 = vpop.f32.mrf.mxu0
    %v5503 = vadd.f32 %v5489, %v5502
    %v5504 = vpop.f32.mrf.mxu0
    %v5505 = vadd.f32 %v5491, %v5504
    %5506 = vdwg.mxu0
    %5507 = vmatpush.bf16.msra.mxu0 %v4058
    %5508 = vmatpush.bf16.msra.mxu0 %v4054
    %5509 = vmatpush.bf16.msra.mxu0 %v4050
    %5510 = vmatpush.bf16.msra.mxu0 %v4046
    %5511 = vmatpush.bf16.msra.mxu0 %v4042
    %5512 = vmatpush.bf16.msra.mxu0 %v4038
    %5513 = vmatpush.bf16.msra.mxu0 %v4034
    %5514 = vmatpush.bf16.msra.mxu0 %v4030
    %5515 = vmatmul.bf16.gmra.mxu0 %v1581
    %v5516 = vpop.f32.mrf.mxu0
    %v5517 = vadd.f32 %v5503, %v5516
    %v5518 = vpop.f32.mrf.mxu0
    %v5519 = vadd.f32 %v5505, %v5518
    %5520 = vdwg.mxu0
    %5521 = vmatpush.bf16.msra.mxu0 %v4090
    %5522 = vmatpush.bf16.msra.mxu0 %v4086
    %5523 = vmatpush.bf16.msra.mxu0 %v4082
    %5524 = vmatpush.bf16.msra.mxu0 %v4078
    %5525 = vmatpush.bf16.msra.mxu0 %v4074
    %5526 = vmatpush.bf16.msra.mxu0 %v4070
    %5527 = vmatpush.bf16.msra.mxu0 %v4066
    %5528 = vmatpush.bf16.msra.mxu0 %v4062
    %5529 = vmatmul.bf16.gmra.mxu0 %v1582
    %v5530 = vpop.f32.mrf.mxu0
    %v5531 = vadd.f32 %v5517, %v5530
    %v5532 = vpop.f32.mrf.mxu0
    %v5533 = vadd.f32 %v5519, %v5532
    %5534 = vdwg.mxu0
    %5535 = vmatpush.bf16.msra.mxu0 %v4122
    %5536 = vmatpush.bf16.msra.mxu0 %v4118
    %5537 = vmatpush.bf16.msra.mxu0 %v4114
    %5538 = vmatpush.bf16.msra.mxu0 %v4110
    %5539 = vmatpush.bf16.msra.mxu0 %v4106
    %5540 = vmatpush.bf16.msra.mxu0 %v4102
    %5541 = vmatpush.bf16.msra.mxu0 %v4098
    %5542 = vmatpush.bf16.msra.mxu0 %v4094
    %5543 = vmatmul.bf16.gmra.mxu0 %v1583
    %v5544 = vpop.f32.mrf.mxu0
    %v5545 = vadd.f32 %v5531, %v5544
    %v5546 = vpop.f32.mrf.mxu0
    %v5547 = vadd.f32 %v5533, %v5546
    %5548 = vdwg.mxu0
    %5549 = vmatpush.bf16.msra.mxu0 %v4154
    %5550 = vmatpush.bf16.msra.mxu0 %v4150
    %5551 = vmatpush.bf16.msra.mxu0 %v4146
    %5552 = vmatpush.bf16.msra.mxu0 %v4142
    %5553 = vmatpush.bf16.msra.mxu0 %v4138
    %5554 = vmatpush.bf16.msra.mxu0 %v4134
    %5555 = vmatpush.bf16.msra.mxu0 %v4130
    %5556 = vmatpush.bf16.msra.mxu0 %v4126
    %5557 = vmatmul.bf16.gmra.mxu0 %v1584
    %v5558 = vpop.f32.mrf.mxu0
    %v5559 = vadd.f32 %v5545, %v5558
    %v5560 = vpop.f32.mrf.mxu0
    %v5561 = vadd.f32 %v5547, %v5560
    %5562 = vdwg.mxu0
    %v5563 = vmin.f32 %v4887, 20.0
    %v5564 = vmin.f32 %v5111, 20.0
    %v5565 = vmin.f32 %v5335, 20.0
    %v5566 = vmin.f32 %v5559, 20.0
    %v5567 = vmin.f32 %v4889, 20.0
    %v5568 = vmin.f32 %v5113, 20.0
    %v5569 = vmin.f32 %v5337, 20.0
    %v5570 = vmin.f32 %v5561, 20.0
    %v5571 = vmul.f32 %v5563, 1.442695
    %v5572 = vpow.pop %v5571
    %v5573 = vmul.f32 %v5564, 1.442695
    %v5574 = vpow.pop %v5573
    %v5575 = vmul.f32 %v5565, 1.442695
    %v5576 = vpow.pop %v5575
    %v5577 = vmul.f32 %v5566, 1.442695
    %v5578 = vpow.pop %v5577
    %v5579 = vmul.f32 %v5567, 1.442695
    %v5580 = vpow.pop %v5579
    %v5581 = vmul.f32 %v5568, 1.442695
    %v5582 = vpow.pop %v5581
    %v5583 = vmul.f32 %v5569, 1.442695
    %v5584 = vpow.pop %v5583
    %v5585 = vmul.f32 %v5570, 1.442695
    %v5586 = vpow.pop %v5585
    %v5587 = vadd.f32 %v5572, 1.0
    %v5588 = vadd.f32 %v5574, 1.0
    %v5589 = vadd.f32 %v5576, 1.0
    %v5590 = vadd.f32 %v5578, 1.0
    %v5591 = vadd.f32 %v5580, 1.0
    %v5592 = vadd.f32 %v5582, 1.0
    %v5593 = vadd.f32 %v5584, 1.0
    %v5594 = vadd.f32 %v5586, 1.0
    %v5595 = vmul.f32 %v5587, %v5587
    %v5596 = vmul.f32 %v5588, %v5588
    %v5597 = vmul.f32 %v5589, %v5589
    %v5598 = vmul.f32 %v5590, %v5590
    %v5599 = vmul.f32 %v5591, %v5591
    %v5600 = vmul.f32 %v5592, %v5592
    %v5601 = vmul.f32 %v5593, %v5593
    %v5602 = vmul.f32 %v5594, %v5594
    %v5603 = vsub.f32 %v5595, 1.0
    %v5604 = vsub.f32 %v5596, 1.0
    %v5605 = vsub.f32 %v5597, 1.0
    %v5606 = vsub.f32 %v5598, 1.0
    %v5607 = vsub.f32 %v5599, 1.0
    %v5608 = vsub.f32 %v5600, 1.0
    %v5609 = vsub.f32 %v5601, 1.0
    %v5610 = vsub.f32 %v5602, 1.0
    %v5611 = vadd.f32 %v5595, 1.0
    %v5612 = vadd.f32 %v5596, 1.0
    %v5613 = vadd.f32 %v5597, 1.0
    %v5614 = vadd.f32 %v5598, 1.0
    %v5615 = vadd.f32 %v5599, 1.0
    %v5616 = vadd.f32 %v5600, 1.0
    %v5617 = vadd.f32 %v5601, 1.0
    %v5618 = vadd.f32 %v5602, 1.0
    %v5619 = vrcp.pop %v5611
    %v5620 = vrcp.pop %v5612
    %v5621 = vrcp.pop %v5613
    %v5622 = vrcp.pop %v5614
    %v5623 = vrcp.pop %v5615
    %v5624 = vrcp.pop %v5616
    %v5625 = vrcp.pop %v5617
    %v5626 = vrcp.pop %v5618
    %v5627 = vmul.f32 %v5603, %v5619
    %v5628 = vmul.f32 %v5604, %v5620
    %v5629 = vmul.f32 %v5605, %v5621
    %v5630 = vmul.f32 %v5606, %v5622
    %v5631 = vmul.f32 %v5607, %v5623
    %v5632 = vmul.f32 %v5608, %v5624
    %v5633 = vmul.f32 %v5609, %v5625
    %v5634 = vmul.f32 %v5610, %v5626
    %vm5635 = vcmp.gt.f32.partialorder %v4887, 20.0
    %vm5636 = vcmp.gt.f32.partialorder %v5111, 20.0
    %vm5637 = vcmp.gt.f32.partialorder %v5335, 20.0
    %vm5638 = vcmp.gt.f32.partialorder %v5559, 20.0
    %vm5639 = vcmp.gt.f32.partialorder %v4889, 20.0
    %vm5640 = vcmp.gt.f32.partialorder %v5113, 20.0
    %vm5641 = vcmp.gt.f32.partialorder %v5337, 20.0
    %vm5642 = vcmp.gt.f32.partialorder %v5561, 20.0
    %v5643 = vmul.f32 %v4887, %v5627
    %v5644 = vmul.f32 %v5111, %v5628
    %v5645 = vmul.f32 %v5335, %v5629
    %v5646 = vmul.f32 %v5559, %v5630
    %v5647 = vmul.f32 %v4889, %v5631
    %v5648 = vmul.f32 %v5113, %v5632
    %v5649 = vmul.f32 %v5337, %v5633
    %v5650 = vmul.f32 %v5561, %v5634
    %v5651 = vsel %vm5635, %v4887, %v5643
    %v5652 = vsel %vm5636, %v5111, %v5644
    %v5653 = vsel %vm5637, %v5335, %v5645
    %v5654 = vsel %vm5638, %v5559, %v5646
    %v5655 = vsel %vm5639, %v4889, %v5647
    %v5656 = vsel %vm5640, %v5113, %v5648
    %v5657 = vsel %vm5641, %v5337, %v5649
    %v5658 = vsel %vm5642, %v5561, %v5650
    %v5659 = vpack.c.bf16 %v5655, %v5651
    %v5660 = vpack.c.bf16 %v5656, %v5652
    %v5661 = vpack.c.bf16 %v5657, %v5653
    %v5662 = vpack.c.bf16 %v5658, %v5654
    %v5663 = vld [vmem:[#allocation9] sm:$0xff]
    %v5664 = vld [vmem:[#allocation9 + $0x8] sm:$0xff]
    %v5665 = vld [vmem:[#allocation9 + $0x10] sm:$0xff]
    %v5666 = vld [vmem:[#allocation9 + $0x18] sm:$0xff]
    %v5667 = vld [vmem:[#allocation9 + $0x20] sm:$0xff]
    %v5668 = vld [vmem:[#allocation9 + $0x28] sm:$0xff]
    %v5669 = vld [vmem:[#allocation9 + $0x30] sm:$0xff]
    %v5670 = vld [vmem:[#allocation9 + $0x38] sm:$0xff]
    %v5671 = vld [vmem:[#allocation9 + $0x40] sm:$0xff]
    %v5672 = vld [vmem:[#allocation9 + $0x48] sm:$0xff]
    %v5673 = vld [vmem:[#allocation9 + $0x50] sm:$0xff]
    %v5674 = vld [vmem:[#allocation9 + $0x58] sm:$0xff]
    %v5675 = vld [vmem:[#allocation9 + $0x60] sm:$0xff]
    %v5676 = vld [vmem:[#allocation9 + $0x68] sm:$0xff]
    %v5677 = vld [vmem:[#allocation9 + $0x70] sm:$0xff]
    %v5678 = vld [vmem:[#allocation9 + $0x78] sm:$0xff]
    %v5679 = vld [vmem:[#allocation9 + $0x80] sm:$0xff]
    %v5680 = vld [vmem:[#allocation9 + $0x88] sm:$0xff]
    %v5681 = vld [vmem:[#allocation9 + $0x90] sm:$0xff]
    %v5682 = vld [vmem:[#allocation9 + $0x98] sm:$0xff]
    %v5683 = vld [vmem:[#allocation9 + $0xa0] sm:$0xff]
    %v5684 = vld [vmem:[#allocation9 + $0xa8] sm:$0xff]
    %v5685 = vld [vmem:[#allocation9 + $0xb0] sm:$0xff]
    %v5686 = vld [vmem:[#allocation9 + $0xb8] sm:$0xff]
    %v5687 = vld [vmem:[#allocation9 + $0xc0] sm:$0xff]
    %v5688 = vld [vmem:[#allocation9 + $0xc8] sm:$0xff]
    %v5689 = vld [vmem:[#allocation9 + $0xd0] sm:$0xff]
    %v5690 = vld [vmem:[#allocation9 + $0xd8] sm:$0xff]
    %v5691 = vld [vmem:[#allocation9 + $0xe0] sm:$0xff]
    %v5692 = vld [vmem:[#allocation9 + $0xe8] sm:$0xff]
    %v5693 = vld [vmem:[#allocation9 + $0xf0] sm:$0xff]
    %v5694 = vld [vmem:[#allocation9 + $0xf8] sm:$0xff]
    %v5695 = vld [vmem:[#allocation9 + $0x100] sm:$0xff]
    %v5696 = vld [vmem:[#allocation9 + $0x108] sm:$0xff]
    %v5697 = vld [vmem:[#allocation9 + $0x110] sm:$0xff]
    %v5698 = vld [vmem:[#allocation9 + $0x118] sm:$0xff]
    %v5699 = vld [vmem:[#allocation9 + $0x120] sm:$0xff]
    %v5700 = vld [vmem:[#allocation9 + $0x128] sm:$0xff]
    %v5701 = vld [vmem:[#allocation9 + $0x130] sm:$0xff]
    %v5702 = vld [vmem:[#allocation9 + $0x138] sm:$0xff]
    %v5703 = vld [vmem:[#allocation9 + $0x140] sm:$0xff]
    %v5704 = vld [vmem:[#allocation9 + $0x148] sm:$0xff]
    %v5705 = vld [vmem:[#allocation9 + $0x150] sm:$0xff]
    %v5706 = vld [vmem:[#allocation9 + $0x158] sm:$0xff]
    %v5707 = vld [vmem:[#allocation9 + $0x160] sm:$0xff]
    %v5708 = vld [vmem:[#allocation9 + $0x168] sm:$0xff]
    %v5709 = vld [vmem:[#allocation9 + $0x170] sm:$0xff]
    %v5710 = vld [vmem:[#allocation9 + $0x178] sm:$0xff]
    %v5711 = vld [vmem:[#allocation9 + $0x180] sm:$0xff]
    %v5712 = vld [vmem:[#allocation9 + $0x188] sm:$0xff]
    %v5713 = vld [vmem:[#allocation9 + $0x190] sm:$0xff]
    %v5714 = vld [vmem:[#allocation9 + $0x198] sm:$0xff]
    %v5715 = vld [vmem:[#allocation9 + $0x1a0] sm:$0xff]
    %v5716 = vld [vmem:[#allocation9 + $0x1a8] sm:$0xff]
    %v5717 = vld [vmem:[#allocation9 + $0x1b0] sm:$0xff]
    %v5718 = vld [vmem:[#allocation9 + $0x1b8] sm:$0xff]
    %v5719 = vld [vmem:[#allocation9 + $0x1c0] sm:$0xff]
    %v5720 = vld [vmem:[#allocation9 + $0x1c8] sm:$0xff]
    %v5721 = vld [vmem:[#allocation9 + $0x1d0] sm:$0xff]
    %v5722 = vld [vmem:[#allocation9 + $0x1d8] sm:$0xff]
    %v5723 = vld [vmem:[#allocation9 + $0x1e0] sm:$0xff]
    %v5724 = vld [vmem:[#allocation9 + $0x1e8] sm:$0xff]
    %v5725 = vld [vmem:[#allocation9 + $0x1f0] sm:$0xff]
    %v5726 = vld [vmem:[#allocation9 + $0x1f8] sm:$0xff]
    %v5727 = vld [vmem:[#allocation9 + $0x200] sm:$0xff]
    %v5728 = vld [vmem:[#allocation9 + $0x208] sm:$0xff]
    %v5729 = vld [vmem:[#allocation9 + $0x210] sm:$0xff]
    %v5730 = vld [vmem:[#allocation9 + $0x218] sm:$0xff]
    %v5731 = vld [vmem:[#allocation9 + $0x220] sm:$0xff]
    %v5732 = vld [vmem:[#allocation9 + $0x228] sm:$0xff]
    %v5733 = vld [vmem:[#allocation9 + $0x230] sm:$0xff]
    %v5734 = vld [vmem:[#allocation9 + $0x238] sm:$0xff]
    %v5735 = vld [vmem:[#allocation9 + $0x240] sm:$0xff]
    %v5736 = vld [vmem:[#allocation9 + $0x248] sm:$0xff]
    %v5737 = vld [vmem:[#allocation9 + $0x250] sm:$0xff]
    %v5738 = vld [vmem:[#allocation9 + $0x258] sm:$0xff]
    %v5739 = vld [vmem:[#allocation9 + $0x260] sm:$0xff]
    %v5740 = vld [vmem:[#allocation9 + $0x268] sm:$0xff]
    %v5741 = vld [vmem:[#allocation9 + $0x270] sm:$0xff]
    %v5742 = vld [vmem:[#allocation9 + $0x278] sm:$0xff]
    %v5743 = vld [vmem:[#allocation9 + $0x280] sm:$0xff]
    %v5744 = vld [vmem:[#allocation9 + $0x288] sm:$0xff]
    %v5745 = vld [vmem:[#allocation9 + $0x290] sm:$0xff]
    %v5746 = vld [vmem:[#allocation9 + $0x298] sm:$0xff]
    %v5747 = vld [vmem:[#allocation9 + $0x2a0] sm:$0xff]
    %v5748 = vld [vmem:[#allocation9 + $0x2a8] sm:$0xff]
    %v5749 = vld [vmem:[#allocation9 + $0x2b0] sm:$0xff]
    %v5750 = vld [vmem:[#allocation9 + $0x2b8] sm:$0xff]
    %v5751 = vld [vmem:[#allocation9 + $0x2c0] sm:$0xff]
    %v5752 = vld [vmem:[#allocation9 + $0x2c8] sm:$0xff]
    %v5753 = vld [vmem:[#allocation9 + $0x2d0] sm:$0xff]
    %v5754 = vld [vmem:[#allocation9 + $0x2d8] sm:$0xff]
    %v5755 = vld [vmem:[#allocation9 + $0x2e0] sm:$0xff]
    %v5756 = vld [vmem:[#allocation9 + $0x2e8] sm:$0xff]
    %v5757 = vld [vmem:[#allocation9 + $0x2f0] sm:$0xff]
    %v5758 = vld [vmem:[#allocation9 + $0x2f8] sm:$0xff]
    %v5759 = vld [vmem:[#allocation9 + $0x300] sm:$0xff]
    %v5760 = vld [vmem:[#allocation9 + $0x308] sm:$0xff]
    %v5761 = vld [vmem:[#allocation9 + $0x310] sm:$0xff]
    %v5762 = vld [vmem:[#allocation9 + $0x318] sm:$0xff]
    %v5763 = vld [vmem:[#allocation9 + $0x320] sm:$0xff]
    %v5764 = vld [vmem:[#allocation9 + $0x328] sm:$0xff]
    %v5765 = vld [vmem:[#allocation9 + $0x330] sm:$0xff]
    %v5766 = vld [vmem:[#allocation9 + $0x338] sm:$0xff]
    %v5767 = vld [vmem:[#allocation9 + $0x340] sm:$0xff]
    %v5768 = vld [vmem:[#allocation9 + $0x348] sm:$0xff]
    %v5769 = vld [vmem:[#allocation9 + $0x350] sm:$0xff]
    %v5770 = vld [vmem:[#allocation9 + $0x358] sm:$0xff]
    %v5771 = vld [vmem:[#allocation9 + $0x360] sm:$0xff]
    %v5772 = vld [vmem:[#allocation9 + $0x368] sm:$0xff]
    %v5773 = vld [vmem:[#allocation9 + $0x370] sm:$0xff]
    %v5774 = vld [vmem:[#allocation9 + $0x378] sm:$0xff]
    %v5775 = vld [vmem:[#allocation9 + $0x380] sm:$0xff]
    %v5776 = vld [vmem:[#allocation9 + $0x388] sm:$0xff]
    %v5777 = vld [vmem:[#allocation9 + $0x390] sm:$0xff]
    %v5778 = vld [vmem:[#allocation9 + $0x398] sm:$0xff]
    %v5779 = vld [vmem:[#allocation9 + $0x3a0] sm:$0xff]
    %v5780 = vld [vmem:[#allocation9 + $0x3a8] sm:$0xff]
    %v5781 = vld [vmem:[#allocation9 + $0x3b0] sm:$0xff]
    %v5782 = vld [vmem:[#allocation9 + $0x3b8] sm:$0xff]
    %v5783 = vld [vmem:[#allocation9 + $0x3c0] sm:$0xff]
    %v5784 = vld [vmem:[#allocation9 + $0x3c8] sm:$0xff]
    %v5785 = vld [vmem:[#allocation9 + $0x3d0] sm:$0xff]
    %v5786 = vld [vmem:[#allocation9 + $0x3d8] sm:$0xff]
    %v5787 = vld [vmem:[#allocation9 + $0x3e0] sm:$0xff]
    %v5788 = vld [vmem:[#allocation9 + $0x3e8] sm:$0xff]
    %v5789 = vld [vmem:[#allocation9 + $0x3f0] sm:$0xff]
    %v5790 = vld [vmem:[#allocation9 + $0x3f8] sm:$0xff]
    %v5791 = vld [vmem:[#allocation10] sm:$0xf]
    %v5793 = vperm.slane %v5791, 0
    %v5794 = vperm.slane %v5791, 1
    %v5795 = vperm.slane %v5791, 2
    %v5796 = vperm.slane %v5791, 3
    %v5929 = vunpack.c.l.b16 %v5663
    %v5930 = vunpack.c.h.b16 %v5663
    %v5931 = vunpack.c.l.b16 %v5664
    %v5932 = vunpack.c.h.b16 %v5664
    %v5933 = vunpack.c.l.b16 %v5665
    %v5934 = vunpack.c.h.b16 %v5665
    %v5935 = vunpack.c.l.b16 %v5666
    %v5936 = vunpack.c.h.b16 %v5666
    %v5937 = vunpack.c.l.b16 %v5667
    %v5938 = vunpack.c.h.b16 %v5667
    %v5939 = vunpack.c.l.b16 %v5668
    %v5940 = vunpack.c.h.b16 %v5668
    %v5941 = vunpack.c.l.b16 %v5669
    %v5942 = vunpack.c.h.b16 %v5669
    %v5943 = vunpack.c.l.b16 %v5670
    %v5944 = vunpack.c.h.b16 %v5670
    %v5945 = vunpack.c.l.b16 %v5671
    %v5946 = vunpack.c.h.b16 %v5671
    %v5947 = vunpack.c.l.b16 %v5672
    %v5948 = vunpack.c.h.b16 %v5672
    %v5949 = vunpack.c.l.b16 %v5673
    %v5950 = vunpack.c.h.b16 %v5673
    %v5951 = vunpack.c.l.b16 %v5674
    %v5952 = vunpack.c.h.b16 %v5674
    %v5953 = vunpack.c.l.b16 %v5675
    %v5954 = vunpack.c.h.b16 %v5675
    %v5955 = vunpack.c.l.b16 %v5676
    %v5956 = vunpack.c.h.b16 %v5676
    %v5957 = vunpack.c.l.b16 %v5677
    %v5958 = vunpack.c.h.b16 %v5677
    %v5959 = vunpack.c.l.b16 %v5678
    %v5960 = vunpack.c.h.b16 %v5678
    %v5961 = vunpack.c.l.b16 %v5679
    %v5962 = vunpack.c.h.b16 %v5679
    %v5963 = vunpack.c.l.b16 %v5680
    %v5964 = vunpack.c.h.b16 %v5680
    %v5965 = vunpack.c.l.b16 %v5681
    %v5966 = vunpack.c.h.b16 %v5681
    %v5967 = vunpack.c.l.b16 %v5682
    %v5968 = vunpack.c.h.b16 %v5682
    %v5969 = vunpack.c.l.b16 %v5683
    %v5970 = vunpack.c.h.b16 %v5683
    %v5971 = vunpack.c.l.b16 %v5684
    %v5972 = vunpack.c.h.b16 %v5684
    %v5973 = vunpack.c.l.b16 %v5685
    %v5974 = vunpack.c.h.b16 %v5685
    %v5975 = vunpack.c.l.b16 %v5686
    %v5976 = vunpack.c.h.b16 %v5686
    %v5977 = vunpack.c.l.b16 %v5687
    %v5978 = vunpack.c.h.b16 %v5687
    %v5979 = vunpack.c.l.b16 %v5688
    %v5980 = vunpack.c.h.b16 %v5688
    %v5981 = vunpack.c.l.b16 %v5689
    %v5982 = vunpack.c.h.b16 %v5689
    %v5983 = vunpack.c.l.b16 %v5690
    %v5984 = vunpack.c.h.b16 %v5690
    %v5985 = vunpack.c.l.b16 %v5691
    %v5986 = vunpack.c.h.b16 %v5691
    %v5987 = vunpack.c.l.b16 %v5692
    %v5988 = vunpack.c.h.b16 %v5692
    %v5989 = vunpack.c.l.b16 %v5693
    %v5990 = vunpack.c.h.b16 %v5693
    %v5991 = vunpack.c.l.b16 %v5694
    %v5992 = vunpack.c.h.b16 %v5694
    %v5993 = vunpack.c.l.b16 %v5695
    %v5994 = vunpack.c.h.b16 %v5695
    %v5995 = vunpack.c.l.b16 %v5696
    %v5996 = vunpack.c.h.b16 %v5696
    %v5997 = vunpack.c.l.b16 %v5697
    %v5998 = vunpack.c.h.b16 %v5697
    %v5999 = vunpack.c.l.b16 %v5698
    %v6000 = vunpack.c.h.b16 %v5698
    %v6001 = vunpack.c.l.b16 %v5699
    %v6002 = vunpack.c.h.b16 %v5699
    %v6003 = vunpack.c.l.b16 %v5700
    %v6004 = vunpack.c.h.b16 %v5700
    %v6005 = vunpack.c.l.b16 %v5701
    %v6006 = vunpack.c.h.b16 %v5701
    %v6007 = vunpack.c.l.b16 %v5702
    %v6008 = vunpack.c.h.b16 %v5702
    %v6009 = vunpack.c.l.b16 %v5703
    %v6010 = vunpack.c.h.b16 %v5703
    %v6011 = vunpack.c.l.b16 %v5704
    %v6012 = vunpack.c.h.b16 %v5704
    %v6013 = vunpack.c.l.b16 %v5705
    %v6014 = vunpack.c.h.b16 %v5705
    %v6015 = vunpack.c.l.b16 %v5706
    %v6016 = vunpack.c.h.b16 %v5706
    %v6017 = vunpack.c.l.b16 %v5707
    %v6018 = vunpack.c.h.b16 %v5707
    %v6019 = vunpack.c.l.b16 %v5708
    %v6020 = vunpack.c.h.b16 %v5708
    %v6021 = vunpack.c.l.b16 %v5709
    %v6022 = vunpack.c.h.b16 %v5709
    %v6023 = vunpack.c.l.b16 %v5710
    %v6024 = vunpack.c.h.b16 %v5710
    %v6025 = vunpack.c.l.b16 %v5711
    %v6026 = vunpack.c.h.b16 %v5711
    %v6027 = vunpack.c.l.b16 %v5712
    %v6028 = vunpack.c.h.b16 %v5712
    %v6029 = vunpack.c.l.b16 %v5713
    %v6030 = vunpack.c.h.b16 %v5713
    %v6031 = vunpack.c.l.b16 %v5714
    %v6032 = vunpack.c.h.b16 %v5714
    %v6033 = vunpack.c.l.b16 %v5715
    %v6034 = vunpack.c.h.b16 %v5715
    %v6035 = vunpack.c.l.b16 %v5716
    %v6036 = vunpack.c.h.b16 %v5716
    %v6037 = vunpack.c.l.b16 %v5717
    %v6038 = vunpack.c.h.b16 %v5717
    %v6039 = vunpack.c.l.b16 %v5718
    %v6040 = vunpack.c.h.b16 %v5718
    %v6041 = vunpack.c.l.b16 %v5719
    %v6042 = vunpack.c.h.b16 %v5719
    %v6043 = vunpack.c.l.b16 %v5720
    %v6044 = vunpack.c.h.b16 %v5720
    %v6045 = vunpack.c.l.b16 %v5721
    %v6046 = vunpack.c.h.b16 %v5721
    %v6047 = vunpack.c.l.b16 %v5722
    %v6048 = vunpack.c.h.b16 %v5722
    %v6049 = vunpack.c.l.b16 %v5723
    %v6050 = vunpack.c.h.b16 %v5723
    %v6051 = vunpack.c.l.b16 %v5724
    %v6052 = vunpack.c.h.b16 %v5724
    %v6053 = vunpack.c.l.b16 %v5725
    %v6054 = vunpack.c.h.b16 %v5725
    %v6055 = vunpack.c.l.b16 %v5726
    %v6056 = vunpack.c.h.b16 %v5726
    %v6057 = vunpack.c.l.b16 %v5727
    %v6058 = vunpack.c.h.b16 %v5727
    %v6059 = vunpack.c.l.b16 %v5728
    %v6060 = vunpack.c.h.b16 %v5728
    %v6061 = vunpack.c.l.b16 %v5729
    %v6062 = vunpack.c.h.b16 %v5729
    %v6063 = vunpack.c.l.b16 %v5730
    %v6064 = vunpack.c.h.b16 %v5730
    %v6065 = vunpack.c.l.b16 %v5731
    %v6066 = vunpack.c.h.b16 %v5731
    %v6067 = vunpack.c.l.b16 %v5732
    %v6068 = vunpack.c.h.b16 %v5732
    %v6069 = vunpack.c.l.b16 %v5733
    %v6070 = vunpack.c.h.b16 %v5733
    %v6071 = vunpack.c.l.b16 %v5734
    %v6072 = vunpack.c.h.b16 %v5734
    %v6073 = vunpack.c.l.b16 %v5735
    %v6074 = vunpack.c.h.b16 %v5735
    %v6075 = vunpack.c.l.b16 %v5736
    %v6076 = vunpack.c.h.b16 %v5736
    %v6077 = vunpack.c.l.b16 %v5737
    %v6078 = vunpack.c.h.b16 %v5737
    %v6079 = vunpack.c.l.b16 %v5738
    %v6080 = vunpack.c.h.b16 %v5738
    %v6081 = vunpack.c.l.b16 %v5739
    %v6082 = vunpack.c.h.b16 %v5739
    %v6083 = vunpack.c.l.b16 %v5740
    %v6084 = vunpack.c.h.b16 %v5740
    %v6085 = vunpack.c.l.b16 %v5741
    %v6086 = vunpack.c.h.b16 %v5741
    %v6087 = vunpack.c.l.b16 %v5742
    %v6088 = vunpack.c.h.b16 %v5742
    %v6089 = vunpack.c.l.b16 %v5743
    %v6090 = vunpack.c.h.b16 %v5743
    %v6091 = vunpack.c.l.b16 %v5744
    %v6092 = vunpack.c.h.b16 %v5744
    %v6093 = vunpack.c.l.b16 %v5745
    %v6094 = vunpack.c.h.b16 %v5745
    %v6095 = vunpack.c.l.b16 %v5746
    %v6096 = vunpack.c.h.b16 %v5746
    %v6097 = vunpack.c.l.b16 %v5747
    %v6098 = vunpack.c.h.b16 %v5747
    %v6099 = vunpack.c.l.b16 %v5748
    %v6100 = vunpack.c.h.b16 %v5748
    %v6101 = vunpack.c.l.b16 %v5749
    %v6102 = vunpack.c.h.b16 %v5749
    %v6103 = vunpack.c.l.b16 %v5750
    %v6104 = vunpack.c.h.b16 %v5750
    %v6105 = vunpack.c.l.b16 %v5751
    %v6106 = vunpack.c.h.b16 %v5751
    %v6107 = vunpack.c.l.b16 %v5752
    %v6108 = vunpack.c.h.b16 %v5752
    %v6109 = vunpack.c.l.b16 %v5753
    %v6110 = vunpack.c.h.b16 %v5753
    %v6111 = vunpack.c.l.b16 %v5754
    %v6112 = vunpack.c.h.b16 %v5754
    %v6113 = vunpack.c.l.b16 %v5755
    %v6114 = vunpack.c.h.b16 %v5755
    %v6115 = vunpack.c.l.b16 %v5756
    %v6116 = vunpack.c.h.b16 %v5756
    %v6117 = vunpack.c.l.b16 %v5757
    %v6118 = vunpack.c.h.b16 %v5757
    %v6119 = vunpack.c.l.b16 %v5758
    %v6120 = vunpack.c.h.b16 %v5758
    %v6121 = vunpack.c.l.b16 %v5759
    %v6122 = vunpack.c.h.b16 %v5759
    %v6123 = vunpack.c.l.b16 %v5760
    %v6124 = vunpack.c.h.b16 %v5760
    %v6125 = vunpack.c.l.b16 %v5761
    %v6126 = vunpack.c.h.b16 %v5761
    %v6127 = vunpack.c.l.b16 %v5762
    %v6128 = vunpack.c.h.b16 %v5762
    %v6129 = vunpack.c.l.b16 %v5763
    %v6130 = vunpack.c.h.b16 %v5763
    %v6131 = vunpack.c.l.b16 %v5764
    %v6132 = vunpack.c.h.b16 %v5764
    %v6133 = vunpack.c.l.b16 %v5765
    %v6134 = vunpack.c.h.b16 %v5765
    %v6135 = vunpack.c.l.b16 %v5766
    %v6136 = vunpack.c.h.b16 %v5766
    %v6137 = vunpack.c.l.b16 %v5767
    %v6138 = vunpack.c.h.b16 %v5767
    %v6139 = vunpack.c.l.b16 %v5768
    %v6140 = vunpack.c.h.b16 %v5768
    %v6141 = vunpack.c.l.b16 %v5769
    %v6142 = vunpack.c.h.b16 %v5769
    %v6143 = vunpack.c.l.b16 %v5770
    %v6144 = vunpack.c.h.b16 %v5770
    %v6145 = vunpack.c.l.b16 %v5771
    %v6146 = vunpack.c.h.b16 %v5771
    %v6147 = vunpack.c.l.b16 %v5772
    %v6148 = vunpack.c.h.b16 %v5772
    %v6149 = vunpack.c.l.b16 %v5773
    %v6150 = vunpack.c.h.b16 %v5773
    %v6151 = vunpack.c.l.b16 %v5774
    %v6152 = vunpack.c.h.b16 %v5774
    %v6153 = vunpack.c.l.b16 %v5775
    %v6154 = vunpack.c.h.b16 %v5775
    %v6155 = vunpack.c.l.b16 %v5776
    %v6156 = vunpack.c.h.b16 %v5776
    %v6157 = vunpack.c.l.b16 %v5777
    %v6158 = vunpack.c.h.b16 %v5777
    %v6159 = vunpack.c.l.b16 %v5778
    %v6160 = vunpack.c.h.b16 %v5778
    %v6161 = vunpack.c.l.b16 %v5779
    %v6162 = vunpack.c.h.b16 %v5779
    %v6163 = vunpack.c.l.b16 %v5780
    %v6164 = vunpack.c.h.b16 %v5780
    %v6165 = vunpack.c.l.b16 %v5781
    %v6166 = vunpack.c.h.b16 %v5781
    %v6167 = vunpack.c.l.b16 %v5782
    %v6168 = vunpack.c.h.b16 %v5782
    %v6169 = vunpack.c.l.b16 %v5783
    %v6170 = vunpack.c.h.b16 %v5783
    %v6171 = vunpack.c.l.b16 %v5784
    %v6172 = vunpack.c.h.b16 %v5784
    %v6173 = vunpack.c.l.b16 %v5785
    %v6174 = vunpack.c.h.b16 %v5785
    %v6175 = vunpack.c.l.b16 %v5786
    %v6176 = vunpack.c.h.b16 %v5786
    %v6177 = vunpack.c.l.b16 %v5787
    %v6178 = vunpack.c.h.b16 %v5787
    %v6179 = vunpack.c.l.b16 %v5788
    %v6180 = vunpack.c.h.b16 %v5788
    %v6181 = vunpack.c.l.b16 %v5789
    %v6182 = vunpack.c.h.b16 %v5789
    %v6183 = vunpack.c.l.b16 %v5790
    %v6184 = vunpack.c.h.b16 %v5790
    %v6185 = vpack.c.b16 %v5933, %v5929
    %v6186 = vpack.c.b16 %v5934, %v5930
    %v6187 = vpack.c.b16 %v5935, %v5931
    %v6188 = vpack.c.b16 %v5936, %v5932
    %v6189 = vpack.c.b16 %v5941, %v5937
    %v6190 = vpack.c.b16 %v5942, %v5938
    %v6191 = vpack.c.b16 %v5943, %v5939
    %v6192 = vpack.c.b16 %v5944, %v5940
    %v6193 = vpack.c.b16 %v5949, %v5945
    %v6194 = vpack.c.b16 %v5950, %v5946
    %v6195 = vpack.c.b16 %v5951, %v5947
    %v6196 = vpack.c.b16 %v5952, %v5948
    %v6197 = vpack.c.b16 %v5957, %v5953
    %v6198 = vpack.c.b16 %v5958, %v5954
    %v6199 = vpack.c.b16 %v5959, %v5955
    %v6200 = vpack.c.b16 %v5960, %v5956
    %v6201 = vpack.c.b16 %v5965, %v5961
    %v6202 = vpack.c.b16 %v5966, %v5962
    %v6203 = vpack.c.b16 %v5967, %v5963
    %v6204 = vpack.c.b16 %v5968, %v5964
    %v6205 = vpack.c.b16 %v5973, %v5969
    %v6206 = vpack.c.b16 %v5974, %v5970
    %v6207 = vpack.c.b16 %v5975, %v5971
    %v6208 = vpack.c.b16 %v5976, %v5972
    %v6209 = vpack.c.b16 %v5981, %v5977
    %v6210 = vpack.c.b16 %v5982, %v5978
    %v6211 = vpack.c.b16 %v5983, %v5979
    %v6212 = vpack.c.b16 %v5984, %v5980
    %v6213 = vpack.c.b16 %v5989, %v5985
    %v6214 = vpack.c.b16 %v5990, %v5986
    %v6215 = vpack.c.b16 %v5991, %v5987
    %v6216 = vpack.c.b16 %v5992, %v5988
    %v6217 = vpack.c.b16 %v5997, %v5993
    %v6218 = vpack.c.b16 %v5998, %v5994
    %v6219 = vpack.c.b16 %v5999, %v5995
    %v6220 = vpack.c.b16 %v6000, %v5996
    %v6221 = vpack.c.b16 %v6005, %v6001
    %v6222 = vpack.c.b16 %v6006, %v6002
    %v6223 = vpack.c.b16 %v6007, %v6003
    %v6224 = vpack.c.b16 %v6008, %v6004
    %v6225 = vpack.c.b16 %v6013, %v6009
    %v6226 = vpack.c.b16 %v6014, %v6010
    %v6227 = vpack.c.b16 %v6015, %v6011
    %v6228 = vpack.c.b16 %v6016, %v6012
    %v6229 = vpack.c.b16 %v6021, %v6017
    %v6230 = vpack.c.b16 %v6022, %v6018
    %v6231 = vpack.c.b16 %v6023, %v6019
    %v6232 = vpack.c.b16 %v6024, %v6020
    %v6233 = vpack.c.b16 %v6029, %v6025
    %v6234 = vpack.c.b16 %v6030, %v6026
    %v6235 = vpack.c.b16 %v6031, %v6027
    %v6236 = vpack.c.b16 %v6032, %v6028
    %v6237 = vpack.c.b16 %v6037, %v6033
    %v6238 = vpack.c.b16 %v6038, %v6034
    %v6239 = vpack.c.b16 %v6039, %v6035
    %v6240 = vpack.c.b16 %v6040, %v6036
    %v6241 = vpack.c.b16 %v6045, %v6041
    %v6242 = vpack.c.b16 %v6046, %v6042
    %v6243 = vpack.c.b16 %v6047, %v6043
    %v6244 = vpack.c.b16 %v6048, %v6044
    %v6245 = vpack.c.b16 %v6053, %v6049
    %v6246 = vpack.c.b16 %v6054, %v6050
    %v6247 = vpack.c.b16 %v6055, %v6051
    %v6248 = vpack.c.b16 %v6056, %v6052
    %v6249 = vpack.c.b16 %v6061, %v6057
    %v6250 = vpack.c.b16 %v6062, %v6058
    %v6251 = vpack.c.b16 %v6063, %v6059
    %v6252 = vpack.c.b16 %v6064, %v6060
    %v6253 = vpack.c.b16 %v6069, %v6065
    %v6254 = vpack.c.b16 %v6070, %v6066
    %v6255 = vpack.c.b16 %v6071, %v6067
    %v6256 = vpack.c.b16 %v6072, %v6068
    %v6257 = vpack.c.b16 %v6077, %v6073
    %v6258 = vpack.c.b16 %v6078, %v6074
    %v6259 = vpack.c.b16 %v6079, %v6075
    %v6260 = vpack.c.b16 %v6080, %v6076
    %v6261 = vpack.c.b16 %v6085, %v6081
    %v6262 = vpack.c.b16 %v6086, %v6082
    %v6263 = vpack.c.b16 %v6087, %v6083
    %v6264 = vpack.c.b16 %v6088, %v6084
    %v6265 = vpack.c.b16 %v6093, %v6089
    %v6266 = vpack.c.b16 %v6094, %v6090
    %v6267 = vpack.c.b16 %v6095, %v6091
    %v6268 = vpack.c.b16 %v6096, %v6092
    %v6269 = vpack.c.b16 %v6101, %v6097
    %v6270 = vpack.c.b16 %v6102, %v6098
    %v6271 = vpack.c.b16 %v6103, %v6099
    %v6272 = vpack.c.b16 %v6104, %v6100
    %v6273 = vpack.c.b16 %v6109, %v6105
    %v6274 = vpack.c.b16 %v6110, %v6106
    %v6275 = vpack.c.b16 %v6111, %v6107
    %v6276 = vpack.c.b16 %v6112, %v6108
    %v6277 = vpack.c.b16 %v6117, %v6113
    %v6278 = vpack.c.b16 %v6118, %v6114
    %v6279 = vpack.c.b16 %v6119, %v6115
    %v6280 = vpack.c.b16 %v6120, %v6116
    %v6281 = vpack.c.b16 %v6125, %v6121
    %v6282 = vpack.c.b16 %v6126, %v6122
    %v6283 = vpack.c.b16 %v6127, %v6123
    %v6284 = vpack.c.b16 %v6128, %v6124
    %v6285 = vpack.c.b16 %v6133, %v6129
    %v6286 = vpack.c.b16 %v6134, %v6130
    %v6287 = vpack.c.b16 %v6135, %v6131
    %v6288 = vpack.c.b16 %v6136, %v6132
    %v6289 = vpack.c.b16 %v6141, %v6137
    %v6290 = vpack.c.b16 %v6142, %v6138
    %v6291 = vpack.c.b16 %v6143, %v6139
    %v6292 = vpack.c.b16 %v6144, %v6140
    %v6293 = vpack.c.b16 %v6149, %v6145
    %v6294 = vpack.c.b16 %v6150, %v6146
    %v6295 = vpack.c.b16 %v6151, %v6147
    %v6296 = vpack.c.b16 %v6152, %v6148
    %v6297 = vpack.c.b16 %v6157, %v6153
    %v6298 = vpack.c.b16 %v6158, %v6154
    %v6299 = vpack.c.b16 %v6159, %v6155
    %v6300 = vpack.c.b16 %v6160, %v6156
    %v6301 = vpack.c.b16 %v6165, %v6161
    %v6302 = vpack.c.b16 %v6166, %v6162
    %v6303 = vpack.c.b16 %v6167, %v6163
    %v6304 = vpack.c.b16 %v6168, %v6164
    %v6305 = vpack.c.b16 %v6173, %v6169
    %v6306 = vpack.c.b16 %v6174, %v6170
    %v6307 = vpack.c.b16 %v6175, %v6171
    %v6308 = vpack.c.b16 %v6176, %v6172
    %v6309 = vpack.c.b16 %v6181, %v6177
    %v6310 = vpack.c.b16 %v6182, %v6178
    %v6311 = vpack.c.b16 %v6183, %v6179
    %v6312 = vpack.c.b16 %v6184, %v6180
    %6441 = vmatpush.bf16.msra.mxu0 %v6213
    %6442 = vmatpush.bf16.msra.mxu0 %v6209
    %6443 = vmatpush.bf16.msra.mxu0 %v6205
    %6444 = vmatpush.bf16.msra.mxu0 %v6201
    %6445 = vmatpush.bf16.msra.mxu0 %v6197
    %6446 = vmatpush.bf16.msra.mxu0 %v6193
    %6447 = vmatpush.bf16.msra.mxu0 %v6189
    %6448 = vmatpush.bf16.msra.mxu0 %v6185
    %6449 = vmatmul.bf16.gmra.mxu0 %v5659
    %v6450 = vpop.f32.mrf.mxu0
    %v6451 = vadd.f32 %v5793, %v6450
    %v6452 = vpop.f32.mrf.mxu0
    %v6453 = vadd.f32 %v5793, %v6452
    %6454 = vdwg.mxu0
    %6455 = vmatpush.bf16.msra.mxu0 %v6245
    %6456 = vmatpush.bf16.msra.mxu0 %v6241
    %6457 = vmatpush.bf16.msra.mxu0 %v6237
    %6458 = vmatpush.bf16.msra.mxu0 %v6233
    %6459 = vmatpush.bf16.msra.mxu0 %v6229
    %6460 = vmatpush.bf16.msra.mxu0 %v6225
    %6461 = vmatpush.bf16.msra.mxu0 %v6221
    %6462 = vmatpush.bf16.msra.mxu0 %v6217
    %6463 = vmatmul.bf16.gmra.mxu0 %v5660
    %v6464 = vpop.f32.mrf.mxu0
    %v6465 = vadd.f32 %v6451, %v6464
    %v6466 = vpop.f32.mrf.mxu0
    %v6467 = vadd.f32 %v6453, %v6466
    %6468 = vdwg.mxu0
    %6469 = vmatpush.bf16.msra.mxu0 %v6277
    %6470 = vmatpush.bf16.msra.mxu0 %v6273
    %6471 = vmatpush.bf16.msra.mxu0 %v6269
    %6472 = vmatpush.bf16.msra.mxu0 %v6265
    %6473 = vmatpush.bf16.msra.mxu0 %v6261
    %6474 = vmatpush.bf16.msra.mxu0 %v6257
    %6475 = vmatpush.bf16.msra.mxu0 %v6253
    %6476 = vmatpush.bf16.msra.mxu0 %v6249
    %6477 = vmatmul.bf16.gmra.mxu0 %v5661
    %v6478 = vpop.f32.mrf.mxu0
    %v6479 = vadd.f32 %v6465, %v6478
    %v6480 = vpop.f32.mrf.mxu0
    %v6481 = vadd.f32 %v6467, %v6480
    %6482 = vdwg.mxu0
    %6483 = vmatpush.bf16.msra.mxu0 %v6309
    %6484 = vmatpush.bf16.msra.mxu0 %v6305
    %6485 = vmatpush.bf16.msra.mxu0 %v6301
    %6486 = vmatpush.bf16.msra.mxu0 %v6297
    %6487 = vmatpush.bf16.msra.mxu0 %v6293
    %6488 = vmatpush.bf16.msra.mxu0 %v6289
    %6489 = vmatpush.bf16.msra.mxu0 %v6285
    %6490 = vmatpush.bf16.msra.mxu0 %v6281
    %6491 = vmatmul.bf16.gmra.mxu0 %v5662
    %v6492 = vpop.f32.mrf.mxu0
    %v6493 = vadd.f32 %v6479, %v6492
    %v6494 = vpop.f32.mrf.mxu0
    %v6495 = vadd.f32 %v6481, %v6494
    %6496 = vdwg.mxu0
    %6497 = vmatpush.bf16.msra.mxu0 %v6214
    %6498 = vmatpush.bf16.msra.mxu0 %v6210
    %6499 = vmatpush.bf16.msra.mxu0 %v6206
    %6500 = vmatpush.bf16.msra.mxu0 %v6202
    %6501 = vmatpush.bf16.msra.mxu0 %v6198
    %6502 = vmatpush.bf16.msra.mxu0 %v6194
    %6503 = vmatpush.bf16.msra.mxu0 %v6190
    %6504 = vmatpush.bf16.msra.mxu0 %v6186
    %6505 = vmatmul.bf16.gmra.mxu0 %v5659
    %v6506 = vpop.f32.mrf.mxu0
    %v6507 = vadd.f32 %v5794, %v6506
    %v6508 = vpop.f32.mrf.mxu0
    %v6509 = vadd.f32 %v5794, %v6508
    %6510 = vdwg.mxu0
    %6511 = vmatpush.bf16.msra.mxu0 %v6246
    %6512 = vmatpush.bf16.msra.mxu0 %v6242
    %6513 = vmatpush.bf16.msra.mxu0 %v6238
    %6514 = vmatpush.bf16.msra.mxu0 %v6234
    %6515 = vmatpush.bf16.msra.mxu0 %v6230
    %6516 = vmatpush.bf16.msra.mxu0 %v6226
    %6517 = vmatpush.bf16.msra.mxu0 %v6222
    %6518 = vmatpush.bf16.msra.mxu0 %v6218
    %6519 = vmatmul.bf16.gmra.mxu0 %v5660
    %v6520 = vpop.f32.mrf.mxu0
    %v6521 = vadd.f32 %v6507, %v6520
    %v6522 = vpop.f32.mrf.mxu0
    %v6523 = vadd.f32 %v6509, %v6522
    %6524 = vdwg.mxu0
    %6525 = vmatpush.bf16.msra.mxu0 %v6278
    %6526 = vmatpush.bf16.msra.mxu0 %v6274
    %6527 = vmatpush.bf16.msra.mxu0 %v6270
    %6528 = vmatpush.bf16.msra.mxu0 %v6266
    %6529 = vmatpush.bf16.msra.mxu0 %v6262
    %6530 = vmatpush.bf16.msra.mxu0 %v6258
    %6531 = vmatpush.bf16.msra.mxu0 %v6254
    %6532 = vmatpush.bf16.msra.mxu0 %v6250
    %6533 = vmatmul.bf16.gmra.mxu0 %v5661
    %v6534 = vpop.f32.mrf.mxu0
    %v6535 = vadd.f32 %v6521, %v6534
    %v6536 = vpop.f32.mrf.mxu0
    %v6537 = vadd.f32 %v6523, %v6536
    %6538 = vdwg.mxu0
    %6539 = vmatpush.bf16.msra.mxu0 %v6310
    %6540 = vmatpush.bf16.msra.mxu0 %v6306
    %6541 = vmatpush.bf16.msra.mxu0 %v6302
    %6542 = vmatpush.bf16.msra.mxu0 %v6298
    %6543 = vmatpush.bf16.msra.mxu0 %v6294
    %6544 = vmatpush.bf16.msra.mxu0 %v6290
    %6545 = vmatpush.bf16.msra.mxu0 %v6286
    %6546 = vmatpush.bf16.msra.mxu0 %v6282
    %6547 = vmatmul.bf16.gmra.mxu0 %v5662
    %v6548 = vpop.f32.mrf.mxu0
    %v6549 = vadd.f32 %v6535, %v6548
    %v6550 = vpop.f32.mrf.mxu0
    %v6551 = vadd.f32 %v6537, %v6550
    %6552 = vdwg.mxu0
    %6553 = vmatpush.bf16.msra.mxu0 %v6215
    %6554 = vmatpush.bf16.msra.mxu0 %v6211
    %6555 = vmatpush.bf16.msra.mxu0 %v6207
    %6556 = vmatpush.bf16.msra.mxu0 %v6203
    %6557 = vmatpush.bf16.msra.mxu0 %v6199
    %6558 = vmatpush.bf16.msra.mxu0 %v6195
    %6559 = vmatpush.bf16.msra.mxu0 %v6191
    %6560 = vmatpush.bf16.msra.mxu0 %v6187
    %6561 = vmatmul.bf16.gmra.mxu0 %v5659
    %v6562 = vpop.f32.mrf.mxu0
    %v6563 = vadd.f32 %v5795, %v6562
    %v6564 = vpop.f32.mrf.mxu0
    %v6565 = vadd.f32 %v5795, %v6564
    %6566 = vdwg.mxu0
    %6567 = vmatpush.bf16.msra.mxu0 %v6247
    %6568 = vmatpush.bf16.msra.mxu0 %v6243
    %6569 = vmatpush.bf16.msra.mxu0 %v6239
    %6570 = vmatpush.bf16.msra.mxu0 %v6235
    %6571 = vmatpush.bf16.msra.mxu0 %v6231
    %6572 = vmatpush.bf16.msra.mxu0 %v6227
    %6573 = vmatpush.bf16.msra.mxu0 %v6223
    %6574 = vmatpush.bf16.msra.mxu0 %v6219
    %6575 = vmatmul.bf16.gmra.mxu0 %v5660
    %v6576 = vpop.f32.mrf.mxu0
    %v6577 = vadd.f32 %v6563, %v6576
    %v6578 = vpop.f32.mrf.mxu0
    %v6579 = vadd.f32 %v6565, %v6578
    %6580 = vdwg.mxu0
    %6581 = vmatpush.bf16.msra.mxu0 %v6279
    %6582 = vmatpush.bf16.msra.mxu0 %v6275
    %6583 = vmatpush.bf16.msra.mxu0 %v6271
    %6584 = vmatpush.bf16.msra.mxu0 %v6267
    %6585 = vmatpush.bf16.msra.mxu0 %v6263
    %6586 = vmatpush.bf16.msra.mxu0 %v6259
    %6587 = vmatpush.bf16.msra.mxu0 %v6255
    %6588 = vmatpush.bf16.msra.mxu0 %v6251
    %6589 = vmatmul.bf16.gmra.mxu0 %v5661
    %v6590 = vpop.f32.mrf.mxu0
    %v6591 = vadd.f32 %v6577, %v6590
    %v6592 = vpop.f32.mrf.mxu0
    %v6593 = vadd.f32 %v6579, %v6592
    %6594 = vdwg.mxu0
    %6595 = vmatpush.bf16.msra.mxu0 %v6311
    %6596 = vmatpush.bf16.msra.mxu0 %v6307
    %6597 = vmatpush.bf16.msra.mxu0 %v6303
    %6598 = vmatpush.bf16.msra.mxu0 %v6299
    %6599 = vmatpush.bf16.msra.mxu0 %v6295
    %6600 = vmatpush.bf16.msra.mxu0 %v6291
    %6601 = vmatpush.bf16.msra.mxu0 %v6287
    %6602 = vmatpush.bf16.msra.mxu0 %v6283
    %6603 = vmatmul.bf16.gmra.mxu0 %v5662
    %v6604 = vpop.f32.mrf.mxu0
    %v6605 = vadd.f32 %v6591, %v6604
    %v6606 = vpop.f32.mrf.mxu0
    %v6607 = vadd.f32 %v6593, %v6606
    %6608 = vdwg.mxu0
    %6609 = vmatpush.bf16.msra.mxu0 %v6216
    %6610 = vmatpush.bf16.msra.mxu0 %v6212
    %6611 = vmatpush.bf16.msra.mxu0 %v6208
    %6612 = vmatpush.bf16.msra.mxu0 %v6204
    %6613 = vmatpush.bf16.msra.mxu0 %v6200
    %6614 = vmatpush.bf16.msra.mxu0 %v6196
    %6615 = vmatpush.bf16.msra.mxu0 %v6192
    %6616 = vmatpush.bf16.msra.mxu0 %v6188
    %6617 = vmatmul.bf16.gmra.mxu0 %v5659
    %v6618 = vpop.f32.mrf.mxu0
    %v6619 = vadd.f32 %v5796, %v6618
    %v6620 = vpop.f32.mrf.mxu0
    %v6621 = vadd.f32 %v5796, %v6620
    %6622 = vdwg.mxu0
    %6623 = vmatpush.bf16.msra.mxu0 %v6248
    %6624 = vmatpush.bf16.msra.mxu0 %v6244
    %6625 = vmatpush.bf16.msra.mxu0 %v6240
    %6626 = vmatpush.bf16.msra.mxu0 %v6236
    %6627 = vmatpush.bf16.msra.mxu0 %v6232
    %6628 = vmatpush.bf16.msra.mxu0 %v6228
    %6629 = vmatpush.bf16.msra.mxu0 %v6224
    %6630 = vmatpush.bf16.msra.mxu0 %v6220
    %6631 = vmatmul.bf16.gmra.mxu0 %v5660
    %v6632 = vpop.f32.mrf.mxu0
    %v6633 = vadd.f32 %v6619, %v6632
    %v6634 = vpop.f32.mrf.mxu0
    %v6635 = vadd.f32 %v6621, %v6634
    %6636 = vdwg.mxu0
    %6637 = vmatpush.bf16.msra.mxu0 %v6280
    %6638 = vmatpush.bf16.msra.mxu0 %v6276
    %6639 = vmatpush.bf16.msra.mxu0 %v6272
    %6640 = vmatpush.bf16.msra.mxu0 %v6268
    %6641 = vmatpush.bf16.msra.mxu0 %v6264
    %6642 = vmatpush.bf16.msra.mxu0 %v6260
    %6643 = vmatpush.bf16.msra.mxu0 %v6256
    %6644 = vmatpush.bf16.msra.mxu0 %v6252
    %6645 = vmatmul.bf16.gmra.mxu0 %v5661
    %v6646 = vpop.f32.mrf.mxu0
    %v6647 = vadd.f32 %v6633, %v6646
    %v6648 = vpop.f32.mrf.mxu0
    %v6649 = vadd.f32 %v6635, %v6648
    %6650 = vdwg.mxu0
    %6651 = vmatpush.bf16.msra.mxu0 %v6312
    %6652 = vmatpush.bf16.msra.mxu0 %v6308
    %6653 = vmatpush.bf16.msra.mxu0 %v6304
    %6654 = vmatpush.bf16.msra.mxu0 %v6300
    %6655 = vmatpush.bf16.msra.mxu0 %v6296
    %6656 = vmatpush.bf16.msra.mxu0 %v6292
    %6657 = vmatpush.bf16.msra.mxu0 %v6288
    %6658 = vmatpush.bf16.msra.mxu0 %v6284
    %6659 = vmatmul.bf16.gmra.mxu0 %v5662
    %v6660 = vpop.f32.mrf.mxu0
    %v6661 = vadd.f32 %v6647, %v6660
    %v6662 = vpop.f32.mrf.mxu0
    %v6663 = vadd.f32 %v6649, %v6662
    %6664 = vdwg.mxu0
    %v6665 = vmin.f32 %v6493, 20.0
    %v6666 = vmin.f32 %v6549, 20.0
    %v6667 = vmin.f32 %v6605, 20.0
    %v6668 = vmin.f32 %v6661, 20.0
    %v6669 = vmin.f32 %v6495, 20.0
    %v6670 = vmin.f32 %v6551, 20.0
    %v6671 = vmin.f32 %v6607, 20.0
    %v6672 = vmin.f32 %v6663, 20.0
    %v6673 = vmul.f32 %v6665, 1.442695
    %v6674 = vpow.pop %v6673
    %v6675 = vmul.f32 %v6666, 1.442695
    %v6676 = vpow.pop %v6675
    %v6677 = vmul.f32 %v6667, 1.442695
    %v6678 = vpow.pop %v6677
    %v6679 = vmul.f32 %v6668, 1.442695
    %v6680 = vpow.pop %v6679
    %v6681 = vmul.f32 %v6669, 1.442695
    %v6682 = vpow.pop %v6681
    %v6683 = vmul.f32 %v6670, 1.442695
    %v6684 = vpow.pop %v6683
    %v6685 = vmul.f32 %v6671, 1.442695
    %v6686 = vpow.pop %v6685
    %v6687 = vmul.f32 %v6672, 1.442695
    %v6688 = vpow.pop %v6687
    %v6689 = vadd.f32 %v6674, 1.0
    %v6690 = vadd.f32 %v6676, 1.0
    %v6691 = vadd.f32 %v6678, 1.0
    %v6692 = vadd.f32 %v6680, 1.0
    %v6693 = vadd.f32 %v6682, 1.0
    %v6694 = vadd.f32 %v6684, 1.0
    %v6695 = vadd.f32 %v6686, 1.0
    %v6696 = vadd.f32 %v6688, 1.0
    %v6697 = vmul.f32 %v6689, %v6689
    %v6698 = vmul.f32 %v6690, %v6690
    %v6699 = vmul.f32 %v6691, %v6691
    %v6700 = vmul.f32 %v6692, %v6692
    %v6701 = vmul.f32 %v6693, %v6693
    %v6702 = vmul.f32 %v6694, %v6694
    %v6703 = vmul.f32 %v6695, %v6695
    %v6704 = vmul.f32 %v6696, %v6696
    %v6705 = vsub.f32 %v6697, 1.0
    %v6706 = vsub.f32 %v6698, 1.0
    %v6707 = vsub.f32 %v6699, 1.0
    %v6708 = vsub.f32 %v6700, 1.0
    %v6709 = vsub.f32 %v6701, 1.0
    %v6710 = vsub.f32 %v6702, 1.0
    %v6711 = vsub.f32 %v6703, 1.0
    %v6712 = vsub.f32 %v6704, 1.0
    %v6713 = vadd.f32 %v6697, 1.0
    %v6714 = vadd.f32 %v6698, 1.0
    %v6715 = vadd.f32 %v6699, 1.0
    %v6716 = vadd.f32 %v6700, 1.0
    %v6717 = vadd.f32 %v6701, 1.0
    %v6718 = vadd.f32 %v6702, 1.0
    %v6719 = vadd.f32 %v6703, 1.0
    %v6720 = vadd.f32 %v6704, 1.0
    %v6721 = vrcp.pop %v6713
    %v6722 = vrcp.pop %v6714
    %v6723 = vrcp.pop %v6715
    %v6724 = vrcp.pop %v6716
    %v6725 = vrcp.pop %v6717
    %v6726 = vrcp.pop %v6718
    %v6727 = vrcp.pop %v6719
    %v6728 = vrcp.pop %v6720
    %v6729 = vmul.f32 %v6705, %v6721
    %v6730 = vmul.f32 %v6706, %v6722
    %v6731 = vmul.f32 %v6707, %v6723
    %v6732 = vmul.f32 %v6708, %v6724
    %v6733 = vmul.f32 %v6709, %v6725
    %v6734 = vmul.f32 %v6710, %v6726
    %v6735 = vmul.f32 %v6711, %v6727
    %v6736 = vmul.f32 %v6712, %v6728
    %vm6737 = vcmp.gt.f32.partialorder %v6493, 20.0
    %vm6738 = vcmp.gt.f32.partialorder %v6549, 20.0
    %vm6739 = vcmp.gt.f32.partialorder %v6605, 20.0
    %vm6740 = vcmp.gt.f32.partialorder %v6661, 20.0
    %vm6741 = vcmp.gt.f32.partialorder %v6495, 20.0
    %vm6742 = vcmp.gt.f32.partialorder %v6551, 20.0
    %vm6743 = vcmp.gt.f32.partialorder %v6607, 20.0
    %vm6744 = vcmp.gt.f32.partialorder %v6663, 20.0
    %v6745 = vmul.f32 %v6493, %v6729
    %v6746 = vmul.f32 %v6549, %v6730
    %v6747 = vmul.f32 %v6605, %v6731
    %v6748 = vmul.f32 %v6661, %v6732
    %v6749 = vmul.f32 %v6495, %v6733
    %v6750 = vmul.f32 %v6551, %v6734
    %v6751 = vmul.f32 %v6607, %v6735
    %v6752 = vmul.f32 %v6663, %v6736
    %v6753 = vsel %vm6737, %v6493, %v6745
    %v6754 = vsel %vm6738, %v6549, %v6746
    %v6755 = vsel %vm6739, %v6605, %v6747
    %v6756 = vsel %vm6740, %v6661, %v6748
    %v6757 = vsel %vm6741, %v6495, %v6749
    %v6758 = vsel %vm6742, %v6551, %v6750
    %v6759 = vsel %vm6743, %v6607, %v6751
    %v6760 = vsel %vm6744, %v6663, %v6752
    %v6761 = vpack.c.bf16 %v6757, %v6753
    %v6762 = vpack.c.bf16 %v6758, %v6754
    %v6763 = vpack.c.bf16 %v6759, %v6755
    %v6764 = vpack.c.bf16 %v6760, %v6756
    %v6765 = vld [vmem:[#allocation12] sm:$0xf]
    %v6766 = vld [vmem:[#allocation12 + $0x4] sm:$0xf]
    %v6767 = vld [vmem:[#allocation12 + $0x8] sm:$0xf]
    %v6768 = vld [vmem:[#allocation12 + $0xc] sm:$0xf]
    %v6769 = vld [vmem:[#allocation12 + $0x10] sm:$0xf]
    %v6770 = vld [vmem:[#allocation12 + $0x14] sm:$0xf]
    %v6771 = vld [vmem:[#allocation12 + $0x18] sm:$0xf]
    %v6772 = vld [vmem:[#allocation12 + $0x1c] sm:$0xf]
    %v6773 = vld [vmem:[#allocation12 + $0x20] sm:$0xf]
    %v6774 = vld [vmem:[#allocation12 + $0x24] sm:$0xf]
    %v6775 = vld [vmem:[#allocation12 + $0x28] sm:$0xf]
    %v6776 = vld [vmem:[#allocation12 + $0x2c] sm:$0xf]
    %v6777 = vld [vmem:[#allocation12 + $0x30] sm:$0xf]
    %v6778 = vld [vmem:[#allocation12 + $0x34] sm:$0xf]
    %v6779 = vld [vmem:[#allocation12 + $0x38] sm:$0xf]
    %v6780 = vld [vmem:[#allocation12 + $0x3c] sm:$0xf]
    %v6781 = vld [vmem:[#allocation12 + $0x40] sm:$0xf]
    %v6782 = vld [vmem:[#allocation12 + $0x44] sm:$0xf]
    %v6783 = vld [vmem:[#allocation12 + $0x48] sm:$0xf]
    %v6784 = vld [vmem:[#allocation12 + $0x4c] sm:$0xf]
    %v6785 = vld [vmem:[#allocation12 + $0x50] sm:$0xf]
    %v6786 = vld [vmem:[#allocation12 + $0x54] sm:$0xf]
    %v6787 = vld [vmem:[#allocation12 + $0x58] sm:$0xf]
    %v6788 = vld [vmem:[#allocation12 + $0x5c] sm:$0xf]
    %v6789 = vld [vmem:[#allocation12 + $0x60] sm:$0xf]
    %v6790 = vld [vmem:[#allocation12 + $0x64] sm:$0xf]
    %v6791 = vld [vmem:[#allocation12 + $0x68] sm:$0xf]
    %v6792 = vld [vmem:[#allocation12 + $0x6c] sm:$0xf]
    %v6793 = vld [vmem:[#allocation12 + $0x70] sm:$0xf]
    %v6794 = vld [vmem:[#allocation12 + $0x74] sm:$0xf]
    %v6795 = vld [vmem:[#allocation12 + $0x78] sm:$0xf]
    %v6796 = vld [vmem:[#allocation12 + $0x7c] sm:$0xf]
    %v6797 = vld [vmem:[#allocation12 + $0x80] sm:$0xf]
    %v6798 = vld [vmem:[#allocation12 + $0x84] sm:$0xf]
    %v6799 = vld [vmem:[#allocation12 + $0x88] sm:$0xf]
    %v6800 = vld [vmem:[#allocation12 + $0x8c] sm:$0xf]
    %v6801 = vld [vmem:[#allocation12 + $0x90] sm:$0xf]
    %v6802 = vld [vmem:[#allocation12 + $0x94] sm:$0xf]
    %v6803 = vld [vmem:[#allocation12 + $0x98] sm:$0xf]
    %v6804 = vld [vmem:[#allocation12 + $0x9c] sm:$0xf]
    %v6805 = vld [vmem:[#allocation12 + $0xa0] sm:$0xf]
    %v6806 = vld [vmem:[#allocation12 + $0xa4] sm:$0xf]
    %v6807 = vld [vmem:[#allocation12 + $0xa8] sm:$0xf]
    %v6808 = vld [vmem:[#allocation12 + $0xac] sm:$0xf]
    %v6809 = vld [vmem:[#allocation12 + $0xb0] sm:$0xf]
    %v6810 = vld [vmem:[#allocation12 + $0xb4] sm:$0xf]
    %v6811 = vld [vmem:[#allocation12 + $0xb8] sm:$0xf]
    %v6812 = vld [vmem:[#allocation12 + $0xbc] sm:$0xf]
    %v6813 = vld [vmem:[#allocation12 + $0xc0] sm:$0xf]
    %v6814 = vld [vmem:[#allocation12 + $0xc4] sm:$0xf]
    %v6815 = vld [vmem:[#allocation12 + $0xc8] sm:$0xf]
    %v6816 = vld [vmem:[#allocation12 + $0xcc] sm:$0xf]
    %v6817 = vld [vmem:[#allocation12 + $0xd0] sm:$0xf]
    %v6818 = vld [vmem:[#allocation12 + $0xd4] sm:$0xf]
    %v6819 = vld [vmem:[#allocation12 + $0xd8] sm:$0xf]
    %v6820 = vld [vmem:[#allocation12 + $0xdc] sm:$0xf]
    %v6821 = vld [vmem:[#allocation12 + $0xe0] sm:$0xf]
    %v6822 = vld [vmem:[#allocation12 + $0xe4] sm:$0xf]
    %v6823 = vld [vmem:[#allocation12 + $0xe8] sm:$0xf]
    %v6824 = vld [vmem:[#allocation12 + $0xec] sm:$0xf]
    %v6825 = vld [vmem:[#allocation12 + $0xf0] sm:$0xf]
    %v6826 = vld [vmem:[#allocation12 + $0xf4] sm:$0xf]
    %v6827 = vld [vmem:[#allocation12 + $0xf8] sm:$0xf]
    %v6828 = vld [vmem:[#allocation12 + $0xfc] sm:$0xf]
    %v6829 = vld [vmem:[#allocation13] sm:$0x1]
    %v6831 = vperm.slane %v6829, 0
    %v6897 = vunpack.c.l.b16 %v6765
    %v6898 = vunpack.c.l.b16 %v6766
    %v6899 = vunpack.c.l.b16 %v6767
    %v6900 = vunpack.c.l.b16 %v6768
    %v6901 = vunpack.c.l.b16 %v6769
    %v6902 = vunpack.c.l.b16 %v6770
    %v6903 = vunpack.c.l.b16 %v6771
    %v6904 = vunpack.c.l.b16 %v6772
    %v6905 = vunpack.c.l.b16 %v6773
    %v6906 = vunpack.c.l.b16 %v6774
    %v6907 = vunpack.c.l.b16 %v6775
    %v6908 = vunpack.c.l.b16 %v6776
    %v6909 = vunpack.c.l.b16 %v6777
    %v6910 = vunpack.c.l.b16 %v6778
    %v6911 = vunpack.c.l.b16 %v6779
    %v6912 = vunpack.c.l.b16 %v6780
    %v6913 = vunpack.c.l.b16 %v6781
    %v6914 = vunpack.c.l.b16 %v6782
    %v6915 = vunpack.c.l.b16 %v6783
    %v6916 = vunpack.c.l.b16 %v6784
    %v6917 = vunpack.c.l.b16 %v6785
    %v6918 = vunpack.c.l.b16 %v6786
    %v6919 = vunpack.c.l.b16 %v6787
    %v6920 = vunpack.c.l.b16 %v6788
    %v6921 = vunpack.c.l.b16 %v6789
    %v6922 = vunpack.c.l.b16 %v6790
    %v6923 = vunpack.c.l.b16 %v6791
    %v6924 = vunpack.c.l.b16 %v6792
    %v6925 = vunpack.c.l.b16 %v6793
    %v6926 = vunpack.c.l.b16 %v6794
    %v6927 = vunpack.c.l.b16 %v6795
    %v6928 = vunpack.c.l.b16 %v6796
    %v6929 = vunpack.c.l.b16 %v6797
    %v6930 = vunpack.c.l.b16 %v6798
    %v6931 = vunpack.c.l.b16 %v6799
    %v6932 = vunpack.c.l.b16 %v6800
    %v6933 = vunpack.c.l.b16 %v6801
    %v6934 = vunpack.c.l.b16 %v6802
    %v6935 = vunpack.c.l.b16 %v6803
    %v6936 = vunpack.c.l.b16 %v6804
    %v6937 = vunpack.c.l.b16 %v6805
    %v6938 = vunpack.c.l.b16 %v6806
    %v6939 = vunpack.c.l.b16 %v6807
    %v6940 = vunpack.c.l.b16 %v6808
    %v6941 = vunpack.c.l.b16 %v6809
    %v6942 = vunpack.c.l.b16 %v6810
    %v6943 = vunpack.c.l.b16 %v6811
    %v6944 = vunpack.c.l.b16 %v6812
    %v6945 = vunpack.c.l.b16 %v6813
    %v6946 = vunpack.c.l.b16 %v6814
    %v6947 = vunpack.c.l.b16 %v6815
    %v6948 = vunpack.c.l.b16 %v6816
    %v6949 = vunpack.c.l.b16 %v6817
    %v6950 = vunpack.c.l.b16 %v6818
    %v6951 = vunpack.c.l.b16 %v6819
    %v6952 = vunpack.c.l.b16 %v6820
    %v6953 = vunpack.c.l.b16 %v6821
    %v6954 = vunpack.c.l.b16 %v6822
    %v6955 = vunpack.c.l.b16 %v6823
    %v6956 = vunpack.c.l.b16 %v6824
    %v6957 = vunpack.c.l.b16 %v6825
    %v6958 = vunpack.c.l.b16 %v6826
    %v6959 = vunpack.c.l.b16 %v6827
    %v6960 = vunpack.c.l.b16 %v6828
    %v6961 = vpack.c.b16 %v6898, %v6897
    %v6962 = vpack.c.b16 %v6900, %v6899
    %v6963 = vpack.c.b16 %v6902, %v6901
    %v6964 = vpack.c.b16 %v6904, %v6903
    %v6965 = vpack.c.b16 %v6906, %v6905
    %v6966 = vpack.c.b16 %v6908, %v6907
    %v6967 = vpack.c.b16 %v6910, %v6909
    %v6968 = vpack.c.b16 %v6912, %v6911
    %v6969 = vpack.c.b16 %v6914, %v6913
    %v6970 = vpack.c.b16 %v6916, %v6915
    %v6971 = vpack.c.b16 %v6918, %v6917
    %v6972 = vpack.c.b16 %v6920, %v6919
    %v6973 = vpack.c.b16 %v6922, %v6921
    %v6974 = vpack.c.b16 %v6924, %v6923
    %v6975 = vpack.c.b16 %v6926, %v6925
    %v6976 = vpack.c.b16 %v6928, %v6927
    %v6977 = vpack.c.b16 %v6930, %v6929
    %v6978 = vpack.c.b16 %v6932, %v6931
    %v6979 = vpack.c.b16 %v6934, %v6933
    %v6980 = vpack.c.b16 %v6936, %v6935
    %v6981 = vpack.c.b16 %v6938, %v6937
    %v6982 = vpack.c.b16 %v6940, %v6939
    %v6983 = vpack.c.b16 %v6942, %v6941
    %v6984 = vpack.c.b16 %v6944, %v6943
    %v6985 = vpack.c.b16 %v6946, %v6945
    %v6986 = vpack.c.b16 %v6948, %v6947
    %v6987 = vpack.c.b16 %v6950, %v6949
    %v6988 = vpack.c.b16 %v6952, %v6951
    %v6989 = vpack.c.b16 %v6954, %v6953
    %v6990 = vpack.c.b16 %v6956, %v6955
    %v6991 = vpack.c.b16 %v6958, %v6957
    %v6992 = vpack.c.b16 %v6960, %v6959
    %7025 = vmatpush.bf16.msra.mxu0 %v6968
    %7026 = vmatpush.bf16.msra.mxu0 %v6967
    %7027 = vmatpush.bf16.msra.mxu0 %v6966
    %7028 = vmatpush.bf16.msra.mxu0 %v6965
    %7029 = vmatpush.bf16.msra.mxu0 %v6964
    %7030 = vmatpush.bf16.msra.mxu0 %v6963
    %7031 = vmatpush.bf16.msra.mxu0 %v6962
    %7032 = vmatpush.bf16.msra.mxu0 %v6961
    %7033 = vmatmul.bf16.gmra.mxu0 %v6761
    %v7034 = vpop.f32.mrf.mxu0
    %v7035 = vadd.f32 %v6831, %v7034
    %v7036 = vpop.f32.mrf.mxu0
    %v7037 = vadd.f32 %v6831, %v7036
    %7038 = vdwg.mxu0
    %7039 = vmatpush.bf16.msra.mxu0 %v6976
    %7040 = vmatpush.bf16.msra.mxu0 %v6975
    %7041 = vmatpush.bf16.msra.mxu0 %v6974
    %7042 = vmatpush.bf16.msra.mxu0 %v6973
    %7043 = vmatpush.bf16.msra.mxu0 %v6972
    %7044 = vmatpush.bf16.msra.mxu0 %v6971
    %7045 = vmatpush.bf16.msra.mxu0 %v6970
    %7046 = vmatpush.bf16.msra.mxu0 %v6969
    %7047 = vmatmul.bf16.gmra.mxu0 %v6762
    %v7048 = vpop.f32.mrf.mxu0
    %v7049 = vadd.f32 %v7035, %v7048
    %v7050 = vpop.f32.mrf.mxu0
    %v7051 = vadd.f32 %v7037, %v7050
    %7052 = vdwg.mxu0
    %7053 = vmatpush.bf16.msra.mxu0 %v6984
    %7054 = vmatpush.bf16.msra.mxu0 %v6983
    %7055 = vmatpush.bf16.msra.mxu0 %v6982
    %7056 = vmatpush.bf16.msra.mxu0 %v6981
    %7057 = vmatpush.bf16.msra.mxu0 %v6980
    %7058 = vmatpush.bf16.msra.mxu0 %v6979
    %7059 = vmatpush.bf16.msra.mxu0 %v6978
    %7060 = vmatpush.bf16.msra.mxu0 %v6977
    %7061 = vmatmul.bf16.gmra.mxu0 %v6763
    %v7062 = vpop.f32.mrf.mxu0
    %v7063 = vadd.f32 %v7049, %v7062
    %v7064 = vpop.f32.mrf.mxu0
    %v7065 = vadd.f32 %v7051, %v7064
    %7066 = vdwg.mxu0
    %7067 = vmatpush.bf16.msra.mxu0 %v6992
    %7068 = vmatpush.bf16.msra.mxu0 %v6991
    %7069 = vmatpush.bf16.msra.mxu0 %v6990
    %7070 = vmatpush.bf16.msra.mxu0 %v6989
    %7071 = vmatpush.bf16.msra.mxu0 %v6988
    %7072 = vmatpush.bf16.msra.mxu0 %v6987
    %7073 = vmatpush.bf16.msra.mxu0 %v6986
    %7074 = vmatpush.bf16.msra.mxu0 %v6985
    %7075 = vmatmul.bf16.gmra.mxu0 %v6764
    %v7076 = vpop.f32.mrf.mxu0
    %v7077 = vadd.f32 %v7063, %v7076
    %v7078 = vpop.f32.mrf.mxu0
    %v7079 = vadd.f32 %v7065, %v7078
    %7080 = vdwg.mxu0
    %7081 = vst [vmem:[%s9] sm:$0xff] %v7077
    %7082 = vst [vmem:[%s9 + $0x8] sm:$0xff] %v7079
    // Predicated region
    $region70: #{decoder_forward.1} parent=1 // pred_check
      _
    $region71: #{decoder_forward.1} parent=1 // pred_check_branch
      %7084 = sbr.rel (0) target = $region73
    $region72: #{decoder_forward.1} parent=1 // pred_region
      _
    $region73: #{decoder_forward.1} parent=1 // pred_fallthru
      _
    // Predicated region
    $region74: #{decoder_forward.1} parent=1 // pred_check
      _
    $region75: #{decoder_forward.1} parent=1 // pred_check_branch
      %7086 = sbr.rel (0) target = $region77
    $region76: #{decoder_forward.1} parent=1 // pred_region
      _
    $region77: #{decoder_forward.1} parent=1 // pred_fallthru
      _
    %7087 = vsyncpa [#allocation3], 1
    %7088 = vsyncpa [#allocation5], 1
    %7089 = vsyncpa [#allocation8], 1
    %7090 = vsyncpa [#allocation11], 1
    %7091 = vsyncpa [#allocation14], 1

</llo_original>
